<compile_context>
chip_gen: v5e
topology: v5e:2x2
jax: 0.10.0
libtpu: 0.0.40
codegen_flags: <defaults>
</compile_context>

<pallas_src>
import jax
import jax.numpy as jnp
from jax.experimental import pallas as pl
from jax.experimental.pallas import tpu as pltpu

BN_EPS = 1e-5
NEG_SLOPE = 0.2


def _round_up(x, mult):
    return ((x + mult - 1) // mult) * mult


def _vmem_limit_bytes():
    # Generation-aware scoped-VMEM budget: ~75% of physical VMEM
    # (v5e/v6e: 128 MiB -> 96 MiB, v7x: 64 MiB -> 48 MiB). Falls back to 48 MiB.
    try:
        cap = int(pltpu.get_tpu_info().vmem_capacity_bytes)
    except Exception:
        cap = 64 * 1024 * 1024
    return int(max(32 * 1024 * 1024, (cap * 3) // 4))


def _make_pass1_kernel(kernel_size, stride, oh, ow, c_in, ph):
    """Fused im2col conv (+ per-image BN partial stats)."""
    ohw = oh * ow
    # Static tap table: (flat weight index, phase row-band base, dw column offset).
    taps = []
    for kh in range(kernel_size):
        for kw in range(kernel_size):
            p_idx = (kh % stride) * stride + (kw % stride)
            taps.append((kh * kernel_size + kw, p_idx * ph + kh // stride, kw // stride))

    def pass1_kernel(x_ref, w_ref, conv_ref, stats_ref):
        # x_ref   : (1, s*s*PH, PW, C_in)   bf16  -- phase-stacked padded input (one image)
        # w_ref   : (KH*KW, C_in, C_pad)    bf16  -- per-tap weight matrices (resident)
        # conv_ref: (1, OH*OW, C_pad)       bf16
        # stats_ref: (1, 2, C_pad)          f32   -- per-image [sum; sum of squares]
        c_pad = conv_ref.shape[-1]
        acc = jnp.zeros((ohw, c_pad), jnp.float32)
        for (t, base, dw) in taps:
            tap = x_ref[0, base:base + oh, dw:dw + ow, :].astype(jnp.float32)
            # (OH, OW, C_in) -> (OH*OW, C_in); done in f32 layout (trivial when OW % 8 == 0),
            # then cast to bf16 for the MXU.
            # TODO(synk): for MXU-bound deep layers, lane-concat the dw taps of a row band
            # into one matmul with contraction n_dw*C_in to fill the MXU better.
            lhs = tap.reshape(ohw, c_in).astype(jnp.bfloat16)
            acc = acc + jnp.dot(lhs, w_ref[t], preferred_element_type=jnp.float32)
        # bf16 conv intermediate; stats come from the f32 accumulator before the cast.
        conv_ref[0] = acc.astype(conv_ref.dtype)
        stats_ref[0, 0:1, :] = jnp.sum(acc, axis=0, keepdims=True)
        stats_ref[0, 1:2, :] = jnp.sum(acc * acc, axis=0, keepdims=True)

    return pass1_kernel


def _make_pass2_kernel(c_out):
    """Normalize + affine + LeakyReLU, emitting an NCHW-flat (C_out, OH*OW) tile."""

    def pass2_kernel(conv_ref, scale_ref, shift_ref, o_ref):
        x = conv_ref[0].astype(jnp.float32)                 # (OH*OW, C_pad)
        y = x * scale_ref[...] + shift_ref[...]             # precomputed BN scale/shift
        y = jnp.where(y >= 0, y, NEG_SLOPE * y)
        yt = y.T                                            # aligned 2-D transpose -> (C_pad, OH*OW)
        o_ref[0] = yt[:c_out, :].astype(o_ref.dtype)        # drop padded channels on store

    return pass2_kernel


def encoder_layer_forward(x, params, kernel_size=5, stride=2, padding=2,
                          compute_dtype=jnp.bfloat16):
    """x: (N, C_in, H, W) float32 (NCHW, like PyTorch). Returns (N, C_out, OH, OW) f32."""
    weight, bias, gamma, beta = params
    del bias  # cancels exactly in training-mode BatchNorm (output depends on x - mean(x))

    c_out, c_in = weight.shape[0], weight.shape[1]
    n, _, h, w = x.shape
    k, s, p = kernel_size, stride, padding
    oh = (h + 2 * p - k) // s + 1
    ow = (w + 2 * p - k) // s + 1
    ohw = oh * ow
    c_pad = _round_up(c_out, 128)          # lane-dense MXU output / stores
    dmax = (k - 1) // s
    ph, pw = oh + dmax, ow + dmax          # per-phase spatial extent incl. tap offsets

    # ---- fused-im2col prep: NHWC, zero-pad, split into the s*s stride phases --------------
    xn = jnp.transpose(x, (0, 2, 3, 1))
    hp2 = max(h + 2 * p, s * ph)
    wp2 = max(w + 2 * p, s * pw)
    xp = jnp.pad(xn, ((0, 0), (p, hp2 - h - p), (p, wp2 - w - p), (0, 0)))
    phases = jnp.stack(
        [xp[:, r::s, c::s, :][:, :ph, :pw, :] for r in range(s) for c in range(s)],
        axis=1).astype(compute_dtype)                       # (N, s*s, PH, PW, C_in)
    phases = phases.reshape(n, s * s * ph, pw, c_in)        # 4-D: phase bands stacked on rows

    # Per-tap weight matrices, output channels zero-padded to a multiple of 128.
    w_taps = jnp.pad(weight.transpose(2, 3, 1, 0).reshape(k * k, c_in, c_out),
                     ((0, 0), (0, 0), (0, c_pad - c_out))).astype(compute_dtype)

    vmem_limit = _vmem_limit_bytes()

    # ---- pass 1: fused conv + per-image partial BN stats (fully parallel grid) ------------
    # TODO(synk): add output-row tiling with a small halo (or emit_pipeline) for very large
    # spatial extents where a whole image no longer fits comfortably in VMEM.
    conv, stats = pl.pallas_call(
        _make_pass1_kernel(k, s, oh, ow, c_in, ph),
        out_shape=(
            jax.ShapeDtypeStruct((n, ohw, c_pad), compute_dtype),   # bf16 intermediate
            jax.ShapeDtypeStruct((n, 2, c_pad), jnp.float32),       # per-image stats slots
        ),
        grid=(n,),
        in_specs=[
            pl.BlockSpec((1, s * s * ph, pw, c_in), lambda i: (i, 0, 0, 0)),
            pl.BlockSpec((k * k, c_in, c_pad), lambda i: (0, 0, 0)),
        ],
        out_specs=(
            pl.BlockSpec((1, ohw, c_pad), lambda i: (i, 0, 0)),
            pl.BlockSpec((1, 2, c_pad), lambda i: (i, 0, 0)),
        ),
        compiler_params=pltpu.CompilerParams(
            dimension_semantics=("parallel",),
            vmem_limit_bytes=vmem_limit,
        ),
    )(phases, w_taps)

    # ---- tiny wrapper-side stats reduction -> BN scale/shift -------------------------------
    cnt = float(n * ohw)
    ssum = jnp.sum(stats[:, 0, :], axis=0)
    ssq = jnp.sum(stats[:, 1, :], axis=0)
    mean = ssum / cnt
    var = jnp.maximum(ssq / cnt - mean * mean, 0.0)   # biased var, as in PyTorch BN forward
    g_pad = jnp.pad(gamma.astype(jnp.float32), (0, c_pad - c_out))
    b_pad = jnp.pad(beta.astype(jnp.float32), (0, c_pad - c_out))
    scale1 = g_pad * jax.lax.rsqrt(var + BN_EPS)
    shift1 = b_pad - mean * scale1
    scale2 = scale1.reshape(1, c_pad)
    shift2 = shift1.reshape(1, c_pad)

    # ---- pass 2: normalize + LeakyReLU, writing NCHW-flat output directly ------------------
    out_flat = pl.pallas_call(
        _make_pass2_kernel(c_out),
        out_shape=jax.ShapeDtypeStruct((n, c_out, ohw), jnp.float32),
        grid=(n,),
        in_specs=[
            pl.BlockSpec((1, ohw, c_pad), lambda i: (i, 0, 0)),
            pl.BlockSpec((1, c_pad), lambda i: (0, 0)),
            pl.BlockSpec((1, c_pad), lambda i: (0, 0)),
        ],
        out_specs=pl.BlockSpec((1, c_out, ohw), lambda i: (i, 0, 0)),
        compiler_params=pltpu.CompilerParams(
            dimension_semantics=("parallel",),
            vmem_limit_bytes=vmem_limit,
        ),
    )(conv, scale2, shift2)

    # Metadata-only reshape: pass 2 already produced NCHW layout (no extra HBM transpose).
    return out_flat.reshape(n, c_out, oh, ow)


def _reference_forward(x, params, kernel_size=5, stride=2, padding=2):
    """Pure-JAX reference (conv + bias + training-mode BN + LeakyReLU)."""
    weight, bias, gamma, beta = params
    conv = jax.lax.conv_general_dilated(
        x, weight, window_strides=(stride, stride),
        padding=[(padding, padding), (padding, padding)],
        dimension_numbers=("NCHW", "OIHW", "NCHW"),
        precision=jax.lax.Precision.HIGHEST)
    conv = conv + bias[None, :, None, None]
    mean = conv.mean(axis=(0, 2, 3), keepdims=True)
    var = ((conv - mean) ** 2).mean(axis=(0, 2, 3), keepdims=True)
    y = gamma[None, :, None, None] * (conv - mean) * jax.lax.rsqrt(var + BN_EPS)
    y = y + beta[None, :, None, None]
    return jnp.where(y >= 0, y, NEG_SLOPE * y)


def init_params(key, in_channels, out_channels, kernel_size=5):
    k_w, k_b, k_g, k_be = jax.random.split(key, 4)
    fan_in = in_channels * kernel_size * kernel_size
    bound = 1.0 / (fan_in ** 0.5)
    weight = jax.random.uniform(
        k_w, (out_channels, in_channels, kernel_size, kernel_size),
        minval=-bound, maxval=bound, dtype=jnp.float32)
    bias = jax.random.uniform(k_b, (out_channels,), minval=-bound, maxval=bound,
                              dtype=jnp.float32)
    gamma = 1.0 + 0.1 * jax.random.normal(k_g, (out_channels,), dtype=jnp.float32)
    beta = 0.1 * jax.random.normal(k_be, (out_channels,), dtype=jnp.float32)
    return weight, bias, gamma, beta


if __name__ == "__main__":
    key = jax.random.PRNGKey(0)
    k_x, k_p = jax.random.split(key)

    N, C_IN, H, W = 2, 4, 16, 16
    C_OUT = 8

    x = jax.random.normal(k_x, (N, C_IN, H, W), dtype=jnp.float32)
    params = init_params(k_p, C_IN, C_OUT, kernel_size=5)

    y = jax.jit(encoder_layer_forward)(x, params)
    jax.block_until_ready(y)

    assert y.shape == (N, C_OUT, H // 2, W // 2), y.shape

    # Loose-tolerance self-check against the pure-JAX reference (bf16 MXU path).
    y_ref = _reference_forward(x, params)
    max_err = float(jnp.max(jnp.abs(y - y_ref)))
    assert max_err < 1e-1, f"max abs err vs reference: {max_err}"

    print("KERNEL_OK")
</pallas_src>

<mosaic_0001>
module attributes {stable_mosaic.version = 11 : i64} {
  func.func @pass2_kernel(%arg0: i32, %arg1: memref<1x64x128xbf16, #tpu.memory_space<vmem>>, %arg2: memref<1x128xf32, #tpu.memory_space<vmem>>, %arg3: memref<1x128xf32, #tpu.memory_space<vmem>>, %arg4: memref<1x8x64xf32, #tpu.memory_space<vmem>>) attributes {dimension_semantics = [#tpu.dimension_semantics<parallel>], iteration_bounds = array<i64: 2>, scalar_prefetch = 0 : i64, scratch_operands = 0 : i64, tpu.core_type = #tpu.core_type<tc>, window_params = [{transform_indices = @transform_0, window_bounds = array<i64: 1, 64, 128>}, {pipeline_mode = #tpu.pipeline_mode<synchronous>, transform_indices = @transform_1, window_bounds = array<i64: 1, 128>}, {pipeline_mode = #tpu.pipeline_mode<synchronous>, transform_indices = @transform_2, window_bounds = array<i64: 1, 128>}, {transform_indices = @transform_3, window_bounds = array<i64: 1, 8, 64>}]} {
    %c0 = arith.constant 0 : index
    %c0_0 = arith.constant 0 : index
    %c0_1 = arith.constant 0 : index
    %0 = vector.load %arg1[%c0, %c0_0, %c0_1] : memref<1x64x128xbf16, #tpu.memory_space<vmem>>, vector<1x64x128xbf16>
    %1 = vector.shape_cast %0 : vector<1x64x128xbf16> to vector<64x128xbf16>
    %2 = arith.extf %1 : vector<64x128xbf16> to vector<64x128xf32>
    %c0_2 = arith.constant 0 : index
    %c0_3 = arith.constant 0 : index
    %3 = vector.load %arg2[%c0_2, %c0_3] : memref<1x128xf32, #tpu.memory_space<vmem>>, vector<1x128xf32>
    %4 = vector.broadcast %3 : vector<1x128xf32> to vector<64x128xf32>
    %5 = arith.mulf %2, %4 : vector<64x128xf32>
    %c0_4 = arith.constant 0 : index
    %c0_5 = arith.constant 0 : index
    %6 = vector.load %arg3[%c0_4, %c0_5] : memref<1x128xf32, #tpu.memory_space<vmem>>, vector<1x128xf32>
    %7 = vector.broadcast %6 : vector<1x128xf32> to vector<64x128xf32>
    %8 = arith.addf %5, %7 : vector<64x128xf32>
    %cst = arith.constant 0.000000e+00 : f32
    %9 = vector.broadcast %cst : f32 to vector<64x128xf32>
    %10 = arith.cmpf oge, %8, %9 : vector<64x128xf32>
    %cst_6 = arith.constant 2.000000e-01 : f32
    %11 = vector.broadcast %cst_6 : f32 to vector<64x128xf32>
    %12 = arith.mulf %11, %8 : vector<64x128xf32>
    %13 = arith.select %10, %8, %12 : vector<64x128xi1>, vector<64x128xf32>
    %14 = tpu.transpose %13, [1, 0] : vector<64x128xf32> -> vector<128x64xf32>
    %15 = vector.extract_strided_slice %14 {offsets = [0, 0], sizes = [8, 64], strides = [1, 1]} : vector<128x64xf32> to vector<8x64xf32>
    %c0_7 = arith.constant 0 : index
    %c0_8 = arith.constant 0 : index
    %c0_9 = arith.constant 0 : index
    %16 = vector.load %arg4[%c0_7, %c0_8, %c0_9] : memref<1x8x64xf32, #tpu.memory_space<vmem>>, vector<1x8x64xf32>
    %17 = vector.shape_cast %16 : vector<1x8x64xf32> to vector<8x64xf32>
    %18 = vector.shape_cast %15 : vector<8x64xf32> to vector<1x8x64xf32>
    tpu.vector_store %arg4[%c0_7, %c0_8, %c0_9], %18 {strides = array<i32>} : memref<1x8x64xf32, #tpu.memory_space<vmem>>, vector<1x8x64xf32>,
    return
  }
  func.func @transform_0(%arg0: i32) -> (i32, i32, i32) {
    %c0_i32 = arith.constant 0 : i32
    %c0_i32_0 = arith.constant 0 : i32
    %c0_i32_1 = arith.constant 0 : i32
    return %arg0, %c0_i32, %c0_i32_0 : i32, i32, i32
  }
  func.func @transform_1(%arg0: i32) -> (i32, i32) {
    %c0_i32 = arith.constant 0 : i32
    %c0_i32_0 = arith.constant 0 : i32
    %c0_i32_1 = arith.constant 0 : i32
    return %c0_i32, %c0_i32_0 : i32, i32
  }
  func.func @transform_2(%arg0: i32) -> (i32, i32) {
    %c0_i32 = arith.constant 0 : i32
    %c0_i32_0 = arith.constant 0 : i32
    %c0_i32_1 = arith.constant 0 : i32
    return %c0_i32, %c0_i32_0 : i32, i32
  }
  func.func @transform_3(%arg0: i32) -> (i32, i32, i32) {
    %c0_i32 = arith.constant 0 : i32
    %c0_i32_0 = arith.constant 0 : i32
    %c0_i32_1 = arith.constant 0 : i32
    return %arg0, %c0_i32, %c0_i32_0 : i32, i32, i32
  }
}

module attributes {stable_mosaic.version = 11 : i64} {
  func.func @pass1_kernel(%arg0: i32, %arg1: memref<1x40x10x4xbf16, #tpu.memory_space<vmem>>, %arg2: memref<25x4x128xbf16, #tpu.memory_space<vmem>>, %arg3: memref<1x64x128xbf16, #tpu.memory_space<vmem>>, %arg4: memref<1x2x128xf32, #tpu.memory_space<vmem>>) attributes {dimension_semantics = [#tpu.dimension_semantics<parallel>], iteration_bounds = array<i64: 2>, scalar_prefetch = 0 : i64, scratch_operands = 0 : i64, tpu.core_type = #tpu.core_type<tc>, window_params = [{transform_indices = @transform_0, window_bounds = array<i64: 1, 40, 10, 4>}, {pipeline_mode = #tpu.pipeline_mode<synchronous>, transform_indices = @transform_1, window_bounds = array<i64: 25, 4, 128>}, {transform_indices = @transform_2, window_bounds = array<i64: 1, 64, 128>}, {transform_indices = @transform_3, window_bounds = array<i64: 1, 2, 128>}]} {
    %cst = arith.constant 0.000000e+00 : f32
    %0 = vector.broadcast %cst : f32 to vector<64x128xf32>
    %c0 = arith.constant 0 : index
    %c0_0 = arith.constant 0 : index
    %c0_1 = arith.constant 0 : index
    %c0_2 = arith.constant 0 : index
    %1 = vector.load %arg1[%c0, %c0_0, %c0_1, %c0_2] : memref<1x40x10x4xbf16, #tpu.memory_space<vmem>>, vector<1x8x8x4xbf16>
    %2 = vector.shape_cast %1 : vector<1x8x8x4xbf16> to vector<8x8x4xbf16>
    %3 = arith.extf %2 : vector<8x8x4xbf16> to vector<8x8x4xf32>
    %4 = vector.shape_cast %3 : vector<8x8x4xf32> to vector<64x4xf32>
    %5 = arith.truncf %4 : vector<64x4xf32> to vector<64x4xbf16>
    %c0_3 = arith.constant 0 : index
    %c0_4 = arith.constant 0 : index
    %c0_5 = arith.constant 0 : index
    %6 = vector.load %arg2[%c0_3, %c0_4, %c0_5] : memref<25x4x128xbf16, #tpu.memory_space<vmem>>, vector<1x4x128xbf16>
    %7 = vector.shape_cast %6 : vector<1x4x128xbf16> to vector<4x128xbf16>
    %cst_6 = arith.constant dense<0.000000e+00> : vector<64x128xf32>
    %8 = tpu.matmul %5, %7, %cst_6 {dimension_numbers = #tpu.dot_dimension_numbers<[1], [0], [0], [1], [0, 0, 1, 1], [], []>} : vector<64x4xbf16>, vector<4x128xbf16>, vector<64x128xf32> -> vector<64x128xf32>
    %9 = arith.addf %0, %8 : vector<64x128xf32>
    %c0_7 = arith.constant 0 : index
    %c10 = arith.constant 10 : index
    %c0_8 = arith.constant 0 : index
    %c0_9 = arith.constant 0 : index
    %10 = vector.load %arg1[%c0_7, %c10, %c0_8, %c0_9] : memref<1x40x10x4xbf16, #tpu.memory_space<vmem>>, vector<1x8x8x4xbf16>
    %11 = vector.shape_cast %10 : vector<1x8x8x4xbf16> to vector<8x8x4xbf16>
    %12 = arith.extf %11 : vector<8x8x4xbf16> to vector<8x8x4xf32>
    %13 = vector.shape_cast %12 : vector<8x8x4xf32> to vector<64x4xf32>
    %14 = arith.truncf %13 : vector<64x4xf32> to vector<64x4xbf16>
    %c1 = arith.constant 1 : index
    %c0_10 = arith.constant 0 : index
    %c0_11 = arith.constant 0 : index
    %15 = vector.load %arg2[%c1, %c0_10, %c0_11] : memref<25x4x128xbf16, #tpu.memory_space<vmem>>, vector<1x4x128xbf16>
    %16 = vector.shape_cast %15 : vector<1x4x128xbf16> to vector<4x128xbf16>
    %cst_12 = arith.constant dense<0.000000e+00> : vector<64x128xf32>
    %17 = tpu.matmul %14, %16, %cst_12 {dimension_numbers = #tpu.dot_dimension_numbers<[1], [0], [0], [1], [0, 0, 1, 1], [], []>} : vector<64x4xbf16>, vector<4x128xbf16>, vector<64x128xf32> -> vector<64x128xf32>
    %18 = arith.addf %9, %17 : vector<64x128xf32>
    %c0_13 = arith.constant 0 : index
    %c0_14 = arith.constant 0 : index
    %c1_15 = arith.constant 1 : index
    %c0_16 = arith.constant 0 : index
    %19 = vector.load %arg1[%c0_13, %c0_14, %c1_15, %c0_16] : memref<1x40x10x4xbf16, #tpu.memory_space<vmem>>, vector<1x8x8x4xbf16>
    %20 = vector.shape_cast %19 : vector<1x8x8x4xbf16> to vector<8x8x4xbf16>
    %21 = arith.extf %20 : vector<8x8x4xbf16> to vector<8x8x4xf32>
    %22 = vector.shape_cast %21 : vector<8x8x4xf32> to vector<64x4xf32>
    %23 = arith.truncf %22 : vector<64x4xf32> to vector<64x4xbf16>
    %c2 = arith.constant 2 : index
    %c0_17 = arith.constant 0 : index
    %c0_18 = arith.constant 0 : index
    %24 = vector.load %arg2[%c2, %c0_17, %c0_18] : memref<25x4x128xbf16, #tpu.memory_space<vmem>>, vector<1x4x128xbf16>
    %25 = vector.shape_cast %24 : vector<1x4x128xbf16> to vector<4x128xbf16>
    %cst_19 = arith.constant dense<0.000000e+00> : vector<64x128xf32>
    %26 = tpu.matmul %23, %25, %cst_19 {dimension_numbers = #tpu.dot_dimension_numbers<[1], [0], [0], [1], [0, 0, 1, 1], [], []>} : vector<64x4xbf16>, vector<4x128xbf16>, vector<64x128xf32> -> vector<64x128xf32>
    %27 = arith.addf %18, %26 : vector<64x128xf32>
    %c0_20 = arith.constant 0 : index
    %c10_21 = arith.constant 10 : index
    %c1_22 = arith.constant 1 : index
    %c0_23 = arith.constant 0 : index
    %28 = vector.load %arg1[%c0_20, %c10_21, %c1_22, %c0_23] : memref<1x40x10x4xbf16, #tpu.memory_space<vmem>>, vector<1x8x8x4xbf16>
    %29 = vector.shape_cast %28 : vector<1x8x8x4xbf16> to vector<8x8x4xbf16>
    %30 = arith.extf %29 : vector<8x8x4xbf16> to vector<8x8x4xf32>
    %31 = vector.shape_cast %30 : vector<8x8x4xf32> to vector<64x4xf32>
    %32 = arith.truncf %31 : vector<64x4xf32> to vector<64x4xbf16>
    %c3 = arith.constant 3 : index
    %c0_24 = arith.constant 0 : index
    %c0_25 = arith.constant 0 : index
    %33 = vector.load %arg2[%c3, %c0_24, %c0_25] : memref<25x4x128xbf16, #tpu.memory_space<vmem>>, vector<1x4x128xbf16>
    %34 = vector.shape_cast %33 : vector<1x4x128xbf16> to vector<4x128xbf16>
    %cst_26 = arith.constant dense<0.000000e+00> : vector<64x128xf32>
    %35 = tpu.matmul %32, %34, %cst_26 {dimension_numbers = #tpu.dot_dimension_numbers<[1], [0], [0], [1], [0, 0, 1, 1], [], []>} : vector<64x4xbf16>, vector<4x128xbf16>, vector<64x128xf32> -> vector<64x128xf32>
    %36 = arith.addf %27, %35 : vector<64x128xf32>
    %c0_27 = arith.constant 0 : index
    %c0_28 = arith.constant 0 : index
    %c2_29 = arith.constant 2 : index
    %c0_30 = arith.constant 0 : index
    %37 = vector.load %arg1[%c0_27, %c0_28, %c2_29, %c0_30] : memref<1x40x10x4xbf16, #tpu.memory_space<vmem>>, vector<1x8x8x4xbf16>
    %38 = vector.shape_cast %37 : vector<1x8x8x4xbf16> to vector<8x8x4xbf16>
    %39 = arith.extf %38 : vector<8x8x4xbf16> to vector<8x8x4xf32>
    %40 = vector.shape_cast %39 : vector<8x8x4xf32> to vector<64x4xf32>
    %41 = arith.truncf %40 : vector<64x4xf32> to vector<64x4xbf16>
    %c4 = arith.constant 4 : index
    %c0_31 = arith.constant 0 : index
    %c0_32 = arith.constant 0 : index
    %42 = vector.load %arg2[%c4, %c0_31, %c0_32] : memref<25x4x128xbf16, #tpu.memory_space<vmem>>, vector<1x4x128xbf16>
    %43 = vector.shape_cast %42 : vector<1x4x128xbf16> to vector<4x128xbf16>
    %cst_33 = arith.constant dense<0.000000e+00> : vector<64x128xf32>
    %44 = tpu.matmul %41, %43, %cst_33 {dimension_numbers = #tpu.dot_dimension_numbers<[1], [0], [0], [1], [0, 0, 1, 1], [], []>} : vector<64x4xbf16>, vector<4x128xbf16>, vector<64x128xf32> -> vector<64x128xf32>
    %45 = arith.addf %36, %44 : vector<64x128xf32>
    %c0_34 = arith.constant 0 : index
    %c20 = arith.constant 20 : index
    %c0_35 = arith.constant 0 : index
    %c0_36 = arith.constant 0 : index
    %46 = vector.load %arg1[%c0_34, %c20, %c0_35, %c0_36] : memref<1x40x10x4xbf16, #tpu.memory_space<vmem>>, vector<1x8x8x4xbf16>
    %47 = vector.shape_cast %46 : vector<1x8x8x4xbf16> to vector<8x8x4xbf16>
    %48 = arith.extf %47 : vector<8x8x4xbf16> to vector<8x8x4xf32>
    %49 = vector.shape_cast %48 : vector<8x8x4xf32> to vector<64x4xf32>
    %50 = arith.truncf %49 : vector<64x4xf32> to vector<64x4xbf16>
    %c5 = arith.constant 5 : index
    %c0_37 = arith.constant 0 : index
    %c0_38 = arith.constant 0 : index
    %51 = vector.load %arg2[%c5, %c0_37, %c0_38] : memref<25x4x128xbf16, #tpu.memory_space<vmem>>, vector<1x4x128xbf16>
    %52 = vector.shape_cast %51 : vector<1x4x128xbf16> to vector<4x128xbf16>
    %cst_39 = arith.constant dense<0.000000e+00> : vector<64x128xf32>
    %53 = tpu.matmul %50, %52, %cst_39 {dimension_numbers = #tpu.dot_dimension_numbers<[1], [0], [0], [1], [0, 0, 1, 1], [], []>} : vector<64x4xbf16>, vector<4x128xbf16>, vector<64x128xf32> -> vector<64x128xf32>
    %54 = arith.addf %45, %53 : vector<64x128xf32>
    %c0_40 = arith.constant 0 : index
    %c30 = arith.constant 30 : index
    %c0_41 = arith.constant 0 : index
    %c0_42 = arith.constant 0 : index
    %55 = vector.load %arg1[%c0_40, %c30, %c0_41, %c0_42] : memref<1x40x10x4xbf16, #tpu.memory_space<vmem>>, vector<1x8x8x4xbf16>
    %56 = vector.shape_cast %55 : vector<1x8x8x4xbf16> to vector<8x8x4xbf16>
    %57 = arith.extf %56 : vector<8x8x4xbf16> to vector<8x8x4xf32>
    %58 = vector.shape_cast %57 : vector<8x8x4xf32> to vector<64x4xf32>
    %59 = arith.truncf %58 : vector<64x4xf32> to vector<64x4xbf16>
    %c6 = arith.constant 6 : index
    %c0_43 = arith.constant 0 : index
    %c0_44 = arith.constant 0 : index
    %60 = vector.load %arg2[%c6, %c0_43, %c0_44] : memref<25x4x128xbf16, #tpu.memory_space<vmem>>, vector<1x4x128xbf16>
    %61 = vector.shape_cast %60 : vector<1x4x128xbf16> to vector<4x128xbf16>
    %cst_45 = arith.constant dense<0.000000e+00> : vector<64x128xf32>
    %62 = tpu.matmul %59, %61, %cst_45 {dimension_numbers = #tpu.dot_dimension_numbers<[1], [0], [0], [1], [0, 0, 1, 1], [], []>} : vector<64x4xbf16>, vector<4x128xbf16>, vector<64x128xf32> -> vector<64x128xf32>
    %63 = arith.addf %54, %62 : vector<64x128xf32>
    %c0_46 = arith.constant 0 : index
    %c20_47 = arith.constant 20 : index
    %c1_48 = arith.constant 1 : index
    %c0_49 = arith.constant 0 : index
    %64 = vector.load %arg1[%c0_46, %c20_47, %c1_48, %c0_49] : memref<1x40x10x4xbf16, #tpu.memory_space<vmem>>, vector<1x8x8x4xbf16>
    %65 = vector.shape_cast %64 : vector<1x8x8x4xbf16> to vector<8x8x4xbf16>
    %66 = arith.extf %65 : vector<8x8x4xbf16> to vector<8x8x4xf32>
    %67 = vector.shape_cast %66 : vector<8x8x4xf32> to vector<64x4xf32>
    %68 = arith.truncf %67 : vector<64x4xf32> to vector<64x4xbf16>
    %c7 = arith.constant 7 : index
    %c0_50 = arith.constant 0 : index
    %c0_51 = arith.constant 0 : index
    %69 = vector.load %arg2[%c7, %c0_50, %c0_51] : memref<25x4x128xbf16, #tpu.memory_space<vmem>>, vector<1x4x128xbf16>
    %70 = vector.shape_cast %69 : vector<1x4x128xbf16> to vector<4x128xbf16>
    %cst_52 = arith.constant dense<0.000000e+00> : vector<64x128xf32>
    %71 = tpu.matmul %68, %70, %cst_52 {dimension_numbers = #tpu.dot_dimension_numbers<[1], [0], [0], [1], [0, 0, 1, 1], [], []>} : vector<64x4xbf16>, vector<4x128xbf16>, vector<64x128xf32> -> vector<64x128xf32>
    %72 = arith.addf %63, %71 : vector<64x128xf32>
    %c0_53 = arith.constant 0 : index
    %c30_54 = arith.constant 30 : index
    %c1_55 = arith.constant 1 : index
    %c0_56 = arith.constant 0 : index
    %73 = vector.load %arg1[%c0_53, %c30_54, %c1_55, %c0_56] : memref<1x40x10x4xbf16, #tpu.memory_space<vmem>>, vector<1x8x8x4xbf16>
    %74 = vector.shape_cast %73 : vector<1x8x8x4xbf16> to vector<8x8x4xbf16>
    %75 = arith.extf %74 : vector<8x8x4xbf16> to vector<8x8x4xf32>
    %76 = vector.shape_cast %75 : vector<8x8x4xf32> to vector<64x4xf32>
    %77 = arith.truncf %76 : vector<64x4xf32> to vector<64x4xbf16>
    %c8 = arith.constant 8 : index
    %c0_57 = arith.constant 0 : index
    %c0_58 = arith.constant 0 : index
    %78 = vector.load %arg2[%c8, %c0_57, %c0_58] : memref<25x4x128xbf16, #tpu.memory_space<vmem>>, vector<1x4x128xbf16>
    %79 = vector.shape_cast %78 : vector<1x4x128xbf16> to vector<4x128xbf16>
    %cst_59 = arith.constant dense<0.000000e+00> : vector<64x128xf32>
    %80 = tpu.matmul %77, %79, %cst_59 {dimension_numbers = #tpu.dot_dimension_numbers<[1], [0], [0], [1], [0, 0, 1, 1], [], []>} : vector<64x4xbf16>, vector<4x128xbf16>, vector<64x128xf32> -> vector<64x128xf32>
    %81 = arith.addf %72, %80 : vector<64x128xf32>
    %c0_60 = arith.constant 0 : index
    %c20_61 = arith.constant 20 : index
    %c2_62 = arith.constant 2 : index
    %c0_63 = arith.constant 0 : index
    %82 = vector.load %arg1[%c0_60, %c20_61, %c2_62, %c0_63] : memref<1x40x10x4xbf16, #tpu.memory_space<vmem>>, vector<1x8x8x4xbf16>
    %83 = vector.shape_cast %82 : vector<1x8x8x4xbf16> to vector<8x8x4xbf16>
    %84 = arith.extf %83 : vector<8x8x4xbf16> to vector<8x8x4xf32>
    %85 = vector.shape_cast %84 : vector<8x8x4xf32> to vector<64x4xf32>
    %86 = arith.truncf %85 : vector<64x4xf32> to vector<64x4xbf16>
    %c9 = arith.constant 9 : index
    %c0_64 = arith.constant 0 : index
    %c0_65 = arith.constant 0 : index
    %87 = vector.load %arg2[%c9, %c0_64, %c0_65] : memref<25x4x128xbf16, #tpu.memory_space<vmem>>, vector<1x4x128xbf16>
    %88 = vector.shape_cast %87 : vector<1x4x128xbf16> to vector<4x128xbf16>
    %cst_66 = arith.constant dense<0.000000e+00> : vector<64x128xf32>
    %89 = tpu.matmul %86, %88, %cst_66 {dimension_numbers = #tpu.dot_dimension_numbers<[1], [0], [0], [1], [0, 0, 1, 1], [], []>} : vector<64x4xbf16>, vector<4x128xbf16>, vector<64x128xf32> -> vector<64x128xf32>
    %90 = arith.addf %81, %89 : vector<64x128xf32>
    %c0_67 = arith.constant 0 : index
    %c1_68 = arith.constant 1 : index
    %c0_69 = arith.constant 0 : index
    %c0_70 = arith.constant 0 : index
    %91 = vector.load %arg1[%c0_67, %c1_68, %c0_69, %c0_70] : memref<1x40x10x4xbf16, #tpu.memory_space<vmem>>, vector<1x8x8x4xbf16>
    %92 = vector.shape_cast %91 : vector<1x8x8x4xbf16> to vector<8x8x4xbf16>
    %93 = arith.extf %92 : vector<8x8x4xbf16> to vector<8x8x4xf32>
    %94 = vector.shape_cast %93 : vector<8x8x4xf32> to vector<64x4xf32>
    %95 = arith.truncf %94 : vector<64x4xf32> to vector<64x4xbf16>
    %c10_71 = arith.constant 10 : index
    %c0_72 = arith.constant 0 : index
    %c0_73 = arith.constant 0 : index
    %96 = vector.load %arg2[%c10_71, %c0_72, %c0_73] : memref<25x4x128xbf16, #tpu.memory_space<vmem>>, vector<1x4x128xbf16>
    %97 = vector.shape_cast %96 : vector<1x4x128xbf16> to vector<4x128xbf16>
    %cst_74 = arith.constant dense<0.000000e+00> : vector<64x128xf32>
    %98 = tpu.matmul %95, %97, %cst_74 {dimension_numbers = #tpu.dot_dimension_numbers<[1], [0], [0], [1], [0, 0, 1, 1], [], []>} : vector<64x4xbf16>, vector<4x128xbf16>, vector<64x128xf32> -> vector<64x128xf32>
    %99 = arith.addf %90, %98 : vector<64x128xf32>
    %c0_75 = arith.constant 0 : index
    %c11 = arith.constant 11 : index
    %c0_76 = arith.constant 0 : index
    %c0_77 = arith.constant 0 : index
    %100 = vector.load %arg1[%c0_75, %c11, %c0_76, %c0_77] : memref<1x40x10x4xbf16, #tpu.memory_space<vmem>>, vector<1x8x8x4xbf16>
    %101 = vector.shape_cast %100 : vector<1x8x8x4xbf16> to vector<8x8x4xbf16>
    %102 = arith.extf %101 : vector<8x8x4xbf16> to vector<8x8x4xf32>
    %103 = vector.shape_cast %102 : vector<8x8x4xf32> to vector<64x4xf32>
    %104 = arith.truncf %103 : vector<64x4xf32> to vector<64x4xbf16>
    %c11_78 = arith.constant 11 : index
    %c0_79 = arith.constant 0 : index
    %c0_80 = arith.constant 0 : index
    %105 = vector.load %arg2[%c11_78, %c0_79, %c0_80] : memref<25x4x128xbf16, #tpu.memory_space<vmem>>, vector<1x4x128xbf16>
    %106 = vector.shape_cast %105 : vector<1x4x128xbf16> to vector<4x128xbf16>
    %cst_81 = arith.constant dense<0.000000e+00> : vector<64x128xf32>
    %107 = tpu.matmul %104, %106, %cst_81 {dimension_numbers = #tpu.dot_dimension_numbers<[1], [0], [0], [1], [0, 0, 1, 1], [], []>} : vector<64x4xbf16>, vector<4x128xbf16>, vector<64x128xf32> -> vector<64x128xf32>
    %108 = arith.addf %99, %107 : vector<64x128xf32>
    %c0_82 = arith.constant 0 : index
    %c1_83 = arith.constant 1 : index
    %c1_84 = arith.constant 1 : index
    %c0_85 = arith.constant 0 : index
    %109 = vector.load %arg1[%c0_82, %c1_83, %c1_84, %c0_85] : memref<1x40x10x4xbf16, #tpu.memory_space<vmem>>, vector<1x8x8x4xbf16>
    %110 = vector.shape_cast %109 : vector<1x8x8x4xbf16> to vector<8x8x4xbf16>
    %111 = arith.extf %110 : vector<8x8x4xbf16> to vector<8x8x4xf32>
    %112 = vector.shape_cast %111 : vector<8x8x4xf32> to vector<64x4xf32>
    %113 = arith.truncf %112 : vector<64x4xf32> to vector<64x4xbf16>
    %c12 = arith.constant 12 : index
    %c0_86 = arith.constant 0 : index
    %c0_87 = arith.constant 0 : index
    %114 = vector.load %arg2[%c12, %c0_86, %c0_87] : memref<25x4x128xbf16, #tpu.memory_space<vmem>>, vector<1x4x128xbf16>
    %115 = vector.shape_cast %114 : vector<1x4x128xbf16> to vector<4x128xbf16>
    %cst_88 = arith.constant dense<0.000000e+00> : vector<64x128xf32>
    %116 = tpu.matmul %113, %115, %cst_88 {dimension_numbers = #tpu.dot_dimension_numbers<[1], [0], [0], [1], [0, 0, 1, 1], [], []>} : vector<64x4xbf16>, vector<4x128xbf16>, vector<64x128xf32> -> vector<64x128xf32>
    %117 = arith.addf %108, %116 : vector<64x128xf32>
    %c0_89 = arith.constant 0 : index
    %c11_90 = arith.constant 11 : index
    %c1_91 = arith.constant 1 : index
    %c0_92 = arith.constant 0 : index
    %118 = vector.load %arg1[%c0_89, %c11_90, %c1_91, %c0_92] : memref<1x40x10x4xbf16, #tpu.memory_space<vmem>>, vector<1x8x8x4xbf16>
    %119 = vector.shape_cast %118 : vector<1x8x8x4xbf16> to vector<8x8x4xbf16>
    %120 = arith.extf %119 : vector<8x8x4xbf16> to vector<8x8x4xf32>
    %121 = vector.shape_cast %120 : vector<8x8x4xf32> to vector<64x4xf32>
    %122 = arith.truncf %121 : vector<64x4xf32> to vector<64x4xbf16>
    %c13 = arith.constant 13 : index
    %c0_93 = arith.constant 0 : index
    %c0_94 = arith.constant 0 : index
    %123 = vector.load %arg2[%c13, %c0_93, %c0_94] : memref<25x4x128xbf16, #tpu.memory_space<vmem>>, vector<1x4x128xbf16>
    %124 = vector.shape_cast %123 : vector<1x4x128xbf16> to vector<4x128xbf16>
    %cst_95 = arith.constant dense<0.000000e+00> : vector<64x128xf32>
    %125 = tpu.matmul %122, %124, %cst_95 {dimension_numbers = #tpu.dot_dimension_numbers<[1], [0], [0], [1], [0, 0, 1, 1], [], []>} : vector<64x4xbf16>, vector<4x128xbf16>, vector<64x128xf32> -> vector<64x128xf32>
    %126 = arith.addf %117, %125 : vector<64x128xf32>
    %c0_96 = arith.constant 0 : index
    %c1_97 = arith.constant 1 : index
    %c2_98 = arith.constant 2 : index
    %c0_99 = arith.constant 0 : index
    %127 = vector.load %arg1[%c0_96, %c1_97, %c2_98, %c0_99] : memref<1x40x10x4xbf16, #tpu.memory_space<vmem>>, vector<1x8x8x4xbf16>
    %128 = vector.shape_cast %127 : vector<1x8x8x4xbf16> to vector<8x8x4xbf16>
    %129 = arith.extf %128 : vector<8x8x4xbf16> to vector<8x8x4xf32>
    %130 = vector.shape_cast %129 : vector<8x8x4xf32> to vector<64x4xf32>
    %131 = arith.truncf %130 : vector<64x4xf32> to vector<64x4xbf16>
    %c14 = arith.constant 14 : index
    %c0_100 = arith.constant 0 : index
    %c0_101 = arith.constant 0 : index
    %132 = vector.load %arg2[%c14, %c0_100, %c0_101] : memref<25x4x128xbf16, #tpu.memory_space<vmem>>, vector<1x4x128xbf16>
    %133 = vector.shape_cast %132 : vector<1x4x128xbf16> to vector<4x128xbf16>
    %cst_102 = arith.constant dense<0.000000e+00> : vector<64x128xf32>
    %134 = tpu.matmul %131, %133, %cst_102 {dimension_numbers = #tpu.dot_dimension_numbers<[1], [0], [0], [1], [0, 0, 1, 1], [], []>} : vector<64x4xbf16>, vector<4x128xbf16>, vector<64x128xf32> -> vector<64x128xf32>
    %135 = arith.addf %126, %134 : vector<64x128xf32>
    %c0_103 = arith.constant 0 : index
    %c21 = arith.constant 21 : index
    %c0_104 = arith.constant 0 : index
    %c0_105 = arith.constant 0 : index
    %136 = vector.load %arg1[%c0_103, %c21, %c0_104, %c0_105] : memref<1x40x10x4xbf16, #tpu.memory_space<vmem>>, vector<1x8x8x4xbf16>
    %137 = vector.shape_cast %136 : vector<1x8x8x4xbf16> to vector<8x8x4xbf16>
    %138 = arith.extf %137 : vector<8x8x4xbf16> to vector<8x8x4xf32>
    %139 = vector.shape_cast %138 : vector<8x8x4xf32> to vector<64x4xf32>
    %140 = arith.truncf %139 : vector<64x4xf32> to vector<64x4xbf16>
    %c15 = arith.constant 15 : index
    %c0_106 = arith.constant 0 : index
    %c0_107 = arith.constant 0 : index
    %141 = vector.load %arg2[%c15, %c0_106, %c0_107] : memref<25x4x128xbf16, #tpu.memory_space<vmem>>, vector<1x4x128xbf16>
    %142 = vector.shape_cast %141 : vector<1x4x128xbf16> to vector<4x128xbf16>
    %cst_108 = arith.constant dense<0.000000e+00> : vector<64x128xf32>
    %143 = tpu.matmul %140, %142, %cst_108 {dimension_numbers = #tpu.dot_dimension_numbers<[1], [0], [0], [1], [0, 0, 1, 1], [], []>} : vector<64x4xbf16>, vector<4x128xbf16>, vector<64x128xf32> -> vector<64x128xf32>
    %144 = arith.addf %135, %143 : vector<64x128xf32>
    %c0_109 = arith.constant 0 : index
    %c31 = arith.constant 31 : index
    %c0_110 = arith.constant 0 : index
    %c0_111 = arith.constant 0 : index
    %145 = vector.load %arg1[%c0_109, %c31, %c0_110, %c0_111] : memref<1x40x10x4xbf16, #tpu.memory_space<vmem>>, vector<1x8x8x4xbf16>
    %146 = vector.shape_cast %145 : vector<1x8x8x4xbf16> to vector<8x8x4xbf16>
    %147 = arith.extf %146 : vector<8x8x4xbf16> to vector<8x8x4xf32>
    %148 = vector.shape_cast %147 : vector<8x8x4xf32> to vector<64x4xf32>
    %149 = arith.truncf %148 : vector<64x4xf32> to vector<64x4xbf16>
    %c16 = arith.constant 16 : index
    %c0_112 = arith.constant 0 : index
    %c0_113 = arith.constant 0 : index
    %150 = vector.load %arg2[%c16, %c0_112, %c0_113] : memref<25x4x128xbf16, #tpu.memory_space<vmem>>, vector<1x4x128xbf16>
    %151 = vector.shape_cast %150 : vector<1x4x128xbf16> to vector<4x128xbf16>
    %cst_114 = arith.constant dense<0.000000e+00> : vector<64x128xf32>
    %152 = tpu.matmul %149, %151, %cst_114 {dimension_numbers = #tpu.dot_dimension_numbers<[1], [0], [0], [1], [0, 0, 1, 1], [], []>} : vector<64x4xbf16>, vector<4x128xbf16>, vector<64x128xf32> -> vector<64x128xf32>
    %153 = arith.addf %144, %152 : vector<64x128xf32>
    %c0_115 = arith.constant 0 : index
    %c21_116 = arith.constant 21 : index
    %c1_117 = arith.constant 1 : index
    %c0_118 = arith.constant 0 : index
    %154 = vector.load %arg1[%c0_115, %c21_116, %c1_117, %c0_118] : memref<1x40x10x4xbf16, #tpu.memory_space<vmem>>, vector<1x8x8x4xbf16>
    %155 = vector.shape_cast %154 : vector<1x8x8x4xbf16> to vector<8x8x4xbf16>
    %156 = arith.extf %155 : vector<8x8x4xbf16> to vector<8x8x4xf32>
    %157 = vector.shape_cast %156 : vector<8x8x4xf32> to vector<64x4xf32>
    %158 = arith.truncf %157 : vector<64x4xf32> to vector<64x4xbf16>
    %c17 = arith.constant 17 : index
    %c0_119 = arith.constant 0 : index
    %c0_120 = arith.constant 0 : index
    %159 = vector.load %arg2[%c17, %c0_119, %c0_120] : memref<25x4x128xbf16, #tpu.memory_space<vmem>>, vector<1x4x128xbf16>
    %160 = vector.shape_cast %159 : vector<1x4x128xbf16> to vector<4x128xbf16>
    %cst_121 = arith.constant dense<0.000000e+00> : vector<64x128xf32>
    %161 = tpu.matmul %158, %160, %cst_121 {dimension_numbers = #tpu.dot_dimension_numbers<[1], [0], [0], [1], [0, 0, 1, 1], [], []>} : vector<64x4xbf16>, vector<4x128xbf16>, vector<64x128xf32> -> vector<64x128xf32>
    %162 = arith.addf %153, %161 : vector<64x128xf32>
    %c0_122 = arith.constant 0 : index
    %c31_123 = arith.constant 31 : index
    %c1_124 = arith.constant 1 : index
    %c0_125 = arith.constant 0 : index
    %163 = vector.load %arg1[%c0_122, %c31_123, %c1_124, %c0_125] : memref<1x40x10x4xbf16, #tpu.memory_space<vmem>>, vector<1x8x8x4xbf16>
    %164 = vector.shape_cast %163 : vector<1x8x8x4xbf16> to vector<8x8x4xbf16>
    %165 = arith.extf %164 : vector<8x8x4xbf16> to vector<8x8x4xf32>
    %166 = vector.shape_cast %165 : vector<8x8x4xf32> to vector<64x4xf32>
    %167 = arith.truncf %166 : vector<64x4xf32> to vector<64x4xbf16>
    %c18 = arith.constant 18 : index
    %c0_126 = arith.constant 0 : index
    %c0_127 = arith.constant 0 : index
    %168 = vector.load %arg2[%c18, %c0_126, %c0_127] : memref<25x4x128xbf16, #tpu.memory_space<vmem>>, vector<1x4x128xbf16>
    %169 = vector.shape_cast %168 : vector<1x4x128xbf16> to vector<4x128xbf16>
    %cst_128 = arith.constant dense<0.000000e+00> : vector<64x128xf32>
    %170 = tpu.matmul %167, %169, %cst_128 {dimension_numbers = #tpu.dot_dimension_numbers<[1], [0], [0], [1], [0, 0, 1, 1], [], []>} : vector<64x4xbf16>, vector<4x128xbf16>, vector<64x128xf32> -> vector<64x128xf32>
    %171 = arith.addf %162, %170 : vector<64x128xf32>
    %c0_129 = arith.constant 0 : index
    %c21_130 = arith.constant 21 : index
    %c2_131 = arith.constant 2 : index
    %c0_132 = arith.constant 0 : index
    %172 = vector.load %arg1[%c0_129, %c21_130, %c2_131, %c0_132] : memref<1x40x10x4xbf16, #tpu.memory_space<vmem>>, vector<1x8x8x4xbf16>
    %173 = vector.shape_cast %172 : vector<1x8x8x4xbf16> to vector<8x8x4xbf16>
    %174 = arith.extf %173 : vector<8x8x4xbf16> to vector<8x8x4xf32>
    %175 = vector.shape_cast %174 : vector<8x8x4xf32> to vector<64x4xf32>
    %176 = arith.truncf %175 : vector<64x4xf32> to vector<64x4xbf16>
    %c19 = arith.constant 19 : index
    %c0_133 = arith.constant 0 : index
    %c0_134 = arith.constant 0 : index
    %177 = vector.load %arg2[%c19, %c0_133, %c0_134] : memref<25x4x128xbf16, #tpu.memory_space<vmem>>, vector<1x4x128xbf16>
    %178 = vector.shape_cast %177 : vector<1x4x128xbf16> to vector<4x128xbf16>
    %cst_135 = arith.constant dense<0.000000e+00> : vector<64x128xf32>
    %179 = tpu.matmul %176, %178, %cst_135 {dimension_numbers = #tpu.dot_dimension_numbers<[1], [0], [0], [1], [0, 0, 1, 1], [], []>} : vector<64x4xbf16>, vector<4x128xbf16>, vector<64x128xf32> -> vector<64x128xf32>
    %180 = arith.addf %171, %179 : vector<64x128xf32>
    %c0_136 = arith.constant 0 : index
    %c2_137 = arith.constant 2 : index
    %c0_138 = arith.constant 0 : index
    %c0_139 = arith.constant 0 : index
    %181 = vector.load %arg1[%c0_136, %c2_137, %c0_138, %c0_139] : memref<1x40x10x4xbf16, #tpu.memory_space<vmem>>, vector<1x8x8x4xbf16>
    %182 = vector.shape_cast %181 : vector<1x8x8x4xbf16> to vector<8x8x4xbf16>
    %183 = arith.extf %182 : vector<8x8x4xbf16> to vector<8x8x4xf32>
    %184 = vector.shape_cast %183 : vector<8x8x4xf32> to vector<64x4xf32>
    %185 = arith.truncf %184 : vector<64x4xf32> to vector<64x4xbf16>
    %c20_140 = arith.constant 20 : index
    %c0_141 = arith.constant 0 : index
    %c0_142 = arith.constant 0 : index
    %186 = vector.load %arg2[%c20_140, %c0_141, %c0_142] : memref<25x4x128xbf16, #tpu.memory_space<vmem>>, vector<1x4x128xbf16>
    %187 = vector.shape_cast %186 : vector<1x4x128xbf16> to vector<4x128xbf16>
    %cst_143 = arith.constant dense<0.000000e+00> : vector<64x128xf32>
    %188 = tpu.matmul %185, %187, %cst_143 {dimension_numbers = #tpu.dot_dimension_numbers<[1], [0], [0], [1], [0, 0, 1, 1], [], []>} : vector<64x4xbf16>, vector<4x128xbf16>, vector<64x128xf32> -> vector<64x128xf32>
    %189 = arith.addf %180, %188 : vector<64x128xf32>
    %c0_144 = arith.constant 0 : index
    %c12_145 = arith.constant 12 : index
    %c0_146 = arith.constant 0 : index
    %c0_147 = arith.constant 0 : index
    %190 = vector.load %arg1[%c0_144, %c12_145, %c0_146, %c0_147] : memref<1x40x10x4xbf16, #tpu.memory_space<vmem>>, vector<1x8x8x4xbf16>
    %191 = vector.shape_cast %190 : vector<1x8x8x4xbf16> to vector<8x8x4xbf16>
    %192 = arith.extf %191 : vector<8x8x4xbf16> to vector<8x8x4xf32>
    %193 = vector.shape_cast %192 : vector<8x8x4xf32> to vector<64x4xf32>
    %194 = arith.truncf %193 : vector<64x4xf32> to vector<64x4xbf16>
    %c21_148 = arith.constant 21 : index
    %c0_149 = arith.constant 0 : index
    %c0_150 = arith.constant 0 : index
    %195 = vector.load %arg2[%c21_148, %c0_149, %c0_150] : memref<25x4x128xbf16, #tpu.memory_space<vmem>>, vector<1x4x128xbf16>
    %196 = vector.shape_cast %195 : vector<1x4x128xbf16> to vector<4x128xbf16>
    %cst_151 = arith.constant dense<0.000000e+00> : vector<64x128xf32>
    %197 = tpu.matmul %194, %196, %cst_151 {dimension_numbers = #tpu.dot_dimension_numbers<[1], [0], [0], [1], [0, 0, 1, 1], [], []>} : vector<64x4xbf16>, vector<4x128xbf16>, vector<64x128xf32> -> vector<64x128xf32>
    %198 = arith.addf %189, %197 : vector<64x128xf32>
    %c0_152 = arith.constant 0 : index
    %c2_153 = arith.constant 2 : index
    %c1_154 = arith.constant 1 : index
    %c0_155 = arith.constant 0 : index
    %199 = vector.load %arg1[%c0_152, %c2_153, %c1_154, %c0_155] : memref<1x40x10x4xbf16, #tpu.memory_space<vmem>>, vector<1x8x8x4xbf16>
    %200 = vector.shape_cast %199 : vector<1x8x8x4xbf16> to vector<8x8x4xbf16>
    %201 = arith.extf %200 : vector<8x8x4xbf16> to vector<8x8x4xf32>
    %202 = vector.shape_cast %201 : vector<8x8x4xf32> to vector<64x4xf32>
    %203 = arith.truncf %202 : vector<64x4xf32> to vector<64x4xbf16>
    %c22 = arith.constant 22 : index
    %c0_156 = arith.constant 0 : index
    %c0_157 = arith.constant 0 : index
    %204 = vector.load %arg2[%c22, %c0_156, %c0_157] : memref<25x4x128xbf16, #tpu.memory_space<vmem>>, vector<1x4x128xbf16>
    %205 = vector.shape_cast %204 : vector<1x4x128xbf16> to vector<4x128xbf16>
    %cst_158 = arith.constant dense<0.000000e+00> : vector<64x128xf32>
    %206 = tpu.matmul %203, %205, %cst_158 {dimension_numbers = #tpu.dot_dimension_numbers<[1], [0], [0], [1], [0, 0, 1, 1], [], []>} : vector<64x4xbf16>, vector<4x128xbf16>, vector<64x128xf32> -> vector<64x128xf32>
    %207 = arith.addf %198, %206 : vector<64x128xf32>
    %c0_159 = arith.constant 0 : index
    %c12_160 = arith.constant 12 : index
    %c1_161 = arith.constant 1 : index
    %c0_162 = arith.constant 0 : index
    %208 = vector.load %arg1[%c0_159, %c12_160, %c1_161, %c0_162] : memref<1x40x10x4xbf16, #tpu.memory_space<vmem>>, vector<1x8x8x4xbf16>
    %209 = vector.shape_cast %208 : vector<1x8x8x4xbf16> to vector<8x8x4xbf16>
    %210 = arith.extf %209 : vector<8x8x4xbf16> to vector<8x8x4xf32>
    %211 = vector.shape_cast %210 : vector<8x8x4xf32> to vector<64x4xf32>
    %212 = arith.truncf %211 : vector<64x4xf32> to vector<64x4xbf16>
    %c23 = arith.constant 23 : index
    %c0_163 = arith.constant 0 : index
    %c0_164 = arith.constant 0 : index
    %213 = vector.load %arg2[%c23, %c0_163, %c0_164] : memref<25x4x128xbf16, #tpu.memory_space<vmem>>, vector<1x4x128xbf16>
    %214 = vector.shape_cast %213 : vector<1x4x128xbf16> to vector<4x128xbf16>
    %cst_165 = arith.constant dense<0.000000e+00> : vector<64x128xf32>
    %215 = tpu.matmul %212, %214, %cst_165 {dimension_numbers = #tpu.dot_dimension_numbers<[1], [0], [0], [1], [0, 0, 1, 1], [], []>} : vector<64x4xbf16>, vector<4x128xbf16>, vector<64x128xf32> -> vector<64x128xf32>
    %216 = arith.addf %207, %215 : vector<64x128xf32>
    %c0_166 = arith.constant 0 : index
    %c2_167 = arith.constant 2 : index
    %c2_168 = arith.constant 2 : index
    %c0_169 = arith.constant 0 : index
    %217 = vector.load %arg1[%c0_166, %c2_167, %c2_168, %c0_169] : memref<1x40x10x4xbf16, #tpu.memory_space<vmem>>, vector<1x8x8x4xbf16>
    %218 = vector.shape_cast %217 : vector<1x8x8x4xbf16> to vector<8x8x4xbf16>
    %219 = arith.extf %218 : vector<8x8x4xbf16> to vector<8x8x4xf32>
    %220 = vector.shape_cast %219 : vector<8x8x4xf32> to vector<64x4xf32>
    %221 = arith.truncf %220 : vector<64x4xf32> to vector<64x4xbf16>
    %c24 = arith.constant 24 : index
    %c0_170 = arith.constant 0 : index
    %c0_171 = arith.constant 0 : index
    %222 = vector.load %arg2[%c24, %c0_170, %c0_171] : memref<25x4x128xbf16, #tpu.memory_space<vmem>>, vector<1x4x128xbf16>
    %223 = vector.shape_cast %222 : vector<1x4x128xbf16> to vector<4x128xbf16>
    %cst_172 = arith.constant dense<0.000000e+00> : vector<64x128xf32>
    %224 = tpu.matmul %221, %223, %cst_172 {dimension_numbers = #tpu.dot_dimension_numbers<[1], [0], [0], [1], [0, 0, 1, 1], [], []>} : vector<64x4xbf16>, vector<4x128xbf16>, vector<64x128xf32> -> vector<64x128xf32>
    %225 = arith.addf %216, %224 : vector<64x128xf32>
    %226 = arith.truncf %225 : vector<64x128xf32> to vector<64x128xbf16>
    %c0_173 = arith.constant 0 : index
    %c0_174 = arith.constant 0 : index
    %c0_175 = arith.constant 0 : index
    %227 = vector.load %arg3[%c0_173, %c0_174, %c0_175] : memref<1x64x128xbf16, #tpu.memory_space<vmem>>, vector<1x64x128xbf16>
    %228 = vector.shape_cast %227 : vector<1x64x128xbf16> to vector<64x128xbf16>
    %229 = vector.shape_cast %226 : vector<64x128xbf16> to vector<1x64x128xbf16>
    tpu.vector_store %arg3[%c0_173, %c0_174, %c0_175], %229 {strides = array<i32>} : memref<1x64x128xbf16, #tpu.memory_space<vmem>>, vector<1x64x128xbf16>,
    %cst_176 = arith.constant dense<0.000000e+00> : vector<128xf32>
    %230 = vector.multi_reduction <add>, %225, %cst_176 [0] : vector<64x128xf32> to vector<128xf32>
    %231 = vector.shape_cast %230 : vector<128xf32> to vector<1x128xf32>
    %c0_177 = arith.constant 0 : index
    %c0_178 = arith.constant 0 : index
    %c0_179 = arith.constant 0 : index
    %232 = vector.load %arg4[%c0_177, %c0_178, %c0_179] : memref<1x2x128xf32, #tpu.memory_space<vmem>>, vector<1x1x128xf32>
    %233 = vector.shape_cast %232 : vector<1x1x128xf32> to vector<1x128xf32>
    %234 = vector.shape_cast %231 : vector<1x128xf32> to vector<1x1x128xf32>
    tpu.vector_store %arg4[%c0_177, %c0_178, %c0_179], %234 {strides = array<i32>} : memref<1x2x128xf32, #tpu.memory_space<vmem>>, vector<1x1x128xf32>,
    %235 = arith.mulf %225, %225 : vector<64x128xf32>
    %cst_180 = arith.constant dense<0.000000e+00> : vector<128xf32>
    %236 = vector.multi_reduction <add>, %235, %cst_180 [0] : vector<64x128xf32> to vector<128xf32>
    %237 = vector.shape_cast %236 : vector<128xf32> to vector<1x128xf32>
    %c0_181 = arith.constant 0 : index
    %c1_182 = arith.constant 1 : index
    %c0_183 = arith.constant 0 : index
    %238 = vector.load %arg4[%c0_181, %c1_182, %c0_183] : memref<1x2x128xf32, #tpu.memory_space<vmem>>, vector<1x1x128xf32>
    %239 = vector.shape_cast %238 : vector<1x1x128xf32> to vector<1x128xf32>
    %240 = vector.shape_cast %237 : vector<1x128xf32> to vector<1x1x128xf32>
    tpu.vector_store %arg4[%c0_181, %c1_182, %c0_183], %240 {strides = array<i32>} : memref<1x2x128xf32, #tpu.memory_space<vmem>>, vector<1x1x128xf32>,
    return
  }
  func.func @transform_0(%arg0: i32) -> (i32, i32, i32, i32) {
    %c0_i32 = arith.constant 0 : i32
    %c0_i32_0 = arith.constant 0 : i32
    %c0_i32_1 = arith.constant 0 : i32
    %c0_i32_2 = arith.constant 0 : i32
    return %arg0, %c0_i32, %c0_i32_0, %c0_i32_1 : i32, i32, i32, i32
  }
  func.func @transform_1(%arg0: i32) -> (i32, i32, i32) {
    %c0_i32 = arith.constant 0 : i32
    %c0_i32_0 = arith.constant 0 : i32
    %c0_i32_1 = arith.constant 0 : i32
    %c0_i32_2 = arith.constant 0 : i32
    return %c0_i32, %c0_i32_0, %c0_i32_1 : i32, i32, i32
  }
  func.func @transform_2(%arg0: i32) -> (i32, i32, i32) {
    %c0_i32 = arith.constant 0 : i32
    %c0_i32_0 = arith.constant 0 : i32
    %c0_i32_1 = arith.constant 0 : i32
    return %arg0, %c0_i32, %c0_i32_0 : i32, i32, i32
  }
  func.func @transform_3(%arg0: i32) -> (i32, i32, i32) {
    %c0_i32 = arith.constant 0 : i32
    %c0_i32_0 = arith.constant 0 : i32
    %c0_i32_1 = arith.constant 0 : i32
    return %arg0, %c0_i32, %c0_i32_0 : i32, i32, i32
  }
}

</mosaic_0001>

<llo_original>
// kernel: encoder_layer_forward.3
$region0: #{encoder_layer_forward.3}
  #allocation0 [shape = 'u32[]', space=smem, size = 0x4, offset = 0x4, fixed_abs, tag = 'smem constant byte address 0x4 - core index']
  #allocation1 [shape = 'u32[72,128]{1,0:T(1,128)}', space=vmem, size = 0x9000, scoped, tag = 'internal scratch']
  %s0 = inlined_call_operand.vmem [shape: bf16[2,64,128], index: 0, kind: input, shape index: {}]
  %s1 = inlined_call_operand.vmem [shape: f32[1,128], index: 1, kind: input, shape index: {}]
  %s2 = inlined_call_operand.vmem [shape: f32[1,128], index: 2, kind: input, shape index: {}]
  %s3 = inlined_call_operand.vmem [shape: f32[2,8,64], index: 3, kind: output, shape index: {}]
  %s4 = sld [smem:[#allocation0]]
  $region45: #{encoder_layer_forward.3} parent=0
    _
  %s6 = ssub.s32 1, %s4
  %s7 = scalar_select 0, %s6, %s4
  loop: start=0, step=1, limit=4
  $region2: #{encoder_layer_forward.3} parent=0 // loop_pre_header
    _
  $region3: #{encoder_layer_forward.3} parent=0 // loop_header
    %s9 = sphi 0, %s13
    %p10 = scmp.ge.s32.totalorder %s9, 4
    %s19 = sphi 0, %s21
    %s22 = sphi 0, %s19
    %s23 = sphi 0, %s22
    %s39 = sphi 0, %s23
    %s43 = sphi 0, %s43
    %s45 = sphi 0, %s43
    %s46 = sphi 0, %s45
    %s60 = sphi 0, %s46
    %s64 = sphi 0, %s64
    %s66 = sphi 0, %s64
    %s67 = sphi 0, %s66
    %s81 = sphi 0, %s67
    %s87 = sphi 0, %s89
    %s90 = sphi 0, %s87
    %s91 = sphi 0, %s90
    %s107 = sphi 0, %s91
  $region4: #{encoder_layer_forward.3} parent=0 // loop_header_branch
    %12 = sbr.rel (%p10) target = $region8
  $region5: #{encoder_layer_forward.3} parent=0 // loop_body
    %s14 = ssub.s32 %s9, 1
    %s15 = ssub.s32 %s9, 2
    %s16 = sadd.s32 %s9, 1
    %s17 = ssub.s32 %s9, %s16
    %p18 = scmp.eq.s32.totalorder %s17, 0
    %s20 = sadd.s32 %s19, 1
    %s21 = scalar_select %p18, %s19, %s20
    %p24 = pneg %p18
    %p25 = scmp.eq.s32.totalorder %s9, 1
    %p26 = por %p24, %p25
    %p27 = scmp.ne.s32.totalorder %s19, %s22
    %p28 = scmp.eq.s32.totalorder %s9, 0
    %p29 = por %p27, %p28
    %p30 = scmp.ne.s32.totalorder %s19, %s22
    %p31 = scmp.eq.s32.totalorder %s14, 1
    %p32 = por %p30, %p31
    %p33 = scmp.ne.s32.totalorder %s22, %s23
    %p34 = scmp.eq.s32.totalorder %s14, 0
    %p35 = por %p33, %p34
    %p36 = scmp.ne.s32.totalorder %s22, %s23
    %p37 = scmp.eq.s32.totalorder %s15, 1
    %p38 = por %p36, %p37
    %p40 = scmp.ne.s32.totalorder %s23, %s39
    %p41 = scmp.eq.s32.totalorder %s15, 0
    %p42 = por %p40, %p41
    %s44 = sadd.s32 %s43, 1
    %p47 = scmp.eq.s32.totalorder %s9, 1
    %p48 = scmp.ne.s32.totalorder %s43, %s45
    %p49 = scmp.eq.s32.totalorder %s9, 0
    %p50 = por %p48, %p49
    %p51 = scmp.ne.s32.totalorder %s43, %s45
    %p52 = scmp.eq.s32.totalorder %s14, 1
    %p53 = por %p51, %p52
    %p54 = scmp.ne.s32.totalorder %s45, %s46
    %p55 = scmp.eq.s32.totalorder %s14, 0
    %p56 = por %p54, %p55
    %p57 = scmp.ne.s32.totalorder %s45, %s46
    %p58 = scmp.eq.s32.totalorder %s15, 1
    %p59 = por %p57, %p58
    %p61 = scmp.ne.s32.totalorder %s46, %s60
    %p62 = scmp.eq.s32.totalorder %s15, 0
    %p63 = por %p61, %p62
    %s65 = sadd.s32 %s64, 1
    %p68 = scmp.eq.s32.totalorder %s9, 1
    %p69 = scmp.ne.s32.totalorder %s64, %s66
    %p70 = scmp.eq.s32.totalorder %s9, 0
    %p71 = por %p69, %p70
    %p72 = scmp.ne.s32.totalorder %s64, %s66
    %p73 = scmp.eq.s32.totalorder %s14, 1
    %p74 = por %p72, %p73
    %p75 = scmp.ne.s32.totalorder %s66, %s67
    %p76 = scmp.eq.s32.totalorder %s14, 0
    %p77 = por %p75, %p76
    %p78 = scmp.ne.s32.totalorder %s66, %s67
    %p79 = scmp.eq.s32.totalorder %s15, 1
    %p80 = por %p78, %p79
    %p82 = scmp.ne.s32.totalorder %s67, %s81
    %p83 = scmp.eq.s32.totalorder %s15, 0
    %p84 = por %p82, %p83
    %s85 = ssub.s32 %s9, %s16
    %p86 = scmp.eq.s32.totalorder %s85, 0
    %s88 = sadd.s32 %s87, 1
    %s89 = scalar_select %p86, %s87, %s88
    %p92 = pneg %p86
    %p93 = scmp.eq.s32.totalorder %s9, 1
    %p94 = por %p92, %p93
    %p95 = scmp.ne.s32.totalorder %s87, %s90
    %p96 = scmp.eq.s32.totalorder %s9, 0
    %p97 = por %p95, %p96
    %p98 = scmp.ne.s32.totalorder %s87, %s90
    %p99 = scmp.eq.s32.totalorder %s14, 1
    %p100 = por %p98, %p99
    %p101 = scmp.ne.s32.totalorder %s90, %s91
    %p102 = scmp.eq.s32.totalorder %s14, 0
    %p103 = por %p101, %p102
    %p104 = scmp.ne.s32.totalorder %s90, %s91
    %p105 = scmp.eq.s32.totalorder %s15, 1
    %p106 = por %p104, %p105
    %p108 = scmp.ne.s32.totalorder %s91, %s107
    %p109 = scmp.eq.s32.totalorder %s15, 0
    %p110 = por %p108, %p109
    %p111 = scmp.le.s32.totalorder 1, %s9
    %p112 = scmp.lt.s32.totalorder %s9, 3
    %p113 = pnand %p111, %p112
    %p114 = pneg %p113
    // Predicated region
    $region9: #{encoder_layer_forward.3} parent=5 // pred_check
      _
    $region10: #{encoder_layer_forward.3} parent=5 // pred_check_branch
      %116 = sbr.rel (%p113) target = $region12
    $region11: #{encoder_layer_forward.3} parent=5 // pred_region
      %s117 = ssub.s32 %s9, 1
      // Predicated region
      $region13: #{encoder_layer_forward.3} parent=11 // pred_check
        %p118 = pneg %p56
      $region14: #{encoder_layer_forward.3} parent=11 // pred_check_branch
        %120 = sbr.rel (%p118) target = $region16
      $region15: #{encoder_layer_forward.3} parent=11 // pred_region
        _
      $region16: #{encoder_layer_forward.3} parent=11 // pred_fallthru
        _
      // Predicated region
      $region17: #{encoder_layer_forward.3} parent=11 // pred_check
        %p121 = pneg %p77
      $region18: #{encoder_layer_forward.3} parent=11 // pred_check_branch
        %123 = sbr.rel (%p121) target = $region20
      $region19: #{encoder_layer_forward.3} parent=11 // pred_region
        _
      $region20: #{encoder_layer_forward.3} parent=11 // pred_fallthru
        _
    $region12: #{encoder_layer_forward.3} parent=5 // pred_fallthru
      _
    %p124 = scmp.lt.s32.totalorder %s9, 2
    // Predicated region
    $region21: #{encoder_layer_forward.3} parent=5 // pred_check
      %p125 = pneg %p124
    $region22: #{encoder_layer_forward.3} parent=5 // pred_check_branch
      %127 = sbr.rel (%p125) target = $region24
    $region23: #{encoder_layer_forward.3} parent=5 // pred_region
      // Predicated region
      $region25: #{encoder_layer_forward.3} parent=23 // pred_check
        %p128 = pneg %p29
      $region26: #{encoder_layer_forward.3} parent=23 // pred_check_branch
        %130 = sbr.rel (%p128) target = $region28
      $region27: #{encoder_layer_forward.3} parent=23 // pred_region
        %p131 = scmp.lt.s32.totalorder %s9, 1
        %s132 = scalar_select %p131, %s9, 1
        %s133 = smul.addr %s132, 8
        %s134 = smul.addr %s133, 4
        %s135 = scalar_lea.vmem %s0, %s134
      $region28: #{encoder_layer_forward.3} parent=23 // pred_fallthru
        _
    $region24: #{encoder_layer_forward.3} parent=5 // pred_fallthru
      _
    %p136 = scmp.le.s32.totalorder 1, %s9
    %p137 = scmp.lt.s32.totalorder %s9, 3
    %p138 = pnand %p136, %p137
    %p139 = pneg %p138
    // Predicated region
    $region29: #{encoder_layer_forward.3} parent=5 // pred_check
      _
    $region30: #{encoder_layer_forward.3} parent=5 // pred_check_branch
      %141 = sbr.rel (%p138) target = $region32
    $region31: #{encoder_layer_forward.3} parent=5 // pred_region
      %s142 = ssub.s32 %s9, 1
      %p143 = scmp.lt.s32.totalorder %s14, 1
      %s144 = scalar_select %p143, %s14, 1
      %s145 = smul.addr %s144, 8
      %s146 = smul.addr %s145, 4
      %s147 = scalar_lea.vmem %s0, %s146
      %p148 = pneg %p35
      %p149 = pneg %p32
      %p150 = pneg %p56
      %p151 = pneg %p53
      %p152 = pneg %p77
      %p153 = pneg %p74
      %p154 = pneg %p103
      %p155 = pneg %p100
      %p156 = scmp.lt.s32.totalorder %s14, 1
      %s157 = scalar_select %p156, %s14, 1
      %s158 = smul.addr %s157, 8
      %s159 = scalar_lea.vmem %s3, %s158
      %p160 = scmp.lt.s32.totalorder %s14, 1
      %s161 = scalar_select %p160, %s14, 1
      %s162 = smul.addr %s161, 8
      %s163 = smul.addr %s162, 4
      %s164 = scalar_lea.vmem %s0, %s163
      %p165 = scmp.lt.s32.totalorder %s14, 1
      %s166 = scalar_select %p165, %s14, 1
      %s167 = smul.addr %s166, 8
      %s168 = scalar_lea.vmem %s3, %s167
      %v169 = vld [vmem:[%s164] sm:$0xf]
      %v170 = vld [vmem:[%s164 + $0x4] sm:$0xf]
      %v171 = vld [vmem:[%s164 + $0x8] sm:$0xf]
      %v172 = vld [vmem:[%s164 + $0xc] sm:$0xf]
      %v173 = vld [vmem:[%s164 + $0x10] sm:$0xf]
      %v174 = vld [vmem:[%s164 + $0x14] sm:$0xf]
      %v175 = vld [vmem:[%s164 + $0x18] sm:$0xf]
      %v176 = vld [vmem:[%s164 + $0x1c] sm:$0xf]
      %v177 = vunpack.c.l.bf16 %v169
      %v178 = vunpack.c.l.bf16 %v170
      %v179 = vunpack.c.l.bf16 %v171
      %v180 = vunpack.c.l.bf16 %v172
      %v181 = vunpack.c.l.bf16 %v173
      %v182 = vunpack.c.l.bf16 %v174
      %v183 = vunpack.c.l.bf16 %v175
      %v184 = vunpack.c.l.bf16 %v176
      %v185 = vld [vmem:[%s1] sm:$0x1]
      %v187 = vperm.slane %v185, 0
      %v189 = vmul.f32 %v177, %v187
      %v190 = vmul.f32 %v178, %v187
      %v191 = vmul.f32 %v179, %v187
      %v192 = vmul.f32 %v180, %v187
      %v193 = vmul.f32 %v181, %v187
      %v194 = vmul.f32 %v182, %v187
      %v195 = vmul.f32 %v183, %v187
      %v196 = vmul.f32 %v184, %v187
      %v197 = vld [vmem:[%s2] sm:$0x1]
      %v199 = vperm.slane %v197, 0
      %v201 = vadd.f32 %v189, %v199
      %v202 = vadd.f32 %v190, %v199
      %v203 = vadd.f32 %v191, %v199
      %v204 = vadd.f32 %v192, %v199
      %v205 = vadd.f32 %v193, %v199
      %v206 = vadd.f32 %v194, %v199
      %v207 = vadd.f32 %v195, %v199
      %v208 = vadd.f32 %v196, %v199
      %vm209 = vcmp.ge.f32.partialorder %v201, 0.0
      %vm210 = vcmp.ge.f32.partialorder %v202, 0.0
      %vm211 = vcmp.ge.f32.partialorder %v203, 0.0
      %vm212 = vcmp.ge.f32.partialorder %v204, 0.0
      %vm213 = vcmp.ge.f32.partialorder %v205, 0.0
      %vm214 = vcmp.ge.f32.partialorder %v206, 0.0
      %vm215 = vcmp.ge.f32.partialorder %v207, 0.0
      %vm216 = vcmp.ge.f32.partialorder %v208, 0.0
      %v217 = vmul.f32 %v201, 0.2
      %v218 = vmul.f32 %v202, 0.2
      %v219 = vmul.f32 %v203, 0.2
      %v220 = vmul.f32 %v204, 0.2
      %v221 = vmul.f32 %v205, 0.2
      %v222 = vmul.f32 %v206, 0.2
      %v223 = vmul.f32 %v207, 0.2
      %v224 = vmul.f32 %v208, 0.2
      %v225 = vsel %vm209, %v201, %v217
      %v226 = vsel %vm210, %v202, %v218
      %v227 = vsel %vm211, %v203, %v219
      %v228 = vsel %vm212, %v204, %v220
      %v229 = vsel %vm213, %v205, %v221
      %v230 = vsel %vm214, %v206, %v222
      %v231 = vsel %vm215, %v207, %v223
      %v232 = vsel %vm216, %v208, %v224
      %233 = vxpose.xlu0.b32.start [1/16] %v225, 128
      %234 = vxpose.xlu0.b32.cont [2/16] %v226, 128
      %235 = vxpose.xlu0.b32.cont [3/16] %v227, 128
      %236 = vxpose.xlu0.b32.cont [4/16] %v228, 128
      %237 = vxpose.xlu0.b32.cont [5/16] %v229, 128
      %238 = vxpose.xlu0.b32.cont [6/16] %v230, 128
      %239 = vxpose.xlu0.b32.cont [7/16] %v231, 128
      %240 = vxpose.xlu0.b32.cont [8/16] %v232, 128
      %241 = vxpose.xlu0.b32.cont [9/16] 0.0, 128
      %242 = vxpose.xlu0.b32.cont [10/16] 0.0, 128
      %243 = vxpose.xlu0.b32.cont [11/16] 0.0, 128
      %244 = vxpose.xlu0.b32.cont [12/16] 0.0, 128
      %245 = vxpose.xlu0.b32.cont [13/16] 0.0, 128
      %246 = vxpose.xlu0.b32.cont [14/16] 0.0, 128
      %247 = vxpose.xlu0.b32.cont [15/16] 0.0, 128
      %248 = vxpose.xlu0.b32.end [16/16] 0.0, 128
      %v249 = vpop.trf.xlu0
      %v250 = vpop.trf.xlu0
      %v251 = vpop.trf.xlu0
      %v252 = vpop.trf.xlu0
      %v253 = vpop.trf.xlu0
      %v254 = vpop.trf.xlu0
      %v255 = vpop.trf.xlu0
      %v256 = vpop.trf.xlu0
      %v257 = vpop.trf.xlu0
      %v258 = vpop.trf.xlu0
      %v259 = vpop.trf.xlu0
      %v260 = vpop.trf.xlu0
      %v261 = vpop.trf.xlu0
      %v262 = vpop.trf.xlu0
      %v263 = vpop.trf.xlu0
      %v264 = vpop.trf.xlu0
      %vm265 = vcmask 523264
      %266 = vst.msk [vmem:[%s168] sm:$0xff] %vm265, %v249
      %p267 = scmp.lt.s32.totalorder %s14, 1
      %s268 = scalar_select %p267, %s14, 1
      %s269 = smul.addr %s268, 8
      %s270 = scalar_lea.vmem %s3, %s269
      // Predicated region
      $region33: #{encoder_layer_forward.3} parent=31 // pred_check
        %p271 = pneg %p100
      $region34: #{encoder_layer_forward.3} parent=31 // pred_check_branch
        %273 = sbr.rel (%p271) target = $region36
      $region35: #{encoder_layer_forward.3} parent=31 // pred_region
        _
      $region36: #{encoder_layer_forward.3} parent=31 // pred_fallthru
        _
    $region32: #{encoder_layer_forward.3} parent=5 // pred_fallthru
      _
    %p274 = scmp.le.s32.totalorder 2, %s9
    // Predicated region
    $region37: #{encoder_layer_forward.3} parent=5 // pred_check
      %p275 = pneg %p274
    $region38: #{encoder_layer_forward.3} parent=5 // pred_check_branch
      %277 = sbr.rel (%p275) target = $region40
    $region39: #{encoder_layer_forward.3} parent=5 // pred_region
      %s278 = ssub.s32 %s9, 2
      // Predicated region
      $region41: #{encoder_layer_forward.3} parent=39 // pred_check
        %p279 = pneg %p106
      $region42: #{encoder_layer_forward.3} parent=39 // pred_check_branch
        %281 = sbr.rel (%p279) target = $region44
      $region43: #{encoder_layer_forward.3} parent=39 // pred_region
        %p282 = scmp.lt.s32.totalorder %s15, 1
        %s283 = scalar_select %p282, %s15, 1
        %s284 = smul.addr %s283, 8
        %s285 = scalar_lea.vmem %s3, %s284
      $region44: #{encoder_layer_forward.3} parent=39 // pred_fallthru
        _
    $region40: #{encoder_layer_forward.3} parent=5 // pred_fallthru
      _
  $region6: #{encoder_layer_forward.3} parent=0 // loop_footer
    %s13 = sadd.s32 1, %s9
  $region7: #{encoder_layer_forward.3} parent=0 // loop_footer_branch
    %8 = sbr.rel target = $region3
  $region8: #{encoder_layer_forward.3} parent=0 // loop_exit
    _

// kernel: encoder_layer_forward.2
$region0: #{encoder_layer_forward.2}
  #allocation0 [shape = 'u32[]', space=smem, size = 0x4, offset = 0x4, fixed_abs, tag = 'smem constant byte address 0x4 - core index']
  #allocation1 [shape = 'u32[72,128]{1,0:T(1,128)}', space=vmem, size = 0x9000, scoped, tag = 'internal scratch']
  %s0 = inlined_call_operand.vmem [shape: bf16[2,40,10,4], index: 0, kind: input, shape index: {}]
  %s1 = inlined_call_operand.vmem [shape: bf16[25,4,128], index: 1, kind: input, shape index: {}]
  %s2 = inlined_call_operand.vmem [shape: bf16[2,64,128], index: 2, kind: output, shape index: {0}]
  %s3 = inlined_call_operand.vmem [shape: f32[2,2,128], index: 3, kind: output, shape index: {1}]
  %4 = xla_tuple %s2, %s3
  %s5 = sld [smem:[#allocation0]]
  $region49: #{encoder_layer_forward.2} parent=0
    _
  %s7 = ssub.s32 1, %s5
  %s8 = scalar_select 0, %s7, %s5
  loop: start=0, step=1, limit=4
  $region2: #{encoder_layer_forward.2} parent=0 // loop_pre_header
    _
  $region3: #{encoder_layer_forward.2} parent=0 // loop_header
    %s10 = sphi 0, %s14
    %p11 = scmp.ge.s32.totalorder %s10, 4
    %s20 = sphi 0, %s22
    %s23 = sphi 0, %s20
    %s24 = sphi 0, %s23
    %s40 = sphi 0, %s24
    %s44 = sphi 0, %s44
    %s46 = sphi 0, %s44
    %s47 = sphi 0, %s46
    %s61 = sphi 0, %s47
    %s67 = sphi 0, %s69
    %s70 = sphi 0, %s67
    %s71 = sphi 0, %s70
    %s87 = sphi 0, %s71
    %s93 = sphi 0, %s95
    %s96 = sphi 0, %s93
    %s97 = sphi 0, %s96
    %s113 = sphi 0, %s97
  $region4: #{encoder_layer_forward.2} parent=0 // loop_header_branch
    %13 = sbr.rel (%p11) target = $region8
  $region5: #{encoder_layer_forward.2} parent=0 // loop_body
    %s15 = ssub.s32 %s10, 1
    %s16 = ssub.s32 %s10, 2
    %s17 = sadd.s32 %s10, 1
    %s18 = ssub.s32 %s10, %s17
    %p19 = scmp.eq.s32.totalorder %s18, 0
    %s21 = sadd.s32 %s20, 1
    %s22 = scalar_select %p19, %s20, %s21
    %p25 = pneg %p19
    %p26 = scmp.eq.s32.totalorder %s10, 1
    %p27 = por %p25, %p26
    %p28 = scmp.ne.s32.totalorder %s20, %s23
    %p29 = scmp.eq.s32.totalorder %s10, 0
    %p30 = por %p28, %p29
    %p31 = scmp.ne.s32.totalorder %s20, %s23
    %p32 = scmp.eq.s32.totalorder %s15, 1
    %p33 = por %p31, %p32
    %p34 = scmp.ne.s32.totalorder %s23, %s24
    %p35 = scmp.eq.s32.totalorder %s15, 0
    %p36 = por %p34, %p35
    %p37 = scmp.ne.s32.totalorder %s23, %s24
    %p38 = scmp.eq.s32.totalorder %s16, 1
    %p39 = por %p37, %p38
    %p41 = scmp.ne.s32.totalorder %s24, %s40
    %p42 = scmp.eq.s32.totalorder %s16, 0
    %p43 = por %p41, %p42
    %s45 = sadd.s32 %s44, 1
    %p48 = scmp.eq.s32.totalorder %s10, 1
    %p49 = scmp.ne.s32.totalorder %s44, %s46
    %p50 = scmp.eq.s32.totalorder %s10, 0
    %p51 = por %p49, %p50
    %p52 = scmp.ne.s32.totalorder %s44, %s46
    %p53 = scmp.eq.s32.totalorder %s15, 1
    %p54 = por %p52, %p53
    %p55 = scmp.ne.s32.totalorder %s46, %s47
    %p56 = scmp.eq.s32.totalorder %s15, 0
    %p57 = por %p55, %p56
    %p58 = scmp.ne.s32.totalorder %s46, %s47
    %p59 = scmp.eq.s32.totalorder %s16, 1
    %p60 = por %p58, %p59
    %p62 = scmp.ne.s32.totalorder %s47, %s61
    %p63 = scmp.eq.s32.totalorder %s16, 0
    %p64 = por %p62, %p63
    %s65 = ssub.s32 %s10, %s17
    %p66 = scmp.eq.s32.totalorder %s65, 0
    %s68 = sadd.s32 %s67, 1
    %s69 = scalar_select %p66, %s67, %s68
    %p72 = pneg %p66
    %p73 = scmp.eq.s32.totalorder %s10, 1
    %p74 = por %p72, %p73
    %p75 = scmp.ne.s32.totalorder %s67, %s70
    %p76 = scmp.eq.s32.totalorder %s10, 0
    %p77 = por %p75, %p76
    %p78 = scmp.ne.s32.totalorder %s67, %s70
    %p79 = scmp.eq.s32.totalorder %s15, 1
    %p80 = por %p78, %p79
    %p81 = scmp.ne.s32.totalorder %s70, %s71
    %p82 = scmp.eq.s32.totalorder %s15, 0
    %p83 = por %p81, %p82
    %p84 = scmp.ne.s32.totalorder %s70, %s71
    %p85 = scmp.eq.s32.totalorder %s16, 1
    %p86 = por %p84, %p85
    %p88 = scmp.ne.s32.totalorder %s71, %s87
    %p89 = scmp.eq.s32.totalorder %s16, 0
    %p90 = por %p88, %p89
    %s91 = ssub.s32 %s10, %s17
    %p92 = scmp.eq.s32.totalorder %s91, 0
    %s94 = sadd.s32 %s93, 1
    %s95 = scalar_select %p92, %s93, %s94
    %p98 = pneg %p92
    %p99 = scmp.eq.s32.totalorder %s10, 1
    %p100 = por %p98, %p99
    %p101 = scmp.ne.s32.totalorder %s93, %s96
    %p102 = scmp.eq.s32.totalorder %s10, 0
    %p103 = por %p101, %p102
    %p104 = scmp.ne.s32.totalorder %s93, %s96
    %p105 = scmp.eq.s32.totalorder %s15, 1
    %p106 = por %p104, %p105
    %p107 = scmp.ne.s32.totalorder %s96, %s97
    %p108 = scmp.eq.s32.totalorder %s15, 0
    %p109 = por %p107, %p108
    %p110 = scmp.ne.s32.totalorder %s96, %s97
    %p111 = scmp.eq.s32.totalorder %s16, 1
    %p112 = por %p110, %p111
    %p114 = scmp.ne.s32.totalorder %s97, %s113
    %p115 = scmp.eq.s32.totalorder %s16, 0
    %p116 = por %p114, %p115
    %p117 = scmp.le.s32.totalorder 1, %s10
    %p118 = scmp.lt.s32.totalorder %s10, 3
    %p119 = pnand %p117, %p118
    %p120 = pneg %p119
    // Predicated region
    $region9: #{encoder_layer_forward.2} parent=5 // pred_check
      _
    $region10: #{encoder_layer_forward.2} parent=5 // pred_check_branch
      %122 = sbr.rel (%p119) target = $region12
    $region11: #{encoder_layer_forward.2} parent=5 // pred_region
      %s123 = ssub.s32 %s10, 1
      // Predicated region
      $region13: #{encoder_layer_forward.2} parent=11 // pred_check
        %p124 = pneg %p57
      $region14: #{encoder_layer_forward.2} parent=11 // pred_check_branch
        %126 = sbr.rel (%p124) target = $region16
      $region15: #{encoder_layer_forward.2} parent=11 // pred_region
        _
      $region16: #{encoder_layer_forward.2} parent=11 // pred_fallthru
        _
    $region12: #{encoder_layer_forward.2} parent=5 // pred_fallthru
      _
    %p127 = scmp.lt.s32.totalorder %s10, 2
    // Predicated region
    $region17: #{encoder_layer_forward.2} parent=5 // pred_check
      %p128 = pneg %p127
    $region18: #{encoder_layer_forward.2} parent=5 // pred_check_branch
      %130 = sbr.rel (%p128) target = $region20
    $region19: #{encoder_layer_forward.2} parent=5 // pred_region
      // Predicated region
      $region21: #{encoder_layer_forward.2} parent=19 // pred_check
        %p131 = pneg %p30
      $region22: #{encoder_layer_forward.2} parent=19 // pred_check_branch
        %133 = sbr.rel (%p131) target = $region24
      $region23: #{encoder_layer_forward.2} parent=19 // pred_region
        %p134 = scmp.lt.s32.totalorder %s10, 1
        %s135 = scalar_select %p134, %s10, 1
        %s136 = smul.addr %s135, 80
        %s137 = smul.addr %s136, 4
        %s138 = scalar_lea.vmem %s0, %s137
      $region24: #{encoder_layer_forward.2} parent=19 // pred_fallthru
        _
    $region20: #{encoder_layer_forward.2} parent=5 // pred_fallthru
      _
    %p139 = scmp.le.s32.totalorder 1, %s10
    %p140 = scmp.lt.s32.totalorder %s10, 3
    %p141 = pnand %p139, %p140
    %p142 = pneg %p141
    // Predicated region
    $region25: #{encoder_layer_forward.2} parent=5 // pred_check
      _
    $region26: #{encoder_layer_forward.2} parent=5 // pred_check_branch
      %144 = sbr.rel (%p141) target = $region28
    $region27: #{encoder_layer_forward.2} parent=5 // pred_region
      %s145 = ssub.s32 %s10, 1
      %p146 = scmp.lt.s32.totalorder %s15, 1
      %s147 = scalar_select %p146, %s15, 1
      %s148 = smul.addr %s147, 80
      %s149 = smul.addr %s148, 4
      %s150 = scalar_lea.vmem %s0, %s149
      %p151 = pneg %p36
      %p152 = pneg %p33
      %p153 = pneg %p57
      %p154 = pneg %p54
      %p155 = pneg %p83
      %p156 = pneg %p80
      %p157 = scmp.lt.s32.totalorder %s15, 1
      %s158 = scalar_select %p157, %s15, 1
      %s159 = smul.addr %s158, 8
      %s160 = smul.addr %s159, 4
      %s161 = scalar_lea.vmem %s2, %s160
      %p162 = pneg %p109
      %p163 = pneg %p106
      %p164 = scmp.lt.s32.totalorder %s15, 1
      %s165 = scalar_select %p164, %s15, 1
      %s166 = smul.addr %s165, 2
      %s167 = scalar_lea.vmem %s3, %s166
      %p168 = scmp.lt.s32.totalorder %s15, 1
      %s169 = scalar_select %p168, %s15, 1
      %s170 = smul.addr %s169, 80
      %s171 = smul.addr %s170, 4
      %s172 = scalar_lea.vmem %s0, %s171
      %p173 = scmp.lt.s32.totalorder %s15, 1
      %s174 = scalar_select %p173, %s15, 1
      %s175 = smul.addr %s174, 8
      %s176 = smul.addr %s175, 4
      %s177 = scalar_lea.vmem %s2, %s176
      %p178 = scmp.lt.s32.totalorder %s15, 1
      %s179 = scalar_select %p178, %s15, 1
      %s180 = smul.addr %s179, 2
      %s181 = scalar_lea.vmem %s3, %s180
      %v183 = vld [vmem:[%s172] sm:$0xf]
      %v184 = vld [vmem:[%s172 + $0x8] sm:$0xf]
      %v185 = vld [vmem:[%s172 + $0x10] sm:$0xf]
      %v186 = vld [vmem:[%s172 + $0x18] sm:$0xf]
      %v187 = vld [vmem:[%s172 + $0x20] sm:$0xf]
      %v188 = vld [vmem:[%s172 + $0x28] sm:$0xf]
      %v189 = vld [vmem:[%s172 + $0x30] sm:$0xf]
      %v190 = vld [vmem:[%s172 + $0x38] sm:$0xf]
      %v191 = vunpack.c.l.bf16 %v183
      %v192 = vunpack.c.l.bf16 %v184
      %v193 = vunpack.c.l.bf16 %v185
      %v194 = vunpack.c.l.bf16 %v186
      %v195 = vunpack.c.l.bf16 %v187
      %v196 = vunpack.c.l.bf16 %v188
      %v197 = vunpack.c.l.bf16 %v189
      %v198 = vunpack.c.l.bf16 %v190
      %v199 = vpack.c.bf16 %v192, %v191
      %v200 = vpack.c.bf16 %v194, %v193
      %v201 = vpack.c.bf16 %v196, %v195
      %v202 = vpack.c.bf16 %v198, %v197
      %v203 = vld [vmem:[%s1] sm:$0x3]
      %s204 = scalar_lea.vmem %s172, 80
      %v205 = vld [vmem:[%s204] sm:$0xf]
      %v206 = vld [vmem:[%s204 + $0x8] sm:$0xf]
      %v207 = vld [vmem:[%s204 + $0x10] sm:$0xf]
      %v208 = vld [vmem:[%s204 + $0x18] sm:$0xf]
      %v209 = vld [vmem:[%s204 + $0x20] sm:$0xf]
      %v210 = vld [vmem:[%s204 + $0x28] sm:$0xf]
      %v211 = vld [vmem:[%s204 + $0x30] sm:$0xf]
      %v212 = vld [vmem:[%s204 + $0x38] sm:$0xf]
      %v213 = vunpack.c.l.bf16 %v205
      %v214 = vunpack.c.l.bf16 %v206
      %v215 = vunpack.c.l.bf16 %v207
      %v216 = vunpack.c.l.bf16 %v208
      %v217 = vunpack.c.l.bf16 %v209
      %v218 = vunpack.c.l.bf16 %v210
      %v219 = vunpack.c.l.bf16 %v211
      %v220 = vunpack.c.l.bf16 %v212
      %v221 = vpack.c.bf16 %v214, %v213
      %v222 = vpack.c.bf16 %v216, %v215
      %v223 = vpack.c.bf16 %v218, %v217
      %v224 = vpack.c.bf16 %v220, %v219
      %s225 = scalar_lea.vmem %s1, 2
      %v226 = vld [vmem:[%s225] sm:$0x3]
      %vm227 = vcmask 31744
      %v229 = vsel %vm227, %v221, 0
      %v232 = vsel %vm227, %v222, 0
      %v235 = vsel %vm227, %v223, 0
      %v238 = vsel %vm227, %v224, 0
      %vm240 = vcmask 1041408
      %v242 = vsel %vm240, %v226, 0
      %244 = vmatpush.bf16.msra.mxu0 0
      %245 = vmatpush.bf16.msra.mxu0 0
      %246 = vmatpush.bf16.msra.mxu0 0
      %247 = vmatpush.bf16.msra.mxu0 0
      %248 = vmatpush.bf16.msra.mxu0 0
      %249 = vmatpush.bf16.msra.mxu0 0
      %250 = vmatpush.bf16.msra.mxu0 0
      %251 = vmatpush.bf16.msra.mxu0 %v242
      %252 = vmatmul.bf16.gmra.mxu0 %v229
      %v253 = vpop.f32.mrf.mxu0
      %v254 = vadd.f32 0.0, %v253
      %v255 = vpop.f32.mrf.mxu0
      %v256 = vadd.f32 0.0, %v255
      %257 = vmatmul.bf16.gmra.mxu0 %v232
      %v258 = vpop.f32.mrf.mxu0
      %v259 = vadd.f32 0.0, %v258
      %v260 = vpop.f32.mrf.mxu0
      %v261 = vadd.f32 0.0, %v260
      %262 = vmatmul.bf16.gmra.mxu0 %v235
      %v263 = vpop.f32.mrf.mxu0
      %v264 = vadd.f32 0.0, %v263
      %v265 = vpop.f32.mrf.mxu0
      %v266 = vadd.f32 0.0, %v265
      %267 = vmatmul.bf16.gmra.mxu0 %v238
      %v268 = vpop.f32.mrf.mxu0
      %v269 = vadd.f32 0.0, %v268
      %v270 = vpop.f32.mrf.mxu0
      %v271 = vadd.f32 0.0, %v270
      %272 = vdwg.mxu0
      %v274 = vsel %vm227, %v199, 0
      %v277 = vsel %vm227, %v200, 0
      %v280 = vsel %vm227, %v201, 0
      %v283 = vsel %vm227, %v202, 0
      %v286 = vsel %vm240, %v203, 0
      %288 = vmatpush.bf16.msra.mxu0 0
      %289 = vmatpush.bf16.msra.mxu0 0
      %290 = vmatpush.bf16.msra.mxu0 0
      %291 = vmatpush.bf16.msra.mxu0 0
      %292 = vmatpush.bf16.msra.mxu0 0
      %293 = vmatpush.bf16.msra.mxu0 0
      %294 = vmatpush.bf16.msra.mxu0 0
      %295 = vmatpush.bf16.msra.mxu0 %v286
      %296 = vmatmul.bf16.gmra.mxu0 %v274
      %v297 = vpop.f32.mrf.mxu0
      %v298 = vadd.f32 %v254, %v297
      %v299 = vpop.f32.mrf.mxu0
      %v300 = vadd.f32 %v256, %v299
      %301 = vmatmul.bf16.gmra.mxu0 %v277
      %v302 = vpop.f32.mrf.mxu0
      %v303 = vadd.f32 %v259, %v302
      %v304 = vpop.f32.mrf.mxu0
      %v305 = vadd.f32 %v261, %v304
      %306 = vmatmul.bf16.gmra.mxu0 %v280
      %v307 = vpop.f32.mrf.mxu0
      %v308 = vadd.f32 %v264, %v307
      %v309 = vpop.f32.mrf.mxu0
      %v310 = vadd.f32 %v266, %v309
      %311 = vmatmul.bf16.gmra.mxu0 %v283
      %v312 = vpop.f32.mrf.mxu0
      %v313 = vadd.f32 %v269, %v312
      %v314 = vpop.f32.mrf.mxu0
      %v315 = vadd.f32 %v271, %v314
      %316 = vdwg.mxu0
      %v317 = vld [vmem:[%s172] sm:$0xf]
      %v318 = vld [vmem:[%s172 + $0x4] sm:$0x1]
      %v319 = vld [vmem:[%s172 + $0x8] sm:$0xf]
      %v320 = vld [vmem:[%s172 + $0xc] sm:$0x1]
      %v321 = vld [vmem:[%s172 + $0x10] sm:$0xf]
      %v322 = vld [vmem:[%s172 + $0x14] sm:$0x1]
      %v323 = vld [vmem:[%s172 + $0x18] sm:$0xf]
      %v324 = vld [vmem:[%s172 + $0x1c] sm:$0x1]
      %v325 = vld [vmem:[%s172 + $0x20] sm:$0xf]
      %v326 = vld [vmem:[%s172 + $0x24] sm:$0x1]
      %v327 = vld [vmem:[%s172 + $0x28] sm:$0xf]
      %v328 = vld [vmem:[%s172 + $0x2c] sm:$0x1]
      %v329 = vld [vmem:[%s172 + $0x30] sm:$0xf]
      %v330 = vld [vmem:[%s172 + $0x34] sm:$0x1]
      %v331 = vld [vmem:[%s172 + $0x38] sm:$0xf]
      %v332 = vld [vmem:[%s172 + $0x3c] sm:$0x1]
      %v333 = vunpack.c.l.bf16 %v317
      %v334 = vunpack.c.l.bf16 %v318
      %v335 = vunpack.c.l.bf16 %v319
      %v336 = vunpack.c.l.bf16 %v320
      %v337 = vunpack.c.l.bf16 %v321
      %v338 = vunpack.c.l.bf16 %v322
      %v339 = vunpack.c.l.bf16 %v323
      %v340 = vunpack.c.l.bf16 %v324
      %v341 = vunpack.c.l.bf16 %v325
      %v342 = vunpack.c.l.bf16 %v326
      %v343 = vunpack.c.l.bf16 %v327
      %v344 = vunpack.c.l.bf16 %v328
      %v345 = vunpack.c.l.bf16 %v329
      %v346 = vunpack.c.l.bf16 %v330
      %v347 = vunpack.c.l.bf16 %v331
      %v348 = vunpack.c.l.bf16 %v332
      %vm365 = vcmask 1046528
      %v366 = vrot.slane %v333, 1
      %v367 = vrot.slane %v334, 1
      %v368 = vsel %vm365, %v366, %v367
      %v369 = vrot.slane %v335, 1
      %v370 = vrot.slane %v336, 1
      %v371 = vsel %vm365, %v369, %v370
      %v372 = vrot.slane %v337, 1
      %v373 = vrot.slane %v338, 1
      %v374 = vsel %vm365, %v372, %v373
      %v375 = vrot.slane %v339, 1
      %v376 = vrot.slane %v340, 1
      %v377 = vsel %vm365, %v375, %v376
      %v378 = vrot.slane %v341, 1
      %v379 = vrot.slane %v342, 1
      %v380 = vsel %vm365, %v378, %v379
      %v381 = vrot.slane %v343, 1
      %v382 = vrot.slane %v344, 1
      %v383 = vsel %vm365, %v381, %v382
      %v384 = vrot.slane %v345, 1
      %v385 = vrot.slane %v346, 1
      %v386 = vsel %vm365, %v384, %v385
      %v387 = vrot.slane %v347, 1
      %v388 = vrot.slane %v348, 1
      %v389 = vsel %vm365, %v387, %v388
      %v398 = vpack.c.bf16 %v371, %v368
      %v399 = vpack.c.bf16 %v377, %v374
      %v400 = vpack.c.bf16 %v383, %v380
      %v401 = vpack.c.bf16 %v389, %v386
      %s402 = scalar_lea.vmem %s1, 4
      %v403 = vld [vmem:[%s402] sm:$0x3]
      %v405 = vsel %vm227, %v398, 0
      %v408 = vsel %vm227, %v399, 0
      %v411 = vsel %vm227, %v400, 0
      %v414 = vsel %vm227, %v401, 0
      %v417 = vsel %vm240, %v403, 0
      %419 = vmatpush.bf16.msra.mxu0 0
      %420 = vmatpush.bf16.msra.mxu0 0
      %421 = vmatpush.bf16.msra.mxu0 0
      %422 = vmatpush.bf16.msra.mxu0 0
      %423 = vmatpush.bf16.msra.mxu0 0
      %424 = vmatpush.bf16.msra.mxu0 0
      %425 = vmatpush.bf16.msra.mxu0 0
      %426 = vmatpush.bf16.msra.mxu0 %v417
      %427 = vmatmul.bf16.gmra.mxu0 %v405
      %v428 = vpop.f32.mrf.mxu0
      %v429 = vadd.f32 0.0, %v428
      %v430 = vpop.f32.mrf.mxu0
      %v431 = vadd.f32 0.0, %v430
      %432 = vmatmul.bf16.gmra.mxu0 %v408
      %v433 = vpop.f32.mrf.mxu0
      %v434 = vadd.f32 0.0, %v433
      %v435 = vpop.f32.mrf.mxu0
      %v436 = vadd.f32 0.0, %v435
      %437 = vmatmul.bf16.gmra.mxu0 %v411
      %v438 = vpop.f32.mrf.mxu0
      %v439 = vadd.f32 0.0, %v438
      %v440 = vpop.f32.mrf.mxu0
      %v441 = vadd.f32 0.0, %v440
      %442 = vmatmul.bf16.gmra.mxu0 %v414
      %v443 = vpop.f32.mrf.mxu0
      %v444 = vadd.f32 0.0, %v443
      %v445 = vpop.f32.mrf.mxu0
      %v446 = vadd.f32 0.0, %v445
      %447 = vdwg.mxu0
      %v448 = vadd.f32 %v298, %v429
      %v449 = vadd.f32 %v300, %v431
      %v450 = vadd.f32 %v303, %v434
      %v451 = vadd.f32 %v305, %v436
      %v452 = vadd.f32 %v308, %v439
      %v453 = vadd.f32 %v310, %v441
      %v454 = vadd.f32 %v313, %v444
      %v455 = vadd.f32 %v315, %v446
      %v456 = vld [vmem:[%s204] sm:$0xf]
      %v457 = vld [vmem:[%s204 + $0x4] sm:$0x1]
      %v458 = vld [vmem:[%s204 + $0x8] sm:$0xf]
      %v459 = vld [vmem:[%s204 + $0xc] sm:$0x1]
      %v460 = vld [vmem:[%s204 + $0x10] sm:$0xf]
      %v461 = vld [vmem:[%s204 + $0x14] sm:$0x1]
      %v462 = vld [vmem:[%s204 + $0x18] sm:$0xf]
      %v463 = vld [vmem:[%s204 + $0x1c] sm:$0x1]
      %v464 = vld [vmem:[%s204 + $0x20] sm:$0xf]
      %v465 = vld [vmem:[%s204 + $0x24] sm:$0x1]
      %v466 = vld [vmem:[%s204 + $0x28] sm:$0xf]
      %v467 = vld [vmem:[%s204 + $0x2c] sm:$0x1]
      %v468 = vld [vmem:[%s204 + $0x30] sm:$0xf]
      %v469 = vld [vmem:[%s204 + $0x34] sm:$0x1]
      %v470 = vld [vmem:[%s204 + $0x38] sm:$0xf]
      %v471 = vld [vmem:[%s204 + $0x3c] sm:$0x1]
      %v472 = vunpack.c.l.bf16 %v456
      %v473 = vunpack.c.l.bf16 %v457
      %v474 = vunpack.c.l.bf16 %v458
      %v475 = vunpack.c.l.bf16 %v459
      %v476 = vunpack.c.l.bf16 %v460
      %v477 = vunpack.c.l.bf16 %v461
      %v478 = vunpack.c.l.bf16 %v462
      %v479 = vunpack.c.l.bf16 %v463
      %v480 = vunpack.c.l.bf16 %v464
      %v481 = vunpack.c.l.bf16 %v465
      %v482 = vunpack.c.l.bf16 %v466
      %v483 = vunpack.c.l.bf16 %v467
      %v484 = vunpack.c.l.bf16 %v468
      %v485 = vunpack.c.l.bf16 %v469
      %v486 = vunpack.c.l.bf16 %v470
      %v487 = vunpack.c.l.bf16 %v471
      %v504 = vrot.slane %v472, 1
      %v505 = vrot.slane %v473, 1
      %v506 = vsel %vm365, %v504, %v505
      %v507 = vrot.slane %v474, 1
      %v508 = vrot.slane %v475, 1
      %v509 = vsel %vm365, %v507, %v508
      %v510 = vrot.slane %v476, 1
      %v511 = vrot.slane %v477, 1
      %v512 = vsel %vm365, %v510, %v511
      %v513 = vrot.slane %v478, 1
      %v514 = vrot.slane %v479, 1
      %v515 = vsel %vm365, %v513, %v514
      %v516 = vrot.slane %v480, 1
      %v517 = vrot.slane %v481, 1
      %v518 = vsel %vm365, %v516, %v517
      %v519 = vrot.slane %v482, 1
      %v520 = vrot.slane %v483, 1
      %v521 = vsel %vm365, %v519, %v520
      %v522 = vrot.slane %v484, 1
      %v523 = vrot.slane %v485, 1
      %v524 = vsel %vm365, %v522, %v523
      %v525 = vrot.slane %v486, 1
      %v526 = vrot.slane %v487, 1
      %v527 = vsel %vm365, %v525, %v526
      %v536 = vpack.c.bf16 %v509, %v506
      %v537 = vpack.c.bf16 %v515, %v512
      %v538 = vpack.c.bf16 %v521, %v518
      %v539 = vpack.c.bf16 %v527, %v524
      %s540 = scalar_lea.vmem %s1, 6
      %v541 = vld [vmem:[%s540] sm:$0x3]
      %v543 = vsel %vm227, %v536, 0
      %v546 = vsel %vm227, %v537, 0
      %v549 = vsel %vm227, %v538, 0
      %v552 = vsel %vm227, %v539, 0
      %v555 = vsel %vm240, %v541, 0
      %557 = vmatpush.bf16.msra.mxu0 0
      %558 = vmatpush.bf16.msra.mxu0 0
      %559 = vmatpush.bf16.msra.mxu0 0
      %560 = vmatpush.bf16.msra.mxu0 0
      %561 = vmatpush.bf16.msra.mxu0 0
      %562 = vmatpush.bf16.msra.mxu0 0
      %563 = vmatpush.bf16.msra.mxu0 0
      %564 = vmatpush.bf16.msra.mxu0 %v555
      %565 = vmatmul.bf16.gmra.mxu0 %v543
      %v566 = vpop.f32.mrf.mxu0
      %v567 = vadd.f32 0.0, %v566
      %v568 = vpop.f32.mrf.mxu0
      %v569 = vadd.f32 0.0, %v568
      %570 = vmatmul.bf16.gmra.mxu0 %v546
      %v571 = vpop.f32.mrf.mxu0
      %v572 = vadd.f32 0.0, %v571
      %v573 = vpop.f32.mrf.mxu0
      %v574 = vadd.f32 0.0, %v573
      %575 = vmatmul.bf16.gmra.mxu0 %v549
      %v576 = vpop.f32.mrf.mxu0
      %v577 = vadd.f32 0.0, %v576
      %v578 = vpop.f32.mrf.mxu0
      %v579 = vadd.f32 0.0, %v578
      %580 = vmatmul.bf16.gmra.mxu0 %v552
      %v581 = vpop.f32.mrf.mxu0
      %v582 = vadd.f32 0.0, %v581
      %v583 = vpop.f32.mrf.mxu0
      %v584 = vadd.f32 0.0, %v583
      %585 = vdwg.mxu0
      %v586 = vadd.f32 %v448, %v567
      %v587 = vadd.f32 %v449, %v569
      %v588 = vadd.f32 %v450, %v572
      %v589 = vadd.f32 %v451, %v574
      %v590 = vadd.f32 %v452, %v577
      %v591 = vadd.f32 %v453, %v579
      %v592 = vadd.f32 %v454, %v582
      %v593 = vadd.f32 %v455, %v584
      %v594 = vld [vmem:[%s172] sm:$0xe]
      %v595 = vld [vmem:[%s172 + $0x8] sm:$0xe]
      %v596 = vld [vmem:[%s172 + $0x10] sm:$0xe]
      %v597 = vld [vmem:[%s172 + $0x18] sm:$0xe]
      %v598 = vld [vmem:[%s172 + $0x20] sm:$0xe]
      %v599 = vld [vmem:[%s172 + $0x28] sm:$0xe]
      %v600 = vld [vmem:[%s172 + $0x30] sm:$0xe]
      %v601 = vld [vmem:[%s172 + $0x38] sm:$0xe]
      %v602 = vunpack.c.l.bf16 %v594
      %v603 = vunpack.c.l.bf16 %v595
      %v604 = vunpack.c.l.bf16 %v596
      %v605 = vunpack.c.l.bf16 %v597
      %v606 = vunpack.c.l.bf16 %v598
      %v607 = vunpack.c.l.bf16 %v599
      %v608 = vunpack.c.l.bf16 %v600
      %v609 = vunpack.c.l.bf16 %v601
      %vm618 = vcmask 1045504
      %v619 = vrot.slane %v602, 2
      %v620 = vrot.slane %v334, 2
      %v621 = vsel %vm618, %v619, %v620
      %v622 = vrot.slane %v603, 2
      %v623 = vrot.slane %v336, 2
      %v624 = vsel %vm618, %v622, %v623
      %v625 = vrot.slane %v604, 2
      %v626 = vrot.slane %v338, 2
      %v627 = vsel %vm618, %v625, %v626
      %v628 = vrot.slane %v605, 2
      %v629 = vrot.slane %v340, 2
      %v630 = vsel %vm618, %v628, %v629
      %v631 = vrot.slane %v606, 2
      %v632 = vrot.slane %v342, 2
      %v633 = vsel %vm618, %v631, %v632
      %v634 = vrot.slane %v607, 2
      %v635 = vrot.slane %v344, 2
      %v636 = vsel %vm618, %v634, %v635
      %v637 = vrot.slane %v608, 2
      %v638 = vrot.slane %v346, 2
      %v639 = vsel %vm618, %v637, %v638
      %v640 = vrot.slane %v609, 2
      %v641 = vrot.slane %v348, 2
      %v642 = vsel %vm618, %v640, %v641
      %v651 = vpack.c.bf16 %v624, %v621
      %v652 = vpack.c.bf16 %v630, %v627
      %v653 = vpack.c.bf16 %v636, %v633
      %v654 = vpack.c.bf16 %v642, %v639
      %s655 = scalar_lea.vmem %s1, 8
      %v656 = vld [vmem:[%s655] sm:$0x3]
      %v658 = vsel %vm227, %v651, 0
      %v661 = vsel %vm227, %v652, 0
      %v664 = vsel %vm227, %v653, 0
      %v667 = vsel %vm227, %v654, 0
      %v670 = vsel %vm240, %v656, 0
      %672 = vmatpush.bf16.msra.mxu0 0
      %673 = vmatpush.bf16.msra.mxu0 0
      %674 = vmatpush.bf16.msra.mxu0 0
      %675 = vmatpush.bf16.msra.mxu0 0
      %676 = vmatpush.bf16.msra.mxu0 0
      %677 = vmatpush.bf16.msra.mxu0 0
      %678 = vmatpush.bf16.msra.mxu0 0
      %679 = vmatpush.bf16.msra.mxu0 %v670
      %680 = vmatmul.bf16.gmra.mxu0 %v658
      %v681 = vpop.f32.mrf.mxu0
      %v682 = vadd.f32 0.0, %v681
      %v683 = vpop.f32.mrf.mxu0
      %v684 = vadd.f32 0.0, %v683
      %685 = vmatmul.bf16.gmra.mxu0 %v661
      %v686 = vpop.f32.mrf.mxu0
      %v687 = vadd.f32 0.0, %v686
      %v688 = vpop.f32.mrf.mxu0
      %v689 = vadd.f32 0.0, %v688
      %690 = vmatmul.bf16.gmra.mxu0 %v664
      %v691 = vpop.f32.mrf.mxu0
      %v692 = vadd.f32 0.0, %v691
      %v693 = vpop.f32.mrf.mxu0
      %v694 = vadd.f32 0.0, %v693
      %695 = vmatmul.bf16.gmra.mxu0 %v667
      %v696 = vpop.f32.mrf.mxu0
      %v697 = vadd.f32 0.0, %v696
      %v698 = vpop.f32.mrf.mxu0
      %v699 = vadd.f32 0.0, %v698
      %700 = vdwg.mxu0
      %v701 = vadd.f32 %v586, %v682
      %v702 = vadd.f32 %v587, %v684
      %v703 = vadd.f32 %v588, %v687
      %v704 = vadd.f32 %v589, %v689
      %v705 = vadd.f32 %v590, %v692
      %v706 = vadd.f32 %v591, %v694
      %v707 = vadd.f32 %v592, %v697
      %v708 = vadd.f32 %v593, %v699
      %s709 = scalar_lea.vmem %s172, 160
      %v710 = vld [vmem:[%s709] sm:$0xf]
      %v711 = vld [vmem:[%s709 + $0x8] sm:$0xf]
      %v712 = vld [vmem:[%s709 + $0x10] sm:$0xf]
      %v713 = vld [vmem:[%s709 + $0x18] sm:$0xf]
      %v714 = vld [vmem:[%s709 + $0x20] sm:$0xf]
      %v715 = vld [vmem:[%s709 + $0x28] sm:$0xf]
      %v716 = vld [vmem:[%s709 + $0x30] sm:$0xf]
      %v717 = vld [vmem:[%s709 + $0x38] sm:$0xf]
      %v718 = vunpack.c.l.bf16 %v710
      %v719 = vunpack.c.l.bf16 %v711
      %v720 = vunpack.c.l.bf16 %v712
      %v721 = vunpack.c.l.bf16 %v713
      %v722 = vunpack.c.l.bf16 %v714
      %v723 = vunpack.c.l.bf16 %v715
      %v724 = vunpack.c.l.bf16 %v716
      %v725 = vunpack.c.l.bf16 %v717
      %v726 = vpack.c.bf16 %v719, %v718
      %v727 = vpack.c.bf16 %v721, %v720
      %v728 = vpack.c.bf16 %v723, %v722
      %v729 = vpack.c.bf16 %v725, %v724
      %s730 = scalar_lea.vmem %s1, 10
      %v731 = vld [vmem:[%s730] sm:$0x3]
      %v733 = vsel %vm227, %v726, 0
      %v736 = vsel %vm227, %v727, 0
      %v739 = vsel %vm227, %v728, 0
      %v742 = vsel %vm227, %v729, 0
      %v745 = vsel %vm240, %v731, 0
      %747 = vmatpush.bf16.msra.mxu0 0
      %748 = vmatpush.bf16.msra.mxu0 0
      %749 = vmatpush.bf16.msra.mxu0 0
      %750 = vmatpush.bf16.msra.mxu0 0
      %751 = vmatpush.bf16.msra.mxu0 0
      %752 = vmatpush.bf16.msra.mxu0 0
      %753 = vmatpush.bf16.msra.mxu0 0
      %754 = vmatpush.bf16.msra.mxu0 %v745
      %755 = vmatmul.bf16.gmra.mxu0 %v733
      %v756 = vpop.f32.mrf.mxu0
      %v757 = vadd.f32 0.0, %v756
      %v758 = vpop.f32.mrf.mxu0
      %v759 = vadd.f32 0.0, %v758
      %760 = vmatmul.bf16.gmra.mxu0 %v736
      %v761 = vpop.f32.mrf.mxu0
      %v762 = vadd.f32 0.0, %v761
      %v763 = vpop.f32.mrf.mxu0
      %v764 = vadd.f32 0.0, %v763
      %765 = vmatmul.bf16.gmra.mxu0 %v739
      %v766 = vpop.f32.mrf.mxu0
      %v767 = vadd.f32 0.0, %v766
      %v768 = vpop.f32.mrf.mxu0
      %v769 = vadd.f32 0.0, %v768
      %770 = vmatmul.bf16.gmra.mxu0 %v742
      %v771 = vpop.f32.mrf.mxu0
      %v772 = vadd.f32 0.0, %v771
      %v773 = vpop.f32.mrf.mxu0
      %v774 = vadd.f32 0.0, %v773
      %775 = vdwg.mxu0
      %v776 = vadd.f32 %v701, %v757
      %v777 = vadd.f32 %v702, %v759
      %v778 = vadd.f32 %v703, %v762
      %v779 = vadd.f32 %v704, %v764
      %v780 = vadd.f32 %v705, %v767
      %v781 = vadd.f32 %v706, %v769
      %v782 = vadd.f32 %v707, %v772
      %v783 = vadd.f32 %v708, %v774
      %s784 = scalar_lea.vmem %s172, 240
      %v785 = vld [vmem:[%s784] sm:$0xf]
      %v786 = vld [vmem:[%s784 + $0x8] sm:$0xf]
      %v787 = vld [vmem:[%s784 + $0x10] sm:$0xf]
      %v788 = vld [vmem:[%s784 + $0x18] sm:$0xf]
      %v789 = vld [vmem:[%s784 + $0x20] sm:$0xf]
      %v790 = vld [vmem:[%s784 + $0x28] sm:$0xf]
      %v791 = vld [vmem:[%s784 + $0x30] sm:$0xf]
      %v792 = vld [vmem:[%s784 + $0x38] sm:$0xf]
      %v793 = vunpack.c.l.bf16 %v785
      %v794 = vunpack.c.l.bf16 %v786
      %v795 = vunpack.c.l.bf16 %v787
      %v796 = vunpack.c.l.bf16 %v788
      %v797 = vunpack.c.l.bf16 %v789
      %v798 = vunpack.c.l.bf16 %v790
      %v799 = vunpack.c.l.bf16 %v791
      %v800 = vunpack.c.l.bf16 %v792
      %v801 = vpack.c.bf16 %v794, %v793
      %v802 = vpack.c.bf16 %v796, %v795
      %v803 = vpack.c.bf16 %v798, %v797
      %v804 = vpack.c.bf16 %v800, %v799
      %s805 = scalar_lea.vmem %s1, 12
      %v806 = vld [vmem:[%s805] sm:$0x3]
      %v808 = vsel %vm227, %v801, 0
      %v811 = vsel %vm227, %v802, 0
      %v814 = vsel %vm227, %v803, 0
      %v817 = vsel %vm227, %v804, 0
      %v820 = vsel %vm240, %v806, 0
      %822 = vmatpush.bf16.msra.mxu0 0
      %823 = vmatpush.bf16.msra.mxu0 0
      %824 = vmatpush.bf16.msra.mxu0 0
      %825 = vmatpush.bf16.msra.mxu0 0
      %826 = vmatpush.bf16.msra.mxu0 0
      %827 = vmatpush.bf16.msra.mxu0 0
      %828 = vmatpush.bf16.msra.mxu0 0
      %829 = vmatpush.bf16.msra.mxu0 %v820
      %830 = vmatmul.bf16.gmra.mxu0 %v808
      %v831 = vpop.f32.mrf.mxu0
      %v832 = vadd.f32 0.0, %v831
      %v833 = vpop.f32.mrf.mxu0
      %v834 = vadd.f32 0.0, %v833
      %835 = vmatmul.bf16.gmra.mxu0 %v811
      %v836 = vpop.f32.mrf.mxu0
      %v837 = vadd.f32 0.0, %v836
      %v838 = vpop.f32.mrf.mxu0
      %v839 = vadd.f32 0.0, %v838
      %840 = vmatmul.bf16.gmra.mxu0 %v814
      %v841 = vpop.f32.mrf.mxu0
      %v842 = vadd.f32 0.0, %v841
      %v843 = vpop.f32.mrf.mxu0
      %v844 = vadd.f32 0.0, %v843
      %845 = vmatmul.bf16.gmra.mxu0 %v817
      %v846 = vpop.f32.mrf.mxu0
      %v847 = vadd.f32 0.0, %v846
      %v848 = vpop.f32.mrf.mxu0
      %v849 = vadd.f32 0.0, %v848
      %850 = vdwg.mxu0
      %v851 = vadd.f32 %v776, %v832
      %v852 = vadd.f32 %v777, %v834
      %v853 = vadd.f32 %v778, %v837
      %v854 = vadd.f32 %v779, %v839
      %v855 = vadd.f32 %v780, %v842
      %v856 = vadd.f32 %v781, %v844
      %v857 = vadd.f32 %v782, %v847
      %v858 = vadd.f32 %v783, %v849
      %v859 = vld [vmem:[%s709] sm:$0xf]
      %v860 = vld [vmem:[%s709 + $0x4] sm:$0x1]
      %v861 = vld [vmem:[%s709 + $0x8] sm:$0xf]
      %v862 = vld [vmem:[%s709 + $0xc] sm:$0x1]
      %v863 = vld [vmem:[%s709 + $0x10] sm:$0xf]
      %v864 = vld [vmem:[%s709 + $0x14] sm:$0x1]
      %v865 = vld [vmem:[%s709 + $0x18] sm:$0xf]
      %v866 = vld [vmem:[%s709 + $0x1c] sm:$0x1]
      %v867 = vld [vmem:[%s709 + $0x20] sm:$0xf]
      %v868 = vld [vmem:[%s709 + $0x24] sm:$0x1]
      %v869 = vld [vmem:[%s709 + $0x28] sm:$0xf]
      %v870 = vld [vmem:[%s709 + $0x2c] sm:$0x1]
      %v871 = vld [vmem:[%s709 + $0x30] sm:$0xf]
      %v872 = vld [vmem:[%s709 + $0x34] sm:$0x1]
      %v873 = vld [vmem:[%s709 + $0x38] sm:$0xf]
      %v874 = vld [vmem:[%s709 + $0x3c] sm:$0x1]
      %v875 = vunpack.c.l.bf16 %v859
      %v876 = vunpack.c.l.bf16 %v860
      %v877 = vunpack.c.l.bf16 %v861
      %v878 = vunpack.c.l.bf16 %v862
      %v879 = vunpack.c.l.bf16 %v863
      %v880 = vunpack.c.l.bf16 %v864
      %v881 = vunpack.c.l.bf16 %v865
      %v882 = vunpack.c.l.bf16 %v866
      %v883 = vunpack.c.l.bf16 %v867
      %v884 = vunpack.c.l.bf16 %v868
      %v885 = vunpack.c.l.bf16 %v869
      %v886 = vunpack.c.l.bf16 %v870
      %v887 = vunpack.c.l.bf16 %v871
      %v888 = vunpack.c.l.bf16 %v872
      %v889 = vunpack.c.l.bf16 %v873
      %v890 = vunpack.c.l.bf16 %v874
      %v907 = vrot.slane %v875, 1
      %v908 = vrot.slane %v876, 1
      %v909 = vsel %vm365, %v907, %v908
      %v910 = vrot.slane %v877, 1
      %v911 = vrot.slane %v878, 1
      %v912 = vsel %vm365, %v910, %v911
      %v913 = vrot.slane %v879, 1
      %v914 = vrot.slane %v880, 1
      %v915 = vsel %vm365, %v913, %v914
      %v916 = vrot.slane %v881, 1
      %v917 = vrot.slane %v882, 1
      %v918 = vsel %vm365, %v916, %v917
      %v919 = vrot.slane %v883, 1
      %v920 = vrot.slane %v884, 1
      %v921 = vsel %vm365, %v919, %v920
      %v922 = vrot.slane %v885, 1
      %v923 = vrot.slane %v886, 1
      %v924 = vsel %vm365, %v922, %v923
      %v925 = vrot.slane %v887, 1
      %v926 = vrot.slane %v888, 1
      %v927 = vsel %vm365, %v925, %v926
      %v928 = vrot.slane %v889, 1
      %v929 = vrot.slane %v890, 1
      %v930 = vsel %vm365, %v928, %v929
      %v939 = vpack.c.bf16 %v912, %v909
      %v940 = vpack.c.bf16 %v918, %v915
      %v941 = vpack.c.bf16 %v924, %v921
      %v942 = vpack.c.bf16 %v930, %v927
      %s943 = scalar_lea.vmem %s1, 14
      %v944 = vld [vmem:[%s943] sm:$0x3]
      %v946 = vsel %vm227, %v939, 0
      %v949 = vsel %vm227, %v940, 0
      %v952 = vsel %vm227, %v941, 0
      %v955 = vsel %vm227, %v942, 0
      %v958 = vsel %vm240, %v944, 0
      %960 = vmatpush.bf16.msra.mxu0 0
      %961 = vmatpush.bf16.msra.mxu0 0
      %962 = vmatpush.bf16.msra.mxu0 0
      %963 = vmatpush.bf16.msra.mxu0 0
      %964 = vmatpush.bf16.msra.mxu0 0
      %965 = vmatpush.bf16.msra.mxu0 0
      %966 = vmatpush.bf16.msra.mxu0 0
      %967 = vmatpush.bf16.msra.mxu0 %v958
      %968 = vmatmul.bf16.gmra.mxu0 %v946
      %v969 = vpop.f32.mrf.mxu0
      %v970 = vadd.f32 0.0, %v969
      %v971 = vpop.f32.mrf.mxu0
      %v972 = vadd.f32 0.0, %v971
      %973 = vmatmul.bf16.gmra.mxu0 %v949
      %v974 = vpop.f32.mrf.mxu0
      %v975 = vadd.f32 0.0, %v974
      %v976 = vpop.f32.mrf.mxu0
      %v977 = vadd.f32 0.0, %v976
      %978 = vmatmul.bf16.gmra.mxu0 %v952
      %v979 = vpop.f32.mrf.mxu0
      %v980 = vadd.f32 0.0, %v979
      %v981 = vpop.f32.mrf.mxu0
      %v982 = vadd.f32 0.0, %v981
      %983 = vmatmul.bf16.gmra.mxu0 %v955
      %v984 = vpop.f32.mrf.mxu0
      %v985 = vadd.f32 0.0, %v984
      %v986 = vpop.f32.mrf.mxu0
      %v987 = vadd.f32 0.0, %v986
      %988 = vdwg.mxu0
      %v989 = vadd.f32 %v851, %v970
      %v990 = vadd.f32 %v852, %v972
      %v991 = vadd.f32 %v853, %v975
      %v992 = vadd.f32 %v854, %v977
      %v993 = vadd.f32 %v855, %v980
      %v994 = vadd.f32 %v856, %v982
      %v995 = vadd.f32 %v857, %v985
      %v996 = vadd.f32 %v858, %v987
      %v997 = vld [vmem:[%s784] sm:$0xf]
      %v998 = vld [vmem:[%s784 + $0x4] sm:$0x1]
      %v999 = vld [vmem:[%s784 + $0x8] sm:$0xf]
      %v1000 = vld [vmem:[%s784 + $0xc] sm:$0x1]
      %v1001 = vld [vmem:[%s784 + $0x10] sm:$0xf]
      %v1002 = vld [vmem:[%s784 + $0x14] sm:$0x1]
      %v1003 = vld [vmem:[%s784 + $0x18] sm:$0xf]
      %v1004 = vld [vmem:[%s784 + $0x1c] sm:$0x1]
      %v1005 = vld [vmem:[%s784 + $0x20] sm:$0xf]
      %v1006 = vld [vmem:[%s784 + $0x24] sm:$0x1]
      %v1007 = vld [vmem:[%s784 + $0x28] sm:$0xf]
      %v1008 = vld [vmem:[%s784 + $0x2c] sm:$0x1]
      %v1009 = vld [vmem:[%s784 + $0x30] sm:$0xf]
      %v1010 = vld [vmem:[%s784 + $0x34] sm:$0x1]
      %v1011 = vld [vmem:[%s784 + $0x38] sm:$0xf]
      %v1012 = vld [vmem:[%s784 + $0x3c] sm:$0x1]
      %v1013 = vunpack.c.l.bf16 %v997
      %v1014 = vunpack.c.l.bf16 %v998
      %v1015 = vunpack.c.l.bf16 %v999
      %v1016 = vunpack.c.l.bf16 %v1000
      %v1017 = vunpack.c.l.bf16 %v1001
      %v1018 = vunpack.c.l.bf16 %v1002
      %v1019 = vunpack.c.l.bf16 %v1003
      %v1020 = vunpack.c.l.bf16 %v1004
      %v1021 = vunpack.c.l.bf16 %v1005
      %v1022 = vunpack.c.l.bf16 %v1006
      %v1023 = vunpack.c.l.bf16 %v1007
      %v1024 = vunpack.c.l.bf16 %v1008
      %v1025 = vunpack.c.l.bf16 %v1009
      %v1026 = vunpack.c.l.bf16 %v1010
      %v1027 = vunpack.c.l.bf16 %v1011
      %v1028 = vunpack.c.l.bf16 %v1012
      %v1045 = vrot.slane %v1013, 1
      %v1046 = vrot.slane %v1014, 1
      %v1047 = vsel %vm365, %v1045, %v1046
      %v1048 = vrot.slane %v1015, 1
      %v1049 = vrot.slane %v1016, 1
      %v1050 = vsel %vm365, %v1048, %v1049
      %v1051 = vrot.slane %v1017, 1
      %v1052 = vrot.slane %v1018, 1
      %v1053 = vsel %vm365, %v1051, %v1052
      %v1054 = vrot.slane %v1019, 1
      %v1055 = vrot.slane %v1020, 1
      %v1056 = vsel %vm365, %v1054, %v1055
      %v1057 = vrot.slane %v1021, 1
      %v1058 = vrot.slane %v1022, 1
      %v1059 = vsel %vm365, %v1057, %v1058
      %v1060 = vrot.slane %v1023, 1
      %v1061 = vrot.slane %v1024, 1
      %v1062 = vsel %vm365, %v1060, %v1061
      %v1063 = vrot.slane %v1025, 1
      %v1064 = vrot.slane %v1026, 1
      %v1065 = vsel %vm365, %v1063, %v1064
      %v1066 = vrot.slane %v1027, 1
      %v1067 = vrot.slane %v1028, 1
      %v1068 = vsel %vm365, %v1066, %v1067
      %v1077 = vpack.c.bf16 %v1050, %v1047
      %v1078 = vpack.c.bf16 %v1056, %v1053
      %v1079 = vpack.c.bf16 %v1062, %v1059
      %v1080 = vpack.c.bf16 %v1068, %v1065
      %s1081 = scalar_lea.vmem %s1, 16
      %v1082 = vld [vmem:[%s1081] sm:$0x3]
      %v1084 = vsel %vm227, %v1077, 0
      %v1087 = vsel %vm227, %v1078, 0
      %v1090 = vsel %vm227, %v1079, 0
      %v1093 = vsel %vm227, %v1080, 0
      %v1096 = vsel %vm240, %v1082, 0
      %1098 = vmatpush.bf16.msra.mxu0 0
      %1099 = vmatpush.bf16.msra.mxu0 0
      %1100 = vmatpush.bf16.msra.mxu0 0
      %1101 = vmatpush.bf16.msra.mxu0 0
      %1102 = vmatpush.bf16.msra.mxu0 0
      %1103 = vmatpush.bf16.msra.mxu0 0
      %1104 = vmatpush.bf16.msra.mxu0 0
      %1105 = vmatpush.bf16.msra.mxu0 %v1096
      %1106 = vmatmul.bf16.gmra.mxu0 %v1084
      %v1107 = vpop.f32.mrf.mxu0
      %v1108 = vadd.f32 0.0, %v1107
      %v1109 = vpop.f32.mrf.mxu0
      %v1110 = vadd.f32 0.0, %v1109
      %1111 = vmatmul.bf16.gmra.mxu0 %v1087
      %v1112 = vpop.f32.mrf.mxu0
      %v1113 = vadd.f32 0.0, %v1112
      %v1114 = vpop.f32.mrf.mxu0
      %v1115 = vadd.f32 0.0, %v1114
      %1116 = vmatmul.bf16.gmra.mxu0 %v1090
      %v1117 = vpop.f32.mrf.mxu0
      %v1118 = vadd.f32 0.0, %v1117
      %v1119 = vpop.f32.mrf.mxu0
      %v1120 = vadd.f32 0.0, %v1119
      %1121 = vmatmul.bf16.gmra.mxu0 %v1093
      %v1122 = vpop.f32.mrf.mxu0
      %v1123 = vadd.f32 0.0, %v1122
      %v1124 = vpop.f32.mrf.mxu0
      %v1125 = vadd.f32 0.0, %v1124
      %1126 = vdwg.mxu0
      %v1127 = vadd.f32 %v989, %v1108
      %v1128 = vadd.f32 %v990, %v1110
      %v1129 = vadd.f32 %v991, %v1113
      %v1130 = vadd.f32 %v992, %v1115
      %v1131 = vadd.f32 %v993, %v1118
      %v1132 = vadd.f32 %v994, %v1120
      %v1133 = vadd.f32 %v995, %v1123
      %v1134 = vadd.f32 %v996, %v1125
      %v1135 = vld [vmem:[%s709] sm:$0xe]
      %v1136 = vld [vmem:[%s709 + $0x8] sm:$0xe]
      %v1137 = vld [vmem:[%s709 + $0x10] sm:$0xe]
      %v1138 = vld [vmem:[%s709 + $0x18] sm:$0xe]
      %v1139 = vld [vmem:[%s709 + $0x20] sm:$0xe]
      %v1140 = vld [vmem:[%s709 + $0x28] sm:$0xe]
      %v1141 = vld [vmem:[%s709 + $0x30] sm:$0xe]
      %v1142 = vld [vmem:[%s709 + $0x38] sm:$0xe]
      %v1143 = vunpack.c.l.bf16 %v1135
      %v1144 = vunpack.c.l.bf16 %v1136
      %v1145 = vunpack.c.l.bf16 %v1137
      %v1146 = vunpack.c.l.bf16 %v1138
      %v1147 = vunpack.c.l.bf16 %v1139
      %v1148 = vunpack.c.l.bf16 %v1140
      %v1149 = vunpack.c.l.bf16 %v1141
      %v1150 = vunpack.c.l.bf16 %v1142
      %v1159 = vrot.slane %v1143, 2
      %v1160 = vrot.slane %v876, 2
      %v1161 = vsel %vm618, %v1159, %v1160
      %v1162 = vrot.slane %v1144, 2
      %v1163 = vrot.slane %v878, 2
      %v1164 = vsel %vm618, %v1162, %v1163
      %v1165 = vrot.slane %v1145, 2
      %v1166 = vrot.slane %v880, 2
      %v1167 = vsel %vm618, %v1165, %v1166
      %v1168 = vrot.slane %v1146, 2
      %v1169 = vrot.slane %v882, 2
      %v1170 = vsel %vm618, %v1168, %v1169
      %v1171 = vrot.slane %v1147, 2
      %v1172 = vrot.slane %v884, 2
      %v1173 = vsel %vm618, %v1171, %v1172
      %v1174 = vrot.slane %v1148, 2
      %v1175 = vrot.slane %v886, 2
      %v1176 = vsel %vm618, %v1174, %v1175
      %v1177 = vrot.slane %v1149, 2
      %v1178 = vrot.slane %v888, 2
      %v1179 = vsel %vm618, %v1177, %v1178
      %v1180 = vrot.slane %v1150, 2
      %v1181 = vrot.slane %v890, 2
      %v1182 = vsel %vm618, %v1180, %v1181
      %v1191 = vpack.c.bf16 %v1164, %v1161
      %v1192 = vpack.c.bf16 %v1170, %v1167
      %v1193 = vpack.c.bf16 %v1176, %v1173
      %v1194 = vpack.c.bf16 %v1182, %v1179
      %s1195 = scalar_lea.vmem %s1, 18
      %v1196 = vld [vmem:[%s1195] sm:$0x3]
      %v1198 = vsel %vm227, %v1191, 0
      %v1201 = vsel %vm227, %v1192, 0
      %v1204 = vsel %vm227, %v1193, 0
      %v1207 = vsel %vm227, %v1194, 0
      %v1210 = vsel %vm240, %v1196, 0
      %1212 = vmatpush.bf16.msra.mxu0 0
      %1213 = vmatpush.bf16.msra.mxu0 0
      %1214 = vmatpush.bf16.msra.mxu0 0
      %1215 = vmatpush.bf16.msra.mxu0 0
      %1216 = vmatpush.bf16.msra.mxu0 0
      %1217 = vmatpush.bf16.msra.mxu0 0
      %1218 = vmatpush.bf16.msra.mxu0 0
      %1219 = vmatpush.bf16.msra.mxu0 %v1210
      %1220 = vmatmul.bf16.gmra.mxu0 %v1198
      %v1221 = vpop.f32.mrf.mxu0
      %v1222 = vadd.f32 0.0, %v1221
      %v1223 = vpop.f32.mrf.mxu0
      %v1224 = vadd.f32 0.0, %v1223
      %1225 = vmatmul.bf16.gmra.mxu0 %v1201
      %v1226 = vpop.f32.mrf.mxu0
      %v1227 = vadd.f32 0.0, %v1226
      %v1228 = vpop.f32.mrf.mxu0
      %v1229 = vadd.f32 0.0, %v1228
      %1230 = vmatmul.bf16.gmra.mxu0 %v1204
      %v1231 = vpop.f32.mrf.mxu0
      %v1232 = vadd.f32 0.0, %v1231
      %v1233 = vpop.f32.mrf.mxu0
      %v1234 = vadd.f32 0.0, %v1233
      %1235 = vmatmul.bf16.gmra.mxu0 %v1207
      %v1236 = vpop.f32.mrf.mxu0
      %v1237 = vadd.f32 0.0, %v1236
      %v1238 = vpop.f32.mrf.mxu0
      %v1239 = vadd.f32 0.0, %v1238
      %1240 = vdwg.mxu0
      %v1241 = vadd.f32 %v1127, %v1222
      %v1242 = vadd.f32 %v1128, %v1224
      %v1243 = vadd.f32 %v1129, %v1227
      %v1244 = vadd.f32 %v1130, %v1229
      %v1245 = vadd.f32 %v1131, %v1232
      %v1246 = vadd.f32 %v1132, %v1234
      %v1247 = vadd.f32 %v1133, %v1237
      %v1248 = vadd.f32 %v1134, %v1239
      %s1249 = scalar_lea.vmem %s172, 8
      %v1250 = vld [vmem:[%s1249] sm:$0xf]
      %v1251 = vld [vmem:[%s1249 + $0x8] sm:$0xf]
      %v1252 = vld [vmem:[%s1249 + $0x10] sm:$0xf]
      %v1253 = vld [vmem:[%s1249 + $0x18] sm:$0xf]
      %v1254 = vld [vmem:[%s1249 + $0x20] sm:$0xf]
      %v1255 = vld [vmem:[%s1249 + $0x28] sm:$0xf]
      %v1256 = vld [vmem:[%s1249 + $0x30] sm:$0xf]
      %v1257 = vld [vmem:[%s1249 + $0x38] sm:$0xf]
      %v1258 = vunpack.c.l.bf16 %v1250
      %v1259 = vunpack.c.l.bf16 %v1251
      %v1260 = vunpack.c.l.bf16 %v1252
      %v1261 = vunpack.c.l.bf16 %v1253
      %v1262 = vunpack.c.l.bf16 %v1254
      %v1263 = vunpack.c.l.bf16 %v1255
      %v1264 = vunpack.c.l.bf16 %v1256
      %v1265 = vunpack.c.l.bf16 %v1257
      %v1266 = vpack.c.bf16 %v1259, %v1258
      %v1267 = vpack.c.bf16 %v1261, %v1260
      %v1268 = vpack.c.bf16 %v1263, %v1262
      %v1269 = vpack.c.bf16 %v1265, %v1264
      %s1270 = scalar_lea.vmem %s1, 20
      %v1271 = vld [vmem:[%s1270] sm:$0x3]
      %v1273 = vsel %vm227, %v1266, 0
      %v1276 = vsel %vm227, %v1267, 0
      %v1279 = vsel %vm227, %v1268, 0
      %v1282 = vsel %vm227, %v1269, 0
      %v1285 = vsel %vm240, %v1271, 0
      %1287 = vmatpush.bf16.msra.mxu0 0
      %1288 = vmatpush.bf16.msra.mxu0 0
      %1289 = vmatpush.bf16.msra.mxu0 0
      %1290 = vmatpush.bf16.msra.mxu0 0
      %1291 = vmatpush.bf16.msra.mxu0 0
      %1292 = vmatpush.bf16.msra.mxu0 0
      %1293 = vmatpush.bf16.msra.mxu0 0
      %1294 = vmatpush.bf16.msra.mxu0 %v1285
      %1295 = vmatmul.bf16.gmra.mxu0 %v1273
      %v1296 = vpop.f32.mrf.mxu0
      %v1297 = vadd.f32 0.0, %v1296
      %v1298 = vpop.f32.mrf.mxu0
      %v1299 = vadd.f32 0.0, %v1298
      %1300 = vmatmul.bf16.gmra.mxu0 %v1276
      %v1301 = vpop.f32.mrf.mxu0
      %v1302 = vadd.f32 0.0, %v1301
      %v1303 = vpop.f32.mrf.mxu0
      %v1304 = vadd.f32 0.0, %v1303
      %1305 = vmatmul.bf16.gmra.mxu0 %v1279
      %v1306 = vpop.f32.mrf.mxu0
      %v1307 = vadd.f32 0.0, %v1306
      %v1308 = vpop.f32.mrf.mxu0
      %v1309 = vadd.f32 0.0, %v1308
      %1310 = vmatmul.bf16.gmra.mxu0 %v1282
      %v1311 = vpop.f32.mrf.mxu0
      %v1312 = vadd.f32 0.0, %v1311
      %v1313 = vpop.f32.mrf.mxu0
      %v1314 = vadd.f32 0.0, %v1313
      %1315 = vdwg.mxu0
      %v1316 = vadd.f32 %v1241, %v1297
      %v1317 = vadd.f32 %v1242, %v1299
      %v1318 = vadd.f32 %v1243, %v1302
      %v1319 = vadd.f32 %v1244, %v1304
      %v1320 = vadd.f32 %v1245, %v1307
      %v1321 = vadd.f32 %v1246, %v1309
      %v1322 = vadd.f32 %v1247, %v1312
      %v1323 = vadd.f32 %v1248, %v1314
      %s1324 = scalar_lea.vmem %s172, 88
      %v1325 = vld [vmem:[%s1324] sm:$0xf]
      %v1326 = vld [vmem:[%s1324 + $0x8] sm:$0xf]
      %v1327 = vld [vmem:[%s1324 + $0x10] sm:$0xf]
      %v1328 = vld [vmem:[%s1324 + $0x18] sm:$0xf]
      %v1329 = vld [vmem:[%s1324 + $0x20] sm:$0xf]
      %v1330 = vld [vmem:[%s1324 + $0x28] sm:$0xf]
      %v1331 = vld [vmem:[%s1324 + $0x30] sm:$0xf]
      %v1332 = vld [vmem:[%s1324 + $0x38] sm:$0xf]
      %v1333 = vunpack.c.l.bf16 %v1325
      %v1334 = vunpack.c.l.bf16 %v1326
      %v1335 = vunpack.c.l.bf16 %v1327
      %v1336 = vunpack.c.l.bf16 %v1328
      %v1337 = vunpack.c.l.bf16 %v1329
      %v1338 = vunpack.c.l.bf16 %v1330
      %v1339 = vunpack.c.l.bf16 %v1331
      %v1340 = vunpack.c.l.bf16 %v1332
      %v1341 = vpack.c.bf16 %v1334, %v1333
      %v1342 = vpack.c.bf16 %v1336, %v1335
      %v1343 = vpack.c.bf16 %v1338, %v1337
      %v1344 = vpack.c.bf16 %v1340, %v1339
      %s1345 = scalar_lea.vmem %s1, 22
      %v1346 = vld [vmem:[%s1345] sm:$0x3]
      %v1348 = vsel %vm227, %v1341, 0
      %v1351 = vsel %vm227, %v1342, 0
      %v1354 = vsel %vm227, %v1343, 0
      %v1357 = vsel %vm227, %v1344, 0
      %v1360 = vsel %vm240, %v1346, 0
      %1362 = vmatpush.bf16.msra.mxu0 0
      %1363 = vmatpush.bf16.msra.mxu0 0
      %1364 = vmatpush.bf16.msra.mxu0 0
      %1365 = vmatpush.bf16.msra.mxu0 0
      %1366 = vmatpush.bf16.msra.mxu0 0
      %1367 = vmatpush.bf16.msra.mxu0 0
      %1368 = vmatpush.bf16.msra.mxu0 0
      %1369 = vmatpush.bf16.msra.mxu0 %v1360
      %1370 = vmatmul.bf16.gmra.mxu0 %v1348
      %v1371 = vpop.f32.mrf.mxu0
      %v1372 = vadd.f32 0.0, %v1371
      %v1373 = vpop.f32.mrf.mxu0
      %v1374 = vadd.f32 0.0, %v1373
      %1375 = vmatmul.bf16.gmra.mxu0 %v1351
      %v1376 = vpop.f32.mrf.mxu0
      %v1377 = vadd.f32 0.0, %v1376
      %v1378 = vpop.f32.mrf.mxu0
      %v1379 = vadd.f32 0.0, %v1378
      %1380 = vmatmul.bf16.gmra.mxu0 %v1354
      %v1381 = vpop.f32.mrf.mxu0
      %v1382 = vadd.f32 0.0, %v1381
      %v1383 = vpop.f32.mrf.mxu0
      %v1384 = vadd.f32 0.0, %v1383
      %1385 = vmatmul.bf16.gmra.mxu0 %v1357
      %v1386 = vpop.f32.mrf.mxu0
      %v1387 = vadd.f32 0.0, %v1386
      %v1388 = vpop.f32.mrf.mxu0
      %v1389 = vadd.f32 0.0, %v1388
      %1390 = vdwg.mxu0
      %v1391 = vadd.f32 %v1316, %v1372
      %v1392 = vadd.f32 %v1317, %v1374
      %v1393 = vadd.f32 %v1318, %v1377
      %v1394 = vadd.f32 %v1319, %v1379
      %v1395 = vadd.f32 %v1320, %v1382
      %v1396 = vadd.f32 %v1321, %v1384
      %v1397 = vadd.f32 %v1322, %v1387
      %v1398 = vadd.f32 %v1323, %v1389
      %v1399 = vld [vmem:[%s1249] sm:$0xf]
      %v1400 = vld [vmem:[%s1249 + $0x4] sm:$0x1]
      %v1401 = vld [vmem:[%s1249 + $0x8] sm:$0xf]
      %v1402 = vld [vmem:[%s1249 + $0xc] sm:$0x1]
      %v1403 = vld [vmem:[%s1249 + $0x10] sm:$0xf]
      %v1404 = vld [vmem:[%s1249 + $0x14] sm:$0x1]
      %v1405 = vld [vmem:[%s1249 + $0x18] sm:$0xf]
      %v1406 = vld [vmem:[%s1249 + $0x1c] sm:$0x1]
      %v1407 = vld [vmem:[%s1249 + $0x20] sm:$0xf]
      %v1408 = vld [vmem:[%s1249 + $0x24] sm:$0x1]
      %v1409 = vld [vmem:[%s1249 + $0x28] sm:$0xf]
      %v1410 = vld [vmem:[%s1249 + $0x2c] sm:$0x1]
      %v1411 = vld [vmem:[%s1249 + $0x30] sm:$0xf]
      %v1412 = vld [vmem:[%s1249 + $0x34] sm:$0x1]
      %v1413 = vld [vmem:[%s1249 + $0x38] sm:$0xf]
      %v1414 = vld [vmem:[%s1249 + $0x3c] sm:$0x1]
      %v1415 = vunpack.c.l.bf16 %v1399
      %v1416 = vunpack.c.l.bf16 %v1400
      %v1417 = vunpack.c.l.bf16 %v1401
      %v1418 = vunpack.c.l.bf16 %v1402
      %v1419 = vunpack.c.l.bf16 %v1403
      %v1420 = vunpack.c.l.bf16 %v1404
      %v1421 = vunpack.c.l.bf16 %v1405
      %v1422 = vunpack.c.l.bf16 %v1406
      %v1423 = vunpack.c.l.bf16 %v1407
      %v1424 = vunpack.c.l.bf16 %v1408
      %v1425 = vunpack.c.l.bf16 %v1409
      %v1426 = vunpack.c.l.bf16 %v1410
      %v1427 = vunpack.c.l.bf16 %v1411
      %v1428 = vunpack.c.l.bf16 %v1412
      %v1429 = vunpack.c.l.bf16 %v1413
      %v1430 = vunpack.c.l.bf16 %v1414
      %v1447 = vrot.slane %v1415, 1
      %v1448 = vrot.slane %v1416, 1
      %v1449 = vsel %vm365, %v1447, %v1448
      %v1450 = vrot.slane %v1417, 1
      %v1451 = vrot.slane %v1418, 1
      %v1452 = vsel %vm365, %v1450, %v1451
      %v1453 = vrot.slane %v1419, 1
      %v1454 = vrot.slane %v1420, 1
      %v1455 = vsel %vm365, %v1453, %v1454
      %v1456 = vrot.slane %v1421, 1
      %v1457 = vrot.slane %v1422, 1
      %v1458 = vsel %vm365, %v1456, %v1457
      %v1459 = vrot.slane %v1423, 1
      %v1460 = vrot.slane %v1424, 1
      %v1461 = vsel %vm365, %v1459, %v1460
      %v1462 = vrot.slane %v1425, 1
      %v1463 = vrot.slane %v1426, 1
      %v1464 = vsel %vm365, %v1462, %v1463
      %v1465 = vrot.slane %v1427, 1
      %v1466 = vrot.slane %v1428, 1
      %v1467 = vsel %vm365, %v1465, %v1466
      %v1468 = vrot.slane %v1429, 1
      %v1469 = vrot.slane %v1430, 1
      %v1470 = vsel %vm365, %v1468, %v1469
      %v1479 = vpack.c.bf16 %v1452, %v1449
      %v1480 = vpack.c.bf16 %v1458, %v1455
      %v1481 = vpack.c.bf16 %v1464, %v1461
      %v1482 = vpack.c.bf16 %v1470, %v1467
      %s1483 = scalar_lea.vmem %s1, 24
      %v1484 = vld [vmem:[%s1483] sm:$0x3]
      %v1486 = vsel %vm227, %v1479, 0
      %v1489 = vsel %vm227, %v1480, 0
      %v1492 = vsel %vm227, %v1481, 0
      %v1495 = vsel %vm227, %v1482, 0
      %v1498 = vsel %vm240, %v1484, 0
      %1500 = vmatpush.bf16.msra.mxu0 0
      %1501 = vmatpush.bf16.msra.mxu0 0
      %1502 = vmatpush.bf16.msra.mxu0 0
      %1503 = vmatpush.bf16.msra.mxu0 0
      %1504 = vmatpush.bf16.msra.mxu0 0
      %1505 = vmatpush.bf16.msra.mxu0 0
      %1506 = vmatpush.bf16.msra.mxu0 0
      %1507 = vmatpush.bf16.msra.mxu0 %v1498
      %1508 = vmatmul.bf16.gmra.mxu0 %v1486
      %v1509 = vpop.f32.mrf.mxu0
      %v1510 = vadd.f32 0.0, %v1509
      %v1511 = vpop.f32.mrf.mxu0
      %v1512 = vadd.f32 0.0, %v1511
      %1513 = vmatmul.bf16.gmra.mxu0 %v1489
      %v1514 = vpop.f32.mrf.mxu0
      %v1515 = vadd.f32 0.0, %v1514
      %v1516 = vpop.f32.mrf.mxu0
      %v1517 = vadd.f32 0.0, %v1516
      %1518 = vmatmul.bf16.gmra.mxu0 %v1492
      %v1519 = vpop.f32.mrf.mxu0
      %v1520 = vadd.f32 0.0, %v1519
      %v1521 = vpop.f32.mrf.mxu0
      %v1522 = vadd.f32 0.0, %v1521
      %1523 = vmatmul.bf16.gmra.mxu0 %v1495
      %v1524 = vpop.f32.mrf.mxu0
      %v1525 = vadd.f32 0.0, %v1524
      %v1526 = vpop.f32.mrf.mxu0
      %v1527 = vadd.f32 0.0, %v1526
      %1528 = vdwg.mxu0
      %v1529 = vadd.f32 %v1391, %v1510
      %v1530 = vadd.f32 %v1392, %v1512
      %v1531 = vadd.f32 %v1393, %v1515
      %v1532 = vadd.f32 %v1394, %v1517
      %v1533 = vadd.f32 %v1395, %v1520
      %v1534 = vadd.f32 %v1396, %v1522
      %v1535 = vadd.f32 %v1397, %v1525
      %v1536 = vadd.f32 %v1398, %v1527
      %v1537 = vld [vmem:[%s1324] sm:$0xf]
      %v1538 = vld [vmem:[%s1324 + $0x4] sm:$0x1]
      %v1539 = vld [vmem:[%s1324 + $0x8] sm:$0xf]
      %v1540 = vld [vmem:[%s1324 + $0xc] sm:$0x1]
      %v1541 = vld [vmem:[%s1324 + $0x10] sm:$0xf]
      %v1542 = vld [vmem:[%s1324 + $0x14] sm:$0x1]
      %v1543 = vld [vmem:[%s1324 + $0x18] sm:$0xf]
      %v1544 = vld [vmem:[%s1324 + $0x1c] sm:$0x1]
      %v1545 = vld [vmem:[%s1324 + $0x20] sm:$0xf]
      %v1546 = vld [vmem:[%s1324 + $0x24] sm:$0x1]
      %v1547 = vld [vmem:[%s1324 + $0x28] sm:$0xf]
      %v1548 = vld [vmem:[%s1324 + $0x2c] sm:$0x1]
      %v1549 = vld [vmem:[%s1324 + $0x30] sm:$0xf]
      %v1550 = vld [vmem:[%s1324 + $0x34] sm:$0x1]
      %v1551 = vld [vmem:[%s1324 + $0x38] sm:$0xf]
      %v1552 = vld [vmem:[%s1324 + $0x3c] sm:$0x1]
      %v1553 = vunpack.c.l.bf16 %v1537
      %v1554 = vunpack.c.l.bf16 %v1538
      %v1555 = vunpack.c.l.bf16 %v1539
      %v1556 = vunpack.c.l.bf16 %v1540
      %v1557 = vunpack.c.l.bf16 %v1541
      %v1558 = vunpack.c.l.bf16 %v1542
      %v1559 = vunpack.c.l.bf16 %v1543
      %v1560 = vunpack.c.l.bf16 %v1544
      %v1561 = vunpack.c.l.bf16 %v1545
      %v1562 = vunpack.c.l.bf16 %v1546
      %v1563 = vunpack.c.l.bf16 %v1547
      %v1564 = vunpack.c.l.bf16 %v1548
      %v1565 = vunpack.c.l.bf16 %v1549
      %v1566 = vunpack.c.l.bf16 %v1550
      %v1567 = vunpack.c.l.bf16 %v1551
      %v1568 = vunpack.c.l.bf16 %v1552
      %v1585 = vrot.slane %v1553, 1
      %v1586 = vrot.slane %v1554, 1
      %v1587 = vsel %vm365, %v1585, %v1586
      %v1588 = vrot.slane %v1555, 1
      %v1589 = vrot.slane %v1556, 1
      %v1590 = vsel %vm365, %v1588, %v1589
      %v1591 = vrot.slane %v1557, 1
      %v1592 = vrot.slane %v1558, 1
      %v1593 = vsel %vm365, %v1591, %v1592
      %v1594 = vrot.slane %v1559, 1
      %v1595 = vrot.slane %v1560, 1
      %v1596 = vsel %vm365, %v1594, %v1595
      %v1597 = vrot.slane %v1561, 1
      %v1598 = vrot.slane %v1562, 1
      %v1599 = vsel %vm365, %v1597, %v1598
      %v1600 = vrot.slane %v1563, 1
      %v1601 = vrot.slane %v1564, 1
      %v1602 = vsel %vm365, %v1600, %v1601
      %v1603 = vrot.slane %v1565, 1
      %v1604 = vrot.slane %v1566, 1
      %v1605 = vsel %vm365, %v1603, %v1604
      %v1606 = vrot.slane %v1567, 1
      %v1607 = vrot.slane %v1568, 1
      %v1608 = vsel %vm365, %v1606, %v1607
      %v1617 = vpack.c.bf16 %v1590, %v1587
      %v1618 = vpack.c.bf16 %v1596, %v1593
      %v1619 = vpack.c.bf16 %v1602, %v1599
      %v1620 = vpack.c.bf16 %v1608, %v1605
      %s1621 = scalar_lea.vmem %s1, 26
      %v1622 = vld [vmem:[%s1621] sm:$0x3]
      %v1624 = vsel %vm227, %v1617, 0
      %v1627 = vsel %vm227, %v1618, 0
      %v1630 = vsel %vm227, %v1619, 0
      %v1633 = vsel %vm227, %v1620, 0
      %v1636 = vsel %vm240, %v1622, 0
      %1638 = vmatpush.bf16.msra.mxu0 0
      %1639 = vmatpush.bf16.msra.mxu0 0
      %1640 = vmatpush.bf16.msra.mxu0 0
      %1641 = vmatpush.bf16.msra.mxu0 0
      %1642 = vmatpush.bf16.msra.mxu0 0
      %1643 = vmatpush.bf16.msra.mxu0 0
      %1644 = vmatpush.bf16.msra.mxu0 0
      %1645 = vmatpush.bf16.msra.mxu0 %v1636
      %1646 = vmatmul.bf16.gmra.mxu0 %v1624
      %v1647 = vpop.f32.mrf.mxu0
      %v1648 = vadd.f32 0.0, %v1647
      %v1649 = vpop.f32.mrf.mxu0
      %v1650 = vadd.f32 0.0, %v1649
      %1651 = vmatmul.bf16.gmra.mxu0 %v1627
      %v1652 = vpop.f32.mrf.mxu0
      %v1653 = vadd.f32 0.0, %v1652
      %v1654 = vpop.f32.mrf.mxu0
      %v1655 = vadd.f32 0.0, %v1654
      %1656 = vmatmul.bf16.gmra.mxu0 %v1630
      %v1657 = vpop.f32.mrf.mxu0
      %v1658 = vadd.f32 0.0, %v1657
      %v1659 = vpop.f32.mrf.mxu0
      %v1660 = vadd.f32 0.0, %v1659
      %1661 = vmatmul.bf16.gmra.mxu0 %v1633
      %v1662 = vpop.f32.mrf.mxu0
      %v1663 = vadd.f32 0.0, %v1662
      %v1664 = vpop.f32.mrf.mxu0
      %v1665 = vadd.f32 0.0, %v1664
      %1666 = vdwg.mxu0
      %v1667 = vadd.f32 %v1529, %v1648
      %v1668 = vadd.f32 %v1530, %v1650
      %v1669 = vadd.f32 %v1531, %v1653
      %v1670 = vadd.f32 %v1532, %v1655
      %v1671 = vadd.f32 %v1533, %v1658
      %v1672 = vadd.f32 %v1534, %v1660
      %v1673 = vadd.f32 %v1535, %v1663
      %v1674 = vadd.f32 %v1536, %v1665
      %v1675 = vld [vmem:[%s1249] sm:$0xe]
      %v1676 = vld [vmem:[%s1249 + $0x8] sm:$0xe]
      %v1677 = vld [vmem:[%s1249 + $0x10] sm:$0xe]
      %v1678 = vld [vmem:[%s1249 + $0x18] sm:$0xe]
      %v1679 = vld [vmem:[%s1249 + $0x20] sm:$0xe]
      %v1680 = vld [vmem:[%s1249 + $0x28] sm:$0xe]
      %v1681 = vld [vmem:[%s1249 + $0x30] sm:$0xe]
      %v1682 = vld [vmem:[%s1249 + $0x38] sm:$0xe]
      %v1683 = vunpack.c.l.bf16 %v1675
      %v1684 = vunpack.c.l.bf16 %v1676
      %v1685 = vunpack.c.l.bf16 %v1677
      %v1686 = vunpack.c.l.bf16 %v1678
      %v1687 = vunpack.c.l.bf16 %v1679
      %v1688 = vunpack.c.l.bf16 %v1680
      %v1689 = vunpack.c.l.bf16 %v1681
      %v1690 = vunpack.c.l.bf16 %v1682
      %v1699 = vrot.slane %v1683, 2
      %v1700 = vrot.slane %v1416, 2
      %v1701 = vsel %vm618, %v1699, %v1700
      %v1702 = vrot.slane %v1684, 2
      %v1703 = vrot.slane %v1418, 2
      %v1704 = vsel %vm618, %v1702, %v1703
      %v1705 = vrot.slane %v1685, 2
      %v1706 = vrot.slane %v1420, 2
      %v1707 = vsel %vm618, %v1705, %v1706
      %v1708 = vrot.slane %v1686, 2
      %v1709 = vrot.slane %v1422, 2
      %v1710 = vsel %vm618, %v1708, %v1709
      %v1711 = vrot.slane %v1687, 2
      %v1712 = vrot.slane %v1424, 2
      %v1713 = vsel %vm618, %v1711, %v1712
      %v1714 = vrot.slane %v1688, 2
      %v1715 = vrot.slane %v1426, 2
      %v1716 = vsel %vm618, %v1714, %v1715
      %v1717 = vrot.slane %v1689, 2
      %v1718 = vrot.slane %v1428, 2
      %v1719 = vsel %vm618, %v1717, %v1718
      %v1720 = vrot.slane %v1690, 2
      %v1721 = vrot.slane %v1430, 2
      %v1722 = vsel %vm618, %v1720, %v1721
      %v1731 = vpack.c.bf16 %v1704, %v1701
      %v1732 = vpack.c.bf16 %v1710, %v1707
      %v1733 = vpack.c.bf16 %v1716, %v1713
      %v1734 = vpack.c.bf16 %v1722, %v1719
      %s1735 = scalar_lea.vmem %s1, 28
      %v1736 = vld [vmem:[%s1735] sm:$0x3]
      %v1738 = vsel %vm227, %v1731, 0
      %v1741 = vsel %vm227, %v1732, 0
      %v1744 = vsel %vm227, %v1733, 0
      %v1747 = vsel %vm227, %v1734, 0
      %v1750 = vsel %vm240, %v1736, 0
      %1752 = vmatpush.bf16.msra.mxu0 0
      %1753 = vmatpush.bf16.msra.mxu0 0
      %1754 = vmatpush.bf16.msra.mxu0 0
      %1755 = vmatpush.bf16.msra.mxu0 0
      %1756 = vmatpush.bf16.msra.mxu0 0
      %1757 = vmatpush.bf16.msra.mxu0 0
      %1758 = vmatpush.bf16.msra.mxu0 0
      %1759 = vmatpush.bf16.msra.mxu0 %v1750
      %1760 = vmatmul.bf16.gmra.mxu0 %v1738
      %v1761 = vpop.f32.mrf.mxu0
      %v1762 = vadd.f32 0.0, %v1761
      %v1763 = vpop.f32.mrf.mxu0
      %v1764 = vadd.f32 0.0, %v1763
      %1765 = vmatmul.bf16.gmra.mxu0 %v1741
      %v1766 = vpop.f32.mrf.mxu0
      %v1767 = vadd.f32 0.0, %v1766
      %v1768 = vpop.f32.mrf.mxu0
      %v1769 = vadd.f32 0.0, %v1768
      %1770 = vmatmul.bf16.gmra.mxu0 %v1744
      %v1771 = vpop.f32.mrf.mxu0
      %v1772 = vadd.f32 0.0, %v1771
      %v1773 = vpop.f32.mrf.mxu0
      %v1774 = vadd.f32 0.0, %v1773
      %1775 = vmatmul.bf16.gmra.mxu0 %v1747
      %v1776 = vpop.f32.mrf.mxu0
      %v1777 = vadd.f32 0.0, %v1776
      %v1778 = vpop.f32.mrf.mxu0
      %v1779 = vadd.f32 0.0, %v1778
      %1780 = vdwg.mxu0
      %v1781 = vadd.f32 %v1667, %v1762
      %v1782 = vadd.f32 %v1668, %v1764
      %v1783 = vadd.f32 %v1669, %v1767
      %v1784 = vadd.f32 %v1670, %v1769
      %v1785 = vadd.f32 %v1671, %v1772
      %v1786 = vadd.f32 %v1672, %v1774
      %v1787 = vadd.f32 %v1673, %v1777
      %v1788 = vadd.f32 %v1674, %v1779
      %s1789 = scalar_lea.vmem %s172, 168
      %v1790 = vld [vmem:[%s1789] sm:$0xf]
      %v1791 = vld [vmem:[%s1789 + $0x8] sm:$0xf]
      %v1792 = vld [vmem:[%s1789 + $0x10] sm:$0xf]
      %v1793 = vld [vmem:[%s1789 + $0x18] sm:$0xf]
      %v1794 = vld [vmem:[%s1789 + $0x20] sm:$0xf]
      %v1795 = vld [vmem:[%s1789 + $0x28] sm:$0xf]
      %v1796 = vld [vmem:[%s1789 + $0x30] sm:$0xf]
      %v1797 = vld [vmem:[%s1789 + $0x38] sm:$0xf]
      %v1798 = vunpack.c.l.bf16 %v1790
      %v1799 = vunpack.c.l.bf16 %v1791
      %v1800 = vunpack.c.l.bf16 %v1792
      %v1801 = vunpack.c.l.bf16 %v1793
      %v1802 = vunpack.c.l.bf16 %v1794
      %v1803 = vunpack.c.l.bf16 %v1795
      %v1804 = vunpack.c.l.bf16 %v1796
      %v1805 = vunpack.c.l.bf16 %v1797
      %v1806 = vpack.c.bf16 %v1799, %v1798
      %v1807 = vpack.c.bf16 %v1801, %v1800
      %v1808 = vpack.c.bf16 %v1803, %v1802
      %v1809 = vpack.c.bf16 %v1805, %v1804
      %s1810 = scalar_lea.vmem %s1, 30
      %v1811 = vld [vmem:[%s1810] sm:$0x3]
      %v1813 = vsel %vm227, %v1806, 0
      %v1816 = vsel %vm227, %v1807, 0
      %v1819 = vsel %vm227, %v1808, 0
      %v1822 = vsel %vm227, %v1809, 0
      %v1825 = vsel %vm240, %v1811, 0
      %1827 = vmatpush.bf16.msra.mxu0 0
      %1828 = vmatpush.bf16.msra.mxu0 0
      %1829 = vmatpush.bf16.msra.mxu0 0
      %1830 = vmatpush.bf16.msra.mxu0 0
      %1831 = vmatpush.bf16.msra.mxu0 0
      %1832 = vmatpush.bf16.msra.mxu0 0
      %1833 = vmatpush.bf16.msra.mxu0 0
      %1834 = vmatpush.bf16.msra.mxu0 %v1825
      %1835 = vmatmul.bf16.gmra.mxu0 %v1813
      %v1836 = vpop.f32.mrf.mxu0
      %v1837 = vadd.f32 0.0, %v1836
      %v1838 = vpop.f32.mrf.mxu0
      %v1839 = vadd.f32 0.0, %v1838
      %1840 = vmatmul.bf16.gmra.mxu0 %v1816
      %v1841 = vpop.f32.mrf.mxu0
      %v1842 = vadd.f32 0.0, %v1841
      %v1843 = vpop.f32.mrf.mxu0
      %v1844 = vadd.f32 0.0, %v1843
      %1845 = vmatmul.bf16.gmra.mxu0 %v1819
      %v1846 = vpop.f32.mrf.mxu0
      %v1847 = vadd.f32 0.0, %v1846
      %v1848 = vpop.f32.mrf.mxu0
      %v1849 = vadd.f32 0.0, %v1848
      %1850 = vmatmul.bf16.gmra.mxu0 %v1822
      %v1851 = vpop.f32.mrf.mxu0
      %v1852 = vadd.f32 0.0, %v1851
      %v1853 = vpop.f32.mrf.mxu0
      %v1854 = vadd.f32 0.0, %v1853
      %1855 = vdwg.mxu0
      %v1856 = vadd.f32 %v1781, %v1837
      %v1857 = vadd.f32 %v1782, %v1839
      %v1858 = vadd.f32 %v1783, %v1842
      %v1859 = vadd.f32 %v1784, %v1844
      %v1860 = vadd.f32 %v1785, %v1847
      %v1861 = vadd.f32 %v1786, %v1849
      %v1862 = vadd.f32 %v1787, %v1852
      %v1863 = vadd.f32 %v1788, %v1854
      %s1864 = scalar_lea.vmem %s172, 248
      %v1865 = vld [vmem:[%s1864] sm:$0xf]
      %v1866 = vld [vmem:[%s1864 + $0x8] sm:$0xf]
      %v1867 = vld [vmem:[%s1864 + $0x10] sm:$0xf]
      %v1868 = vld [vmem:[%s1864 + $0x18] sm:$0xf]
      %v1869 = vld [vmem:[%s1864 + $0x20] sm:$0xf]
      %v1870 = vld [vmem:[%s1864 + $0x28] sm:$0xf]
      %v1871 = vld [vmem:[%s1864 + $0x30] sm:$0xf]
      %v1872 = vld [vmem:[%s1864 + $0x38] sm:$0xf]
      %v1873 = vunpack.c.l.bf16 %v1865
      %v1874 = vunpack.c.l.bf16 %v1866
      %v1875 = vunpack.c.l.bf16 %v1867
      %v1876 = vunpack.c.l.bf16 %v1868
      %v1877 = vunpack.c.l.bf16 %v1869
      %v1878 = vunpack.c.l.bf16 %v1870
      %v1879 = vunpack.c.l.bf16 %v1871
      %v1880 = vunpack.c.l.bf16 %v1872
      %v1881 = vpack.c.bf16 %v1874, %v1873
      %v1882 = vpack.c.bf16 %v1876, %v1875
      %v1883 = vpack.c.bf16 %v1878, %v1877
      %v1884 = vpack.c.bf16 %v1880, %v1879
      %s1885 = scalar_lea.vmem %s1, 32
      %v1886 = vld [vmem:[%s1885] sm:$0x3]
      %v1888 = vsel %vm227, %v1881, 0
      %v1891 = vsel %vm227, %v1882, 0
      %v1894 = vsel %vm227, %v1883, 0
      %v1897 = vsel %vm227, %v1884, 0
      %v1900 = vsel %vm240, %v1886, 0
      %1902 = vmatpush.bf16.msra.mxu0 0
      %1903 = vmatpush.bf16.msra.mxu0 0
      %1904 = vmatpush.bf16.msra.mxu0 0
      %1905 = vmatpush.bf16.msra.mxu0 0
      %1906 = vmatpush.bf16.msra.mxu0 0
      %1907 = vmatpush.bf16.msra.mxu0 0
      %1908 = vmatpush.bf16.msra.mxu0 0
      %1909 = vmatpush.bf16.msra.mxu0 %v1900
      %1910 = vmatmul.bf16.gmra.mxu0 %v1888
      %v1911 = vpop.f32.mrf.mxu0
      %v1912 = vadd.f32 0.0, %v1911
      %v1913 = vpop.f32.mrf.mxu0
      %v1914 = vadd.f32 0.0, %v1913
      %1915 = vmatmul.bf16.gmra.mxu0 %v1891
      %v1916 = vpop.f32.mrf.mxu0
      %v1917 = vadd.f32 0.0, %v1916
      %v1918 = vpop.f32.mrf.mxu0
      %v1919 = vadd.f32 0.0, %v1918
      %1920 = vmatmul.bf16.gmra.mxu0 %v1894
      %v1921 = vpop.f32.mrf.mxu0
      %v1922 = vadd.f32 0.0, %v1921
      %v1923 = vpop.f32.mrf.mxu0
      %v1924 = vadd.f32 0.0, %v1923
      %1925 = vmatmul.bf16.gmra.mxu0 %v1897
      %v1926 = vpop.f32.mrf.mxu0
      %v1927 = vadd.f32 0.0, %v1926
      %v1928 = vpop.f32.mrf.mxu0
      %v1929 = vadd.f32 0.0, %v1928
      %1930 = vdwg.mxu0
      %v1931 = vadd.f32 %v1856, %v1912
      %v1932 = vadd.f32 %v1857, %v1914
      %v1933 = vadd.f32 %v1858, %v1917
      %v1934 = vadd.f32 %v1859, %v1919
      %v1935 = vadd.f32 %v1860, %v1922
      %v1936 = vadd.f32 %v1861, %v1924
      %v1937 = vadd.f32 %v1862, %v1927
      %v1938 = vadd.f32 %v1863, %v1929
      %v1939 = vld [vmem:[%s1789] sm:$0xf]
      %v1940 = vld [vmem:[%s1789 + $0x4] sm:$0x1]
      %v1941 = vld [vmem:[%s1789 + $0x8] sm:$0xf]
      %v1942 = vld [vmem:[%s1789 + $0xc] sm:$0x1]
      %v1943 = vld [vmem:[%s1789 + $0x10] sm:$0xf]
      %v1944 = vld [vmem:[%s1789 + $0x14] sm:$0x1]
      %v1945 = vld [vmem:[%s1789 + $0x18] sm:$0xf]
      %v1946 = vld [vmem:[%s1789 + $0x1c] sm:$0x1]
      %v1947 = vld [vmem:[%s1789 + $0x20] sm:$0xf]
      %v1948 = vld [vmem:[%s1789 + $0x24] sm:$0x1]
      %v1949 = vld [vmem:[%s1789 + $0x28] sm:$0xf]
      %v1950 = vld [vmem:[%s1789 + $0x2c] sm:$0x1]
      %v1951 = vld [vmem:[%s1789 + $0x30] sm:$0xf]
      %v1952 = vld [vmem:[%s1789 + $0x34] sm:$0x1]
      %v1953 = vld [vmem:[%s1789 + $0x38] sm:$0xf]
      %v1954 = vld [vmem:[%s1789 + $0x3c] sm:$0x1]
      %v1955 = vunpack.c.l.bf16 %v1939
      %v1956 = vunpack.c.l.bf16 %v1940
      %v1957 = vunpack.c.l.bf16 %v1941
      %v1958 = vunpack.c.l.bf16 %v1942
      %v1959 = vunpack.c.l.bf16 %v1943
      %v1960 = vunpack.c.l.bf16 %v1944
      %v1961 = vunpack.c.l.bf16 %v1945
      %v1962 = vunpack.c.l.bf16 %v1946
      %v1963 = vunpack.c.l.bf16 %v1947
      %v1964 = vunpack.c.l.bf16 %v1948
      %v1965 = vunpack.c.l.bf16 %v1949
      %v1966 = vunpack.c.l.bf16 %v1950
      %v1967 = vunpack.c.l.bf16 %v1951
      %v1968 = vunpack.c.l.bf16 %v1952
      %v1969 = vunpack.c.l.bf16 %v1953
      %v1970 = vunpack.c.l.bf16 %v1954
      %v1987 = vrot.slane %v1955, 1
      %v1988 = vrot.slane %v1956, 1
      %v1989 = vsel %vm365, %v1987, %v1988
      %v1990 = vrot.slane %v1957, 1
      %v1991 = vrot.slane %v1958, 1
      %v1992 = vsel %vm365, %v1990, %v1991
      %v1993 = vrot.slane %v1959, 1
      %v1994 = vrot.slane %v1960, 1
      %v1995 = vsel %vm365, %v1993, %v1994
      %v1996 = vrot.slane %v1961, 1
      %v1997 = vrot.slane %v1962, 1
      %v1998 = vsel %vm365, %v1996, %v1997
      %v1999 = vrot.slane %v1963, 1
      %v2000 = vrot.slane %v1964, 1
      %v2001 = vsel %vm365, %v1999, %v2000
      %v2002 = vrot.slane %v1965, 1
      %v2003 = vrot.slane %v1966, 1
      %v2004 = vsel %vm365, %v2002, %v2003
      %v2005 = vrot.slane %v1967, 1
      %v2006 = vrot.slane %v1968, 1
      %v2007 = vsel %vm365, %v2005, %v2006
      %v2008 = vrot.slane %v1969, 1
      %v2009 = vrot.slane %v1970, 1
      %v2010 = vsel %vm365, %v2008, %v2009
      %v2019 = vpack.c.bf16 %v1992, %v1989
      %v2020 = vpack.c.bf16 %v1998, %v1995
      %v2021 = vpack.c.bf16 %v2004, %v2001
      %v2022 = vpack.c.bf16 %v2010, %v2007
      %s2023 = scalar_lea.vmem %s1, 34
      %v2024 = vld [vmem:[%s2023] sm:$0x3]
      %v2026 = vsel %vm227, %v2019, 0
      %v2029 = vsel %vm227, %v2020, 0
      %v2032 = vsel %vm227, %v2021, 0
      %v2035 = vsel %vm227, %v2022, 0
      %v2038 = vsel %vm240, %v2024, 0
      %2040 = vmatpush.bf16.msra.mxu0 0
      %2041 = vmatpush.bf16.msra.mxu0 0
      %2042 = vmatpush.bf16.msra.mxu0 0
      %2043 = vmatpush.bf16.msra.mxu0 0
      %2044 = vmatpush.bf16.msra.mxu0 0
      %2045 = vmatpush.bf16.msra.mxu0 0
      %2046 = vmatpush.bf16.msra.mxu0 0
      %2047 = vmatpush.bf16.msra.mxu0 %v2038
      %2048 = vmatmul.bf16.gmra.mxu0 %v2026
      %v2049 = vpop.f32.mrf.mxu0
      %v2050 = vadd.f32 0.0, %v2049
      %v2051 = vpop.f32.mrf.mxu0
      %v2052 = vadd.f32 0.0, %v2051
      %2053 = vmatmul.bf16.gmra.mxu0 %v2029
      %v2054 = vpop.f32.mrf.mxu0
      %v2055 = vadd.f32 0.0, %v2054
      %v2056 = vpop.f32.mrf.mxu0
      %v2057 = vadd.f32 0.0, %v2056
      %2058 = vmatmul.bf16.gmra.mxu0 %v2032
      %v2059 = vpop.f32.mrf.mxu0
      %v2060 = vadd.f32 0.0, %v2059
      %v2061 = vpop.f32.mrf.mxu0
      %v2062 = vadd.f32 0.0, %v2061
      %2063 = vmatmul.bf16.gmra.mxu0 %v2035
      %v2064 = vpop.f32.mrf.mxu0
      %v2065 = vadd.f32 0.0, %v2064
      %v2066 = vpop.f32.mrf.mxu0
      %v2067 = vadd.f32 0.0, %v2066
      %2068 = vdwg.mxu0
      %v2069 = vadd.f32 %v1931, %v2050
      %v2070 = vadd.f32 %v1932, %v2052
      %v2071 = vadd.f32 %v1933, %v2055
      %v2072 = vadd.f32 %v1934, %v2057
      %v2073 = vadd.f32 %v1935, %v2060
      %v2074 = vadd.f32 %v1936, %v2062
      %v2075 = vadd.f32 %v1937, %v2065
      %v2076 = vadd.f32 %v1938, %v2067
      %v2077 = vld [vmem:[%s1864] sm:$0xf]
      %v2078 = vld [vmem:[%s1864 + $0x4] sm:$0x1]
      %v2079 = vld [vmem:[%s1864 + $0x8] sm:$0xf]
      %v2080 = vld [vmem:[%s1864 + $0xc] sm:$0x1]
      %v2081 = vld [vmem:[%s1864 + $0x10] sm:$0xf]
      %v2082 = vld [vmem:[%s1864 + $0x14] sm:$0x1]
      %v2083 = vld [vmem:[%s1864 + $0x18] sm:$0xf]
      %v2084 = vld [vmem:[%s1864 + $0x1c] sm:$0x1]
      %v2085 = vld [vmem:[%s1864 + $0x20] sm:$0xf]
      %v2086 = vld [vmem:[%s1864 + $0x24] sm:$0x1]
      %v2087 = vld [vmem:[%s1864 + $0x28] sm:$0xf]
      %v2088 = vld [vmem:[%s1864 + $0x2c] sm:$0x1]
      %v2089 = vld [vmem:[%s1864 + $0x30] sm:$0xf]
      %v2090 = vld [vmem:[%s1864 + $0x34] sm:$0x1]
      %v2091 = vld [vmem:[%s1864 + $0x38] sm:$0xf]
      %v2092 = vld [vmem:[%s1864 + $0x3c] sm:$0x1]
      %v2093 = vunpack.c.l.bf16 %v2077
      %v2094 = vunpack.c.l.bf16 %v2078
      %v2095 = vunpack.c.l.bf16 %v2079
      %v2096 = vunpack.c.l.bf16 %v2080
      %v2097 = vunpack.c.l.bf16 %v2081
      %v2098 = vunpack.c.l.bf16 %v2082
      %v2099 = vunpack.c.l.bf16 %v2083
      %v2100 = vunpack.c.l.bf16 %v2084
      %v2101 = vunpack.c.l.bf16 %v2085
      %v2102 = vunpack.c.l.bf16 %v2086
      %v2103 = vunpack.c.l.bf16 %v2087
      %v2104 = vunpack.c.l.bf16 %v2088
      %v2105 = vunpack.c.l.bf16 %v2089
      %v2106 = vunpack.c.l.bf16 %v2090
      %v2107 = vunpack.c.l.bf16 %v2091
      %v2108 = vunpack.c.l.bf16 %v2092
      %v2125 = vrot.slane %v2093, 1
      %v2126 = vrot.slane %v2094, 1
      %v2127 = vsel %vm365, %v2125, %v2126
      %v2128 = vrot.slane %v2095, 1
      %v2129 = vrot.slane %v2096, 1
      %v2130 = vsel %vm365, %v2128, %v2129
      %v2131 = vrot.slane %v2097, 1
      %v2132 = vrot.slane %v2098, 1
      %v2133 = vsel %vm365, %v2131, %v2132
      %v2134 = vrot.slane %v2099, 1
      %v2135 = vrot.slane %v2100, 1
      %v2136 = vsel %vm365, %v2134, %v2135
      %v2137 = vrot.slane %v2101, 1
      %v2138 = vrot.slane %v2102, 1
      %v2139 = vsel %vm365, %v2137, %v2138
      %v2140 = vrot.slane %v2103, 1
      %v2141 = vrot.slane %v2104, 1
      %v2142 = vsel %vm365, %v2140, %v2141
      %v2143 = vrot.slane %v2105, 1
      %v2144 = vrot.slane %v2106, 1
      %v2145 = vsel %vm365, %v2143, %v2144
      %v2146 = vrot.slane %v2107, 1
      %v2147 = vrot.slane %v2108, 1
      %v2148 = vsel %vm365, %v2146, %v2147
      %v2157 = vpack.c.bf16 %v2130, %v2127
      %v2158 = vpack.c.bf16 %v2136, %v2133
      %v2159 = vpack.c.bf16 %v2142, %v2139
      %v2160 = vpack.c.bf16 %v2148, %v2145
      %s2161 = scalar_lea.vmem %s1, 36
      %v2162 = vld [vmem:[%s2161] sm:$0x3]
      %v2164 = vsel %vm227, %v2157, 0
      %v2167 = vsel %vm227, %v2158, 0
      %v2170 = vsel %vm227, %v2159, 0
      %v2173 = vsel %vm227, %v2160, 0
      %v2176 = vsel %vm240, %v2162, 0
      %2178 = vmatpush.bf16.msra.mxu0 0
      %2179 = vmatpush.bf16.msra.mxu0 0
      %2180 = vmatpush.bf16.msra.mxu0 0
      %2181 = vmatpush.bf16.msra.mxu0 0
      %2182 = vmatpush.bf16.msra.mxu0 0
      %2183 = vmatpush.bf16.msra.mxu0 0
      %2184 = vmatpush.bf16.msra.mxu0 0
      %2185 = vmatpush.bf16.msra.mxu0 %v2176
      %2186 = vmatmul.bf16.gmra.mxu0 %v2164
      %v2187 = vpop.f32.mrf.mxu0
      %v2188 = vadd.f32 0.0, %v2187
      %v2189 = vpop.f32.mrf.mxu0
      %v2190 = vadd.f32 0.0, %v2189
      %2191 = vmatmul.bf16.gmra.mxu0 %v2167
      %v2192 = vpop.f32.mrf.mxu0
      %v2193 = vadd.f32 0.0, %v2192
      %v2194 = vpop.f32.mrf.mxu0
      %v2195 = vadd.f32 0.0, %v2194
      %2196 = vmatmul.bf16.gmra.mxu0 %v2170
      %v2197 = vpop.f32.mrf.mxu0
      %v2198 = vadd.f32 0.0, %v2197
      %v2199 = vpop.f32.mrf.mxu0
      %v2200 = vadd.f32 0.0, %v2199
      %2201 = vmatmul.bf16.gmra.mxu0 %v2173
      %v2202 = vpop.f32.mrf.mxu0
      %v2203 = vadd.f32 0.0, %v2202
      %v2204 = vpop.f32.mrf.mxu0
      %v2205 = vadd.f32 0.0, %v2204
      %2206 = vdwg.mxu0
      %v2207 = vadd.f32 %v2069, %v2188
      %v2208 = vadd.f32 %v2070, %v2190
      %v2209 = vadd.f32 %v2071, %v2193
      %v2210 = vadd.f32 %v2072, %v2195
      %v2211 = vadd.f32 %v2073, %v2198
      %v2212 = vadd.f32 %v2074, %v2200
      %v2213 = vadd.f32 %v2075, %v2203
      %v2214 = vadd.f32 %v2076, %v2205
      %v2215 = vld [vmem:[%s1789] sm:$0xe]
      %v2216 = vld [vmem:[%s1789 + $0x8] sm:$0xe]
      %v2217 = vld [vmem:[%s1789 + $0x10] sm:$0xe]
      %v2218 = vld [vmem:[%s1789 + $0x18] sm:$0xe]
      %v2219 = vld [vmem:[%s1789 + $0x20] sm:$0xe]
      %v2220 = vld [vmem:[%s1789 + $0x28] sm:$0xe]
      %v2221 = vld [vmem:[%s1789 + $0x30] sm:$0xe]
      %v2222 = vld [vmem:[%s1789 + $0x38] sm:$0xe]
      %v2223 = vunpack.c.l.bf16 %v2215
      %v2224 = vunpack.c.l.bf16 %v2216
      %v2225 = vunpack.c.l.bf16 %v2217
      %v2226 = vunpack.c.l.bf16 %v2218
      %v2227 = vunpack.c.l.bf16 %v2219
      %v2228 = vunpack.c.l.bf16 %v2220
      %v2229 = vunpack.c.l.bf16 %v2221
      %v2230 = vunpack.c.l.bf16 %v2222
      %v2239 = vrot.slane %v2223, 2
      %v2240 = vrot.slane %v1956, 2
      %v2241 = vsel %vm618, %v2239, %v2240
      %v2242 = vrot.slane %v2224, 2
      %v2243 = vrot.slane %v1958, 2
      %v2244 = vsel %vm618, %v2242, %v2243
      %v2245 = vrot.slane %v2225, 2
      %v2246 = vrot.slane %v1960, 2
      %v2247 = vsel %vm618, %v2245, %v2246
      %v2248 = vrot.slane %v2226, 2
      %v2249 = vrot.slane %v1962, 2
      %v2250 = vsel %vm618, %v2248, %v2249
      %v2251 = vrot.slane %v2227, 2
      %v2252 = vrot.slane %v1964, 2
      %v2253 = vsel %vm618, %v2251, %v2252
      %v2254 = vrot.slane %v2228, 2
      %v2255 = vrot.slane %v1966, 2
      %v2256 = vsel %vm618, %v2254, %v2255
      %v2257 = vrot.slane %v2229, 2
      %v2258 = vrot.slane %v1968, 2
      %v2259 = vsel %vm618, %v2257, %v2258
      %v2260 = vrot.slane %v2230, 2
      %v2261 = vrot.slane %v1970, 2
      %v2262 = vsel %vm618, %v2260, %v2261
      %v2271 = vpack.c.bf16 %v2244, %v2241
      %v2272 = vpack.c.bf16 %v2250, %v2247
      %v2273 = vpack.c.bf16 %v2256, %v2253
      %v2274 = vpack.c.bf16 %v2262, %v2259
      %s2275 = scalar_lea.vmem %s1, 38
      %v2276 = vld [vmem:[%s2275] sm:$0x3]
      %v2278 = vsel %vm227, %v2271, 0
      %v2281 = vsel %vm227, %v2272, 0
      %v2284 = vsel %vm227, %v2273, 0
      %v2287 = vsel %vm227, %v2274, 0
      %v2290 = vsel %vm240, %v2276, 0
      %2292 = vmatpush.bf16.msra.mxu0 0
      %2293 = vmatpush.bf16.msra.mxu0 0
      %2294 = vmatpush.bf16.msra.mxu0 0
      %2295 = vmatpush.bf16.msra.mxu0 0
      %2296 = vmatpush.bf16.msra.mxu0 0
      %2297 = vmatpush.bf16.msra.mxu0 0
      %2298 = vmatpush.bf16.msra.mxu0 0
      %2299 = vmatpush.bf16.msra.mxu0 %v2290
      %2300 = vmatmul.bf16.gmra.mxu0 %v2278
      %v2301 = vpop.f32.mrf.mxu0
      %v2302 = vadd.f32 0.0, %v2301
      %v2303 = vpop.f32.mrf.mxu0
      %v2304 = vadd.f32 0.0, %v2303
      %2305 = vmatmul.bf16.gmra.mxu0 %v2281
      %v2306 = vpop.f32.mrf.mxu0
      %v2307 = vadd.f32 0.0, %v2306
      %v2308 = vpop.f32.mrf.mxu0
      %v2309 = vadd.f32 0.0, %v2308
      %2310 = vmatmul.bf16.gmra.mxu0 %v2284
      %v2311 = vpop.f32.mrf.mxu0
      %v2312 = vadd.f32 0.0, %v2311
      %v2313 = vpop.f32.mrf.mxu0
      %v2314 = vadd.f32 0.0, %v2313
      %2315 = vmatmul.bf16.gmra.mxu0 %v2287
      %v2316 = vpop.f32.mrf.mxu0
      %v2317 = vadd.f32 0.0, %v2316
      %v2318 = vpop.f32.mrf.mxu0
      %v2319 = vadd.f32 0.0, %v2318
      %2320 = vdwg.mxu0
      %v2321 = vadd.f32 %v2207, %v2302
      %v2322 = vadd.f32 %v2208, %v2304
      %v2323 = vadd.f32 %v2209, %v2307
      %v2324 = vadd.f32 %v2210, %v2309
      %v2325 = vadd.f32 %v2211, %v2312
      %v2326 = vadd.f32 %v2212, %v2314
      %v2327 = vadd.f32 %v2213, %v2317
      %v2328 = vadd.f32 %v2214, %v2319
      %s2329 = scalar_lea.vmem %s172, 16
      %v2330 = vld [vmem:[%s2329] sm:$0xf]
      %v2331 = vld [vmem:[%s2329 + $0x8] sm:$0xf]
      %v2332 = vld [vmem:[%s2329 + $0x10] sm:$0xf]
      %v2333 = vld [vmem:[%s2329 + $0x18] sm:$0xf]
      %v2334 = vld [vmem:[%s2329 + $0x20] sm:$0xf]
      %v2335 = vld [vmem:[%s2329 + $0x28] sm:$0xf]
      %v2336 = vld [vmem:[%s2329 + $0x30] sm:$0xf]
      %v2337 = vld [vmem:[%s2329 + $0x38] sm:$0xf]
      %v2338 = vunpack.c.l.bf16 %v2330
      %v2339 = vunpack.c.l.bf16 %v2331
      %v2340 = vunpack.c.l.bf16 %v2332
      %v2341 = vunpack.c.l.bf16 %v2333
      %v2342 = vunpack.c.l.bf16 %v2334
      %v2343 = vunpack.c.l.bf16 %v2335
      %v2344 = vunpack.c.l.bf16 %v2336
      %v2345 = vunpack.c.l.bf16 %v2337
      %v2346 = vpack.c.bf16 %v2339, %v2338
      %v2347 = vpack.c.bf16 %v2341, %v2340
      %v2348 = vpack.c.bf16 %v2343, %v2342
      %v2349 = vpack.c.bf16 %v2345, %v2344
      %s2350 = scalar_lea.vmem %s1, 40
      %v2351 = vld [vmem:[%s2350] sm:$0x3]
      %v2353 = vsel %vm227, %v2346, 0
      %v2356 = vsel %vm227, %v2347, 0
      %v2359 = vsel %vm227, %v2348, 0
      %v2362 = vsel %vm227, %v2349, 0
      %v2365 = vsel %vm240, %v2351, 0
      %2367 = vmatpush.bf16.msra.mxu0 0
      %2368 = vmatpush.bf16.msra.mxu0 0
      %2369 = vmatpush.bf16.msra.mxu0 0
      %2370 = vmatpush.bf16.msra.mxu0 0
      %2371 = vmatpush.bf16.msra.mxu0 0
      %2372 = vmatpush.bf16.msra.mxu0 0
      %2373 = vmatpush.bf16.msra.mxu0 0
      %2374 = vmatpush.bf16.msra.mxu0 %v2365
      %2375 = vmatmul.bf16.gmra.mxu0 %v2353
      %v2376 = vpop.f32.mrf.mxu0
      %v2377 = vadd.f32 0.0, %v2376
      %v2378 = vpop.f32.mrf.mxu0
      %v2379 = vadd.f32 0.0, %v2378
      %2380 = vmatmul.bf16.gmra.mxu0 %v2356
      %v2381 = vpop.f32.mrf.mxu0
      %v2382 = vadd.f32 0.0, %v2381
      %v2383 = vpop.f32.mrf.mxu0
      %v2384 = vadd.f32 0.0, %v2383
      %2385 = vmatmul.bf16.gmra.mxu0 %v2359
      %v2386 = vpop.f32.mrf.mxu0
      %v2387 = vadd.f32 0.0, %v2386
      %v2388 = vpop.f32.mrf.mxu0
      %v2389 = vadd.f32 0.0, %v2388
      %2390 = vmatmul.bf16.gmra.mxu0 %v2362
      %v2391 = vpop.f32.mrf.mxu0
      %v2392 = vadd.f32 0.0, %v2391
      %v2393 = vpop.f32.mrf.mxu0
      %v2394 = vadd.f32 0.0, %v2393
      %2395 = vdwg.mxu0
      %v2396 = vadd.f32 %v2321, %v2377
      %v2397 = vadd.f32 %v2322, %v2379
      %v2398 = vadd.f32 %v2323, %v2382
      %v2399 = vadd.f32 %v2324, %v2384
      %v2400 = vadd.f32 %v2325, %v2387
      %v2401 = vadd.f32 %v2326, %v2389
      %v2402 = vadd.f32 %v2327, %v2392
      %v2403 = vadd.f32 %v2328, %v2394
      %s2404 = scalar_lea.vmem %s172, 96
      %v2405 = vld [vmem:[%s2404] sm:$0xf]
      %v2406 = vld [vmem:[%s2404 + $0x8] sm:$0xf]
      %v2407 = vld [vmem:[%s2404 + $0x10] sm:$0xf]
      %v2408 = vld [vmem:[%s2404 + $0x18] sm:$0xf]
      %v2409 = vld [vmem:[%s2404 + $0x20] sm:$0xf]
      %v2410 = vld [vmem:[%s2404 + $0x28] sm:$0xf]
      %v2411 = vld [vmem:[%s2404 + $0x30] sm:$0xf]
      %v2412 = vld [vmem:[%s2404 + $0x38] sm:$0xf]
      %v2413 = vunpack.c.l.bf16 %v2405
      %v2414 = vunpack.c.l.bf16 %v2406
      %v2415 = vunpack.c.l.bf16 %v2407
      %v2416 = vunpack.c.l.bf16 %v2408
      %v2417 = vunpack.c.l.bf16 %v2409
      %v2418 = vunpack.c.l.bf16 %v2410
      %v2419 = vunpack.c.l.bf16 %v2411
      %v2420 = vunpack.c.l.bf16 %v2412
      %v2421 = vpack.c.bf16 %v2414, %v2413
      %v2422 = vpack.c.bf16 %v2416, %v2415
      %v2423 = vpack.c.bf16 %v2418, %v2417
      %v2424 = vpack.c.bf16 %v2420, %v2419
      %s2425 = scalar_lea.vmem %s1, 42
      %v2426 = vld [vmem:[%s2425] sm:$0x3]
      %v2428 = vsel %vm227, %v2421, 0
      %v2431 = vsel %vm227, %v2422, 0
      %v2434 = vsel %vm227, %v2423, 0
      %v2437 = vsel %vm227, %v2424, 0
      %v2440 = vsel %vm240, %v2426, 0
      %2442 = vmatpush.bf16.msra.mxu0 0
      %2443 = vmatpush.bf16.msra.mxu0 0
      %2444 = vmatpush.bf16.msra.mxu0 0
      %2445 = vmatpush.bf16.msra.mxu0 0
      %2446 = vmatpush.bf16.msra.mxu0 0
      %2447 = vmatpush.bf16.msra.mxu0 0
      %2448 = vmatpush.bf16.msra.mxu0 0
      %2449 = vmatpush.bf16.msra.mxu0 %v2440
      %2450 = vmatmul.bf16.gmra.mxu0 %v2428
      %v2451 = vpop.f32.mrf.mxu0
      %v2452 = vadd.f32 0.0, %v2451
      %v2453 = vpop.f32.mrf.mxu0
      %v2454 = vadd.f32 0.0, %v2453
      %2455 = vmatmul.bf16.gmra.mxu0 %v2431
      %v2456 = vpop.f32.mrf.mxu0
      %v2457 = vadd.f32 0.0, %v2456
      %v2458 = vpop.f32.mrf.mxu0
      %v2459 = vadd.f32 0.0, %v2458
      %2460 = vmatmul.bf16.gmra.mxu0 %v2434
      %v2461 = vpop.f32.mrf.mxu0
      %v2462 = vadd.f32 0.0, %v2461
      %v2463 = vpop.f32.mrf.mxu0
      %v2464 = vadd.f32 0.0, %v2463
      %2465 = vmatmul.bf16.gmra.mxu0 %v2437
      %v2466 = vpop.f32.mrf.mxu0
      %v2467 = vadd.f32 0.0, %v2466
      %v2468 = vpop.f32.mrf.mxu0
      %v2469 = vadd.f32 0.0, %v2468
      %2470 = vdwg.mxu0
      %v2471 = vadd.f32 %v2396, %v2452
      %v2472 = vadd.f32 %v2397, %v2454
      %v2473 = vadd.f32 %v2398, %v2457
      %v2474 = vadd.f32 %v2399, %v2459
      %v2475 = vadd.f32 %v2400, %v2462
      %v2476 = vadd.f32 %v2401, %v2464
      %v2477 = vadd.f32 %v2402, %v2467
      %v2478 = vadd.f32 %v2403, %v2469
      %v2479 = vld [vmem:[%s2329] sm:$0xf]
      %v2480 = vld [vmem:[%s2329 + $0x4] sm:$0x1]
      %v2481 = vld [vmem:[%s2329 + $0x8] sm:$0xf]
      %v2482 = vld [vmem:[%s2329 + $0xc] sm:$0x1]
      %v2483 = vld [vmem:[%s2329 + $0x10] sm:$0xf]
      %v2484 = vld [vmem:[%s2329 + $0x14] sm:$0x1]
      %v2485 = vld [vmem:[%s2329 + $0x18] sm:$0xf]
      %v2486 = vld [vmem:[%s2329 + $0x1c] sm:$0x1]
      %v2487 = vld [vmem:[%s2329 + $0x20] sm:$0xf]
      %v2488 = vld [vmem:[%s2329 + $0x24] sm:$0x1]
      %v2489 = vld [vmem:[%s2329 + $0x28] sm:$0xf]
      %v2490 = vld [vmem:[%s2329 + $0x2c] sm:$0x1]
      %v2491 = vld [vmem:[%s2329 + $0x30] sm:$0xf]
      %v2492 = vld [vmem:[%s2329 + $0x34] sm:$0x1]
      %v2493 = vld [vmem:[%s2329 + $0x38] sm:$0xf]
      %v2494 = vld [vmem:[%s2329 + $0x3c] sm:$0x1]
      %v2495 = vunpack.c.l.bf16 %v2479
      %v2496 = vunpack.c.l.bf16 %v2480
      %v2497 = vunpack.c.l.bf16 %v2481
      %v2498 = vunpack.c.l.bf16 %v2482
      %v2499 = vunpack.c.l.bf16 %v2483
      %v2500 = vunpack.c.l.bf16 %v2484
      %v2501 = vunpack.c.l.bf16 %v2485
      %v2502 = vunpack.c.l.bf16 %v2486
      %v2503 = vunpack.c.l.bf16 %v2487
      %v2504 = vunpack.c.l.bf16 %v2488
      %v2505 = vunpack.c.l.bf16 %v2489
      %v2506 = vunpack.c.l.bf16 %v2490
      %v2507 = vunpack.c.l.bf16 %v2491
      %v2508 = vunpack.c.l.bf16 %v2492
      %v2509 = vunpack.c.l.bf16 %v2493
      %v2510 = vunpack.c.l.bf16 %v2494
      %v2527 = vrot.slane %v2495, 1
      %v2528 = vrot.slane %v2496, 1
      %v2529 = vsel %vm365, %v2527, %v2528
      %v2530 = vrot.slane %v2497, 1
      %v2531 = vrot.slane %v2498, 1
      %v2532 = vsel %vm365, %v2530, %v2531
      %v2533 = vrot.slane %v2499, 1
      %v2534 = vrot.slane %v2500, 1
      %v2535 = vsel %vm365, %v2533, %v2534
      %v2536 = vrot.slane %v2501, 1
      %v2537 = vrot.slane %v2502, 1
      %v2538 = vsel %vm365, %v2536, %v2537
      %v2539 = vrot.slane %v2503, 1
      %v2540 = vrot.slane %v2504, 1
      %v2541 = vsel %vm365, %v2539, %v2540
      %v2542 = vrot.slane %v2505, 1
      %v2543 = vrot.slane %v2506, 1
      %v2544 = vsel %vm365, %v2542, %v2543
      %v2545 = vrot.slane %v2507, 1
      %v2546 = vrot.slane %v2508, 1
      %v2547 = vsel %vm365, %v2545, %v2546
      %v2548 = vrot.slane %v2509, 1
      %v2549 = vrot.slane %v2510, 1
      %v2550 = vsel %vm365, %v2548, %v2549
      %v2559 = vpack.c.bf16 %v2532, %v2529
      %v2560 = vpack.c.bf16 %v2538, %v2535
      %v2561 = vpack.c.bf16 %v2544, %v2541
      %v2562 = vpack.c.bf16 %v2550, %v2547
      %s2563 = scalar_lea.vmem %s1, 44
      %v2564 = vld [vmem:[%s2563] sm:$0x3]
      %v2566 = vsel %vm227, %v2559, 0
      %v2569 = vsel %vm227, %v2560, 0
      %v2572 = vsel %vm227, %v2561, 0
      %v2575 = vsel %vm227, %v2562, 0
      %v2578 = vsel %vm240, %v2564, 0
      %2580 = vmatpush.bf16.msra.mxu0 0
      %2581 = vmatpush.bf16.msra.mxu0 0
      %2582 = vmatpush.bf16.msra.mxu0 0
      %2583 = vmatpush.bf16.msra.mxu0 0
      %2584 = vmatpush.bf16.msra.mxu0 0
      %2585 = vmatpush.bf16.msra.mxu0 0
      %2586 = vmatpush.bf16.msra.mxu0 0
      %2587 = vmatpush.bf16.msra.mxu0 %v2578
      %2588 = vmatmul.bf16.gmra.mxu0 %v2566
      %v2589 = vpop.f32.mrf.mxu0
      %v2590 = vadd.f32 0.0, %v2589
      %v2591 = vpop.f32.mrf.mxu0
      %v2592 = vadd.f32 0.0, %v2591
      %2593 = vmatmul.bf16.gmra.mxu0 %v2569
      %v2594 = vpop.f32.mrf.mxu0
      %v2595 = vadd.f32 0.0, %v2594
      %v2596 = vpop.f32.mrf.mxu0
      %v2597 = vadd.f32 0.0, %v2596
      %2598 = vmatmul.bf16.gmra.mxu0 %v2572
      %v2599 = vpop.f32.mrf.mxu0
      %v2600 = vadd.f32 0.0, %v2599
      %v2601 = vpop.f32.mrf.mxu0
      %v2602 = vadd.f32 0.0, %v2601
      %2603 = vmatmul.bf16.gmra.mxu0 %v2575
      %v2604 = vpop.f32.mrf.mxu0
      %v2605 = vadd.f32 0.0, %v2604
      %v2606 = vpop.f32.mrf.mxu0
      %v2607 = vadd.f32 0.0, %v2606
      %2608 = vdwg.mxu0
      %v2609 = vadd.f32 %v2471, %v2590
      %v2610 = vadd.f32 %v2472, %v2592
      %v2611 = vadd.f32 %v2473, %v2595
      %v2612 = vadd.f32 %v2474, %v2597
      %v2613 = vadd.f32 %v2475, %v2600
      %v2614 = vadd.f32 %v2476, %v2602
      %v2615 = vadd.f32 %v2477, %v2605
      %v2616 = vadd.f32 %v2478, %v2607
      %v2617 = vld [vmem:[%s2404] sm:$0xf]
      %v2618 = vld [vmem:[%s2404 + $0x4] sm:$0x1]
      %v2619 = vld [vmem:[%s2404 + $0x8] sm:$0xf]
      %v2620 = vld [vmem:[%s2404 + $0xc] sm:$0x1]
      %v2621 = vld [vmem:[%s2404 + $0x10] sm:$0xf]
      %v2622 = vld [vmem:[%s2404 + $0x14] sm:$0x1]
      %v2623 = vld [vmem:[%s2404 + $0x18] sm:$0xf]
      %v2624 = vld [vmem:[%s2404 + $0x1c] sm:$0x1]
      %v2625 = vld [vmem:[%s2404 + $0x20] sm:$0xf]
      %v2626 = vld [vmem:[%s2404 + $0x24] sm:$0x1]
      %v2627 = vld [vmem:[%s2404 + $0x28] sm:$0xf]
      %v2628 = vld [vmem:[%s2404 + $0x2c] sm:$0x1]
      %v2629 = vld [vmem:[%s2404 + $0x30] sm:$0xf]
      %v2630 = vld [vmem:[%s2404 + $0x34] sm:$0x1]
      %v2631 = vld [vmem:[%s2404 + $0x38] sm:$0xf]
      %v2632 = vld [vmem:[%s2404 + $0x3c] sm:$0x1]
      %v2633 = vunpack.c.l.bf16 %v2617
      %v2634 = vunpack.c.l.bf16 %v2618
      %v2635 = vunpack.c.l.bf16 %v2619
      %v2636 = vunpack.c.l.bf16 %v2620
      %v2637 = vunpack.c.l.bf16 %v2621
      %v2638 = vunpack.c.l.bf16 %v2622
      %v2639 = vunpack.c.l.bf16 %v2623
      %v2640 = vunpack.c.l.bf16 %v2624
      %v2641 = vunpack.c.l.bf16 %v2625
      %v2642 = vunpack.c.l.bf16 %v2626
      %v2643 = vunpack.c.l.bf16 %v2627
      %v2644 = vunpack.c.l.bf16 %v2628
      %v2645 = vunpack.c.l.bf16 %v2629
      %v2646 = vunpack.c.l.bf16 %v2630
      %v2647 = vunpack.c.l.bf16 %v2631
      %v2648 = vunpack.c.l.bf16 %v2632
      %v2665 = vrot.slane %v2633, 1
      %v2666 = vrot.slane %v2634, 1
      %v2667 = vsel %vm365, %v2665, %v2666
      %v2668 = vrot.slane %v2635, 1
      %v2669 = vrot.slane %v2636, 1
      %v2670 = vsel %vm365, %v2668, %v2669
      %v2671 = vrot.slane %v2637, 1
      %v2672 = vrot.slane %v2638, 1
      %v2673 = vsel %vm365, %v2671, %v2672
      %v2674 = vrot.slane %v2639, 1
      %v2675 = vrot.slane %v2640, 1
      %v2676 = vsel %vm365, %v2674, %v2675
      %v2677 = vrot.slane %v2641, 1
      %v2678 = vrot.slane %v2642, 1
      %v2679 = vsel %vm365, %v2677, %v2678
      %v2680 = vrot.slane %v2643, 1
      %v2681 = vrot.slane %v2644, 1
      %v2682 = vsel %vm365, %v2680, %v2681
      %v2683 = vrot.slane %v2645, 1
      %v2684 = vrot.slane %v2646, 1
      %v2685 = vsel %vm365, %v2683, %v2684
      %v2686 = vrot.slane %v2647, 1
      %v2687 = vrot.slane %v2648, 1
      %v2688 = vsel %vm365, %v2686, %v2687
      %v2697 = vpack.c.bf16 %v2670, %v2667
      %v2698 = vpack.c.bf16 %v2676, %v2673
      %v2699 = vpack.c.bf16 %v2682, %v2679
      %v2700 = vpack.c.bf16 %v2688, %v2685
      %s2701 = scalar_lea.vmem %s1, 46
      %v2702 = vld [vmem:[%s2701] sm:$0x3]
      %v2704 = vsel %vm227, %v2697, 0
      %v2707 = vsel %vm227, %v2698, 0
      %v2710 = vsel %vm227, %v2699, 0
      %v2713 = vsel %vm227, %v2700, 0
      %v2716 = vsel %vm240, %v2702, 0
      %2718 = vmatpush.bf16.msra.mxu0 0
      %2719 = vmatpush.bf16.msra.mxu0 0
      %2720 = vmatpush.bf16.msra.mxu0 0
      %2721 = vmatpush.bf16.msra.mxu0 0
      %2722 = vmatpush.bf16.msra.mxu0 0
      %2723 = vmatpush.bf16.msra.mxu0 0
      %2724 = vmatpush.bf16.msra.mxu0 0
      %2725 = vmatpush.bf16.msra.mxu0 %v2716
      %2726 = vmatmul.bf16.gmra.mxu0 %v2704
      %v2727 = vpop.f32.mrf.mxu0
      %v2728 = vadd.f32 0.0, %v2727
      %v2729 = vpop.f32.mrf.mxu0
      %v2730 = vadd.f32 0.0, %v2729
      %2731 = vmatmul.bf16.gmra.mxu0 %v2707
      %v2732 = vpop.f32.mrf.mxu0
      %v2733 = vadd.f32 0.0, %v2732
      %v2734 = vpop.f32.mrf.mxu0
      %v2735 = vadd.f32 0.0, %v2734
      %2736 = vmatmul.bf16.gmra.mxu0 %v2710
      %v2737 = vpop.f32.mrf.mxu0
      %v2738 = vadd.f32 0.0, %v2737
      %v2739 = vpop.f32.mrf.mxu0
      %v2740 = vadd.f32 0.0, %v2739
      %2741 = vmatmul.bf16.gmra.mxu0 %v2713
      %v2742 = vpop.f32.mrf.mxu0
      %v2743 = vadd.f32 0.0, %v2742
      %v2744 = vpop.f32.mrf.mxu0
      %v2745 = vadd.f32 0.0, %v2744
      %2746 = vdwg.mxu0
      %v2747 = vadd.f32 %v2609, %v2728
      %v2748 = vadd.f32 %v2610, %v2730
      %v2749 = vadd.f32 %v2611, %v2733
      %v2750 = vadd.f32 %v2612, %v2735
      %v2751 = vadd.f32 %v2613, %v2738
      %v2752 = vadd.f32 %v2614, %v2740
      %v2753 = vadd.f32 %v2615, %v2743
      %v2754 = vadd.f32 %v2616, %v2745
      %v2755 = vld [vmem:[%s2329] sm:$0xe]
      %v2756 = vld [vmem:[%s2329 + $0x8] sm:$0xe]
      %v2757 = vld [vmem:[%s2329 + $0x10] sm:$0xe]
      %v2758 = vld [vmem:[%s2329 + $0x18] sm:$0xe]
      %v2759 = vld [vmem:[%s2329 + $0x20] sm:$0xe]
      %v2760 = vld [vmem:[%s2329 + $0x28] sm:$0xe]
      %v2761 = vld [vmem:[%s2329 + $0x30] sm:$0xe]
      %v2762 = vld [vmem:[%s2329 + $0x38] sm:$0xe]
      %v2763 = vunpack.c.l.bf16 %v2755
      %v2764 = vunpack.c.l.bf16 %v2756
      %v2765 = vunpack.c.l.bf16 %v2757
      %v2766 = vunpack.c.l.bf16 %v2758
      %v2767 = vunpack.c.l.bf16 %v2759
      %v2768 = vunpack.c.l.bf16 %v2760
      %v2769 = vunpack.c.l.bf16 %v2761
      %v2770 = vunpack.c.l.bf16 %v2762
      %v2779 = vrot.slane %v2763, 2
      %v2780 = vrot.slane %v2496, 2
      %v2781 = vsel %vm618, %v2779, %v2780
      %v2782 = vrot.slane %v2764, 2
      %v2783 = vrot.slane %v2498, 2
      %v2784 = vsel %vm618, %v2782, %v2783
      %v2785 = vrot.slane %v2765, 2
      %v2786 = vrot.slane %v2500, 2
      %v2787 = vsel %vm618, %v2785, %v2786
      %v2788 = vrot.slane %v2766, 2
      %v2789 = vrot.slane %v2502, 2
      %v2790 = vsel %vm618, %v2788, %v2789
      %v2791 = vrot.slane %v2767, 2
      %v2792 = vrot.slane %v2504, 2
      %v2793 = vsel %vm618, %v2791, %v2792
      %v2794 = vrot.slane %v2768, 2
      %v2795 = vrot.slane %v2506, 2
      %v2796 = vsel %vm618, %v2794, %v2795
      %v2797 = vrot.slane %v2769, 2
      %v2798 = vrot.slane %v2508, 2
      %v2799 = vsel %vm618, %v2797, %v2798
      %v2800 = vrot.slane %v2770, 2
      %v2801 = vrot.slane %v2510, 2
      %v2802 = vsel %vm618, %v2800, %v2801
      %v2811 = vpack.c.bf16 %v2784, %v2781
      %v2812 = vpack.c.bf16 %v2790, %v2787
      %v2813 = vpack.c.bf16 %v2796, %v2793
      %v2814 = vpack.c.bf16 %v2802, %v2799
      %s2815 = scalar_lea.vmem %s1, 48
      %v2816 = vld [vmem:[%s2815] sm:$0x3]
      %v2818 = vsel %vm227, %v2811, 0
      %v2821 = vsel %vm227, %v2812, 0
      %v2824 = vsel %vm227, %v2813, 0
      %v2827 = vsel %vm227, %v2814, 0
      %v2830 = vsel %vm240, %v2816, 0
      %2832 = vmatpush.bf16.msra.mxu0 0
      %2833 = vmatpush.bf16.msra.mxu0 0
      %2834 = vmatpush.bf16.msra.mxu0 0
      %2835 = vmatpush.bf16.msra.mxu0 0
      %2836 = vmatpush.bf16.msra.mxu0 0
      %2837 = vmatpush.bf16.msra.mxu0 0
      %2838 = vmatpush.bf16.msra.mxu0 0
      %2839 = vmatpush.bf16.msra.mxu0 %v2830
      %2840 = vmatmul.bf16.gmra.mxu0 %v2818
      %v2841 = vpop.f32.mrf.mxu0
      %v2842 = vadd.f32 0.0, %v2841
      %v2843 = vpop.f32.mrf.mxu0
      %v2844 = vadd.f32 0.0, %v2843
      %2845 = vmatmul.bf16.gmra.mxu0 %v2821
      %v2846 = vpop.f32.mrf.mxu0
      %v2847 = vadd.f32 0.0, %v2846
      %v2848 = vpop.f32.mrf.mxu0
      %v2849 = vadd.f32 0.0, %v2848
      %2850 = vmatmul.bf16.gmra.mxu0 %v2824
      %v2851 = vpop.f32.mrf.mxu0
      %v2852 = vadd.f32 0.0, %v2851
      %v2853 = vpop.f32.mrf.mxu0
      %v2854 = vadd.f32 0.0, %v2853
      %2855 = vmatmul.bf16.gmra.mxu0 %v2827
      %v2856 = vpop.f32.mrf.mxu0
      %v2857 = vadd.f32 0.0, %v2856
      %v2858 = vpop.f32.mrf.mxu0
      %v2859 = vadd.f32 0.0, %v2858
      %2860 = vdwg.mxu0
      %v2861 = vadd.f32 %v2747, %v2842
      %v2862 = vadd.f32 %v2748, %v2844
      %v2863 = vadd.f32 %v2749, %v2847
      %v2864 = vadd.f32 %v2750, %v2849
      %v2865 = vadd.f32 %v2751, %v2852
      %v2866 = vadd.f32 %v2752, %v2854
      %v2867 = vadd.f32 %v2753, %v2857
      %v2868 = vadd.f32 %v2754, %v2859
      %v2869 = vpack.c.bf16 %v2861, %v2861
      %v2870 = vpack.c.bf16 %v2862, %v2862
      %v2871 = vpack.c.bf16 %v2863, %v2863
      %v2872 = vpack.c.bf16 %v2864, %v2864
      %v2873 = vpack.c.bf16 %v2865, %v2865
      %v2874 = vpack.c.bf16 %v2866, %v2866
      %v2875 = vpack.c.bf16 %v2867, %v2867
      %v2876 = vpack.c.bf16 %v2868, %v2868
      %2877 = vst [vmem:[%s177] sm:$0xf] %v2869
      %2878 = vst [vmem:[%s177 + $0x4] sm:$0xf] %v2870
      %2879 = vst [vmem:[%s177 + $0x8] sm:$0xf] %v2871
      %2880 = vst [vmem:[%s177 + $0xc] sm:$0xf] %v2872
      %2881 = vst [vmem:[%s177 + $0x10] sm:$0xf] %v2873
      %2882 = vst [vmem:[%s177 + $0x14] sm:$0xf] %v2874
      %2883 = vst [vmem:[%s177 + $0x18] sm:$0xf] %v2875
      %2884 = vst [vmem:[%s177 + $0x1c] sm:$0xf] %v2876
      %v2885 = vadd.f32 %v2861, %v2862
      %v2886 = vadd.f32 %v2885, %v2863
      %v2887 = vadd.f32 %v2886, %v2864
      %v2888 = vadd.f32 %v2887, %v2865
      %v2889 = vadd.f32 %v2888, %v2866
      %v2890 = vadd.f32 %v2889, %v2867
      %v2891 = vadd.f32 %v2890, %v2868
      %v2892 = vrot.slane %v2891, 4
      %v2893 = vadd.f32 %v2891, %v2892
      %v2894 = vrot.slane %v2893, 2
      %v2895 = vadd.f32 %v2893, %v2894
      %v2896 = vrot.slane %v2895, 1
      %v2897 = vadd.f32 %v2895, %v2896
      %2898 = vst [vmem:[%s181] sm:$0x1] %v2897
      %v2899 = vmul.f32 %v2861, %v2861
      %v2900 = vmul.f32 %v2862, %v2862
      %v2901 = vmul.f32 %v2863, %v2863
      %v2902 = vmul.f32 %v2864, %v2864
      %v2903 = vmul.f32 %v2865, %v2865
      %v2904 = vmul.f32 %v2866, %v2866
      %v2905 = vmul.f32 %v2867, %v2867
      %v2906 = vmul.f32 %v2868, %v2868
      %v2907 = vadd.f32 %v2899, %v2900
      %v2908 = vadd.f32 %v2907, %v2901
      %v2909 = vadd.f32 %v2908, %v2902
      %v2910 = vadd.f32 %v2909, %v2903
      %v2911 = vadd.f32 %v2910, %v2904
      %v2912 = vadd.f32 %v2911, %v2905
      %v2913 = vadd.f32 %v2912, %v2906
      %v2914 = vrot.slane %v2913, 4
      %v2915 = vadd.f32 %v2913, %v2914
      %v2916 = vrot.slane %v2915, 2
      %v2917 = vadd.f32 %v2915, %v2916
      %v2918 = vrot.slane %v2917, 1
      %v2919 = vadd.f32 %v2917, %v2918
      %2920 = vst [vmem:[%s181 + $0x1] sm:$0x1] %v2919
      %p2921 = scmp.lt.s32.totalorder %s15, 1
      %s2922 = scalar_select %p2921, %s15, 1
      %s2923 = smul.addr %s2922, 8
      %s2924 = smul.addr %s2923, 4
      %s2925 = scalar_lea.vmem %s2, %s2924
      %p2926 = scmp.lt.s32.totalorder %s15, 1
      %s2927 = scalar_select %p2926, %s15, 1
      %s2928 = smul.addr %s2927, 2
      %s2929 = scalar_lea.vmem %s3, %s2928
      // Predicated region
      $region29: #{encoder_layer_forward.2} parent=27 // pred_check
        %p2930 = pneg %p80
      $region30: #{encoder_layer_forward.2} parent=27 // pred_check_branch
        %2932 = sbr.rel (%p2930) target = $region32
      $region31: #{encoder_layer_forward.2} parent=27 // pred_region
        _
      $region32: #{encoder_layer_forward.2} parent=27 // pred_fallthru
        _
      // Predicated region
      $region33: #{encoder_layer_forward.2} parent=27 // pred_check
        %p2933 = pneg %p106
      $region34: #{encoder_layer_forward.2} parent=27 // pred_check_branch
        %2935 = sbr.rel (%p2933) target = $region36
      $region35: #{encoder_layer_forward.2} parent=27 // pred_region
        _
      $region36: #{encoder_layer_forward.2} parent=27 // pred_fallthru
        _
    $region28: #{encoder_layer_forward.2} parent=5 // pred_fallthru
      _
    %p2936 = scmp.le.s32.totalorder 2, %s10
    // Predicated region
    $region37: #{encoder_layer_forward.2} parent=5 // pred_check
      %p2937 = pneg %p2936
    $region38: #{encoder_layer_forward.2} parent=5 // pred_check_branch
      %2939 = sbr.rel (%p2937) target = $region40
    $region39: #{encoder_layer_forward.2} parent=5 // pred_region
      %s2940 = ssub.s32 %s10, 2
      // Predicated region
      $region41: #{encoder_layer_forward.2} parent=39 // pred_check
        %p2941 = pneg %p86
      $region42: #{encoder_layer_forward.2} parent=39 // pred_check_branch
        %2943 = sbr.rel (%p2941) target = $region44
      $region43: #{encoder_layer_forward.2} parent=39 // pred_region
        %p2944 = scmp.lt.s32.totalorder %s16, 1
        %s2945 = scalar_select %p2944, %s16, 1
        %s2946 = smul.addr %s2945, 8
        %s2947 = smul.addr %s2946, 4
        %s2948 = scalar_lea.vmem %s2, %s2947
      $region44: #{encoder_layer_forward.2} parent=39 // pred_fallthru
        _
      // Predicated region
      $region45: #{encoder_layer_forward.2} parent=39 // pred_check
        %p2949 = pneg %p112
      $region46: #{encoder_layer_forward.2} parent=39 // pred_check_branch
        %2951 = sbr.rel (%p2949) target = $region48
      $region47: #{encoder_layer_forward.2} parent=39 // pred_region
        %p2952 = scmp.lt.s32.totalorder %s16, 1
        %s2953 = scalar_select %p2952, %s16, 1
        %s2954 = smul.addr %s2953, 2
        %s2955 = scalar_lea.vmem %s3, %s2954
      $region48: #{encoder_layer_forward.2} parent=39 // pred_fallthru
        _
    $region40: #{encoder_layer_forward.2} parent=5 // pred_fallthru
      _
  $region6: #{encoder_layer_forward.2} parent=0 // loop_footer
    %s14 = sadd.s32 1, %s10
  $region7: #{encoder_layer_forward.2} parent=0 // loop_footer_branch
    %9 = sbr.rel target = $region3
  $region8: #{encoder_layer_forward.2} parent=0 // loop_exit
    _

</llo_original>
